<compile_context>
chip_gen: v6e
topology: v6e:2x2x1
jax: 0.10.0
libtpu: 0.0.40
codegen_flags: <defaults>
</compile_context>

<pallas_src>
import jax
import jax.numpy as jnp
from jax.experimental import pallas as pl
from jax.experimental.pallas import tpu as pltpu


def basic_block_kernel(xp_ref, xr_ref, w1_ref, s1_ref, b1_ref,
                       w2_ref, s2_ref, b2_ref, out_ref):
    """One (batch, row-tile) grid step.

    xp_ref : (H+4, W+2, Cp) bf16  spatially padded image (resident per batch)
    xr_ref : (TH, W, Cp)    bf16  residual tile (aligned, unpadded)
    w*_ref : (9*Cp, Cp)     bf16  im2col-reshaped conv weights
    s*/b*  : (1, 1, Cp)     f32   folded eval-mode BN scale / bias
    out_ref: (TH, W, Cp)    f32
    """
    i = pl.program_id(1)
    TH, W, Cp = out_ref.shape
    H = xp_ref.shape[0] - 4
    r0 = i * TH                                   # first output row (absolute)

    # Haloed input slab for this row tile: absolute rows [r0-2, r0+TH+2).
    xin = xp_ref[pl.ds(r0, TH + 4), :, :]         # (TH+4, W+2, Cp) bf16

    # ---- conv1 as a single im2col matmul (K = 9*Cp), f32 accumulation.
    taps1 = [xin[kh:kh + TH + 2, kw:kw + W, :]
             for kh in range(3) for kw in range(3)]
    a1 = jnp.concatenate(taps1, axis=-1).reshape((TH + 2) * W, 9 * Cp)
    out1 = jnp.dot(a1, w1_ref[...],
                   preferred_element_type=jnp.float32).reshape(TH + 2, W, Cp)

    # bn1 + relu in f32, then zero rows outside [0, H): those rows are conv2's
    # zero padding, not conv1 outputs.
    out1 = jnp.maximum(out1 * s1_ref[...] + b1_ref[...], 0.0)
    row = r0 - 1 + jax.lax.broadcasted_iota(jnp.int32, (TH + 2, 1, 1), 0)
    out1 = jnp.where((row >= 0) & (row < H), out1, 0.0)

    # ---- conv2 as a single im2col matmul; zero column halo added in-register.
    out1b = out1.astype(jnp.bfloat16)
    zcol = jnp.zeros((TH + 2, 1, Cp), jnp.bfloat16)
    out1p = jnp.concatenate([zcol, out1b, zcol], axis=1)     # (TH+2, W+2, Cp)
    taps2 = [out1p[kh:kh + TH, kw:kw + W, :]
             for kh in range(3) for kw in range(3)]
    a2 = jnp.concatenate(taps2, axis=-1).reshape(TH * W, 9 * Cp)
    out2 = jnp.dot(a2, w2_ref[...],
                   preferred_element_type=jnp.float32).reshape(TH, W, Cp)

    # bn2 + residual + relu, all f32 elementwise.
    out2 = out2 * s2_ref[...] + b2_ref[...] + xr_ref[...].astype(jnp.float32)
    out_ref[...] = jnp.maximum(out2, 0.0).astype(out_ref.dtype)


def basic_block_forward(x_nchw, w1, g1, be1, m1, v1, w2, g2, be2, m2, v2,
                        eps=1e-5, tile_rows=None):
    """x_nchw: (N, Cin, H, W) like the torch module. Returns (N, P, H, W) f32."""
    N, C, H, W = x_nchw.shape
    P = w1.shape[-1]
    assert w1.shape == (3, 3, C, P) and w2.shape == (3, 3, P, P)
    assert C == P, "downsample=None requires inplanes == planes"
    # TODO(synk): stride>1 / dilation>1 / downsample path not implemented
    # (module defaults: stride=1, dilation=1, downsample=None).

    LANES = 128
    Cp = ((C + LANES - 1) // LANES) * LANES       # lane-dense channel padding

    # NCHW -> NHWC, pad channels, cast to bf16 for the MXU path.
    x_nhwc = jnp.transpose(x_nchw, (0, 2, 3, 1))
    x_bf = jnp.pad(x_nhwc.astype(jnp.bfloat16),
                   ((0, 0), (0, 0), (0, 0), (0, Cp - C)))
    # Spatial pre-pad: 2 halo rows (conv1 + conv2 row reach), 1 halo column.
    xp = jnp.pad(x_bf, ((0, 0), (2, 2), (1, 1), (0, 0)))

    # Fold eval-mode BatchNorm into per-channel scale / bias (channel-padded).
    def fold_bn(g, b, m, v):
        s = g / jnp.sqrt(v + eps)
        sp = jnp.zeros((Cp,), jnp.float32).at[:P].set(s).reshape(1, 1, Cp)
        bp = jnp.zeros((Cp,), jnp.float32).at[:P].set(b - m * s).reshape(1, 1, Cp)
        return sp, bp
    s1, b1 = fold_bn(g1, be1, m1, v1)
    s2, b2 = fold_bn(g2, be2, m2, v2)

    # Weights: HWIO -> channel-padded -> im2col layout (9*Cp, Cp), bf16.
    def prep_w(w, cin):
        wp = jnp.zeros((3, 3, Cp, Cp), jnp.float32)
        wp = wp.at[:, :, :cin, :P].set(w.astype(jnp.float32))
        return wp.reshape(9 * Cp, Cp).astype(jnp.bfloat16)
    w1r = prep_w(w1, C)
    w2r = prep_w(w2, P)

    # Row-tile size from a VMEM budget small enough for v7x (64 MiB physical):
    # dominant in-kernel temporaries are the two bf16 im2col slabs (+ f32 out1).
    if tile_rows is None:
        budget = 8 << 20
        per_row = W * Cp * (2 * 9 * 2 + 3 * 4)
        tile_rows = max(1, budget // max(per_row, 1))
    th = min(int(tile_rows), H)
    while H % th:
        th -= 1
    n_row_tiles = H // th
    grid = (N, n_row_tiles)

    flops = 2 * 2 * N * H * W * 9 * Cp * Cp
    bytes_accessed = (xp.size + x_bf.size + w1r.size + w2r.size) * 2 \
        + N * H * W * Cp * 4

    out_nhwc = pl.pallas_call(
        basic_block_kernel,
        out_shape=jax.ShapeDtypeStruct((N, H, W, Cp), jnp.float32),
        grid=grid,
        in_specs=[
            pl.BlockSpec((None, H + 4, W + 2, Cp), lambda n, i: (n, 0, 0, 0)),
            pl.BlockSpec((None, th, W, Cp), lambda n, i: (n, i, 0, 0)),
            pl.BlockSpec((9 * Cp, Cp), lambda n, i: (0, 0)),
            pl.BlockSpec((1, 1, Cp), lambda n, i: (0, 0, 0)),
            pl.BlockSpec((1, 1, Cp), lambda n, i: (0, 0, 0)),
            pl.BlockSpec((9 * Cp, Cp), lambda n, i: (0, 0)),
            pl.BlockSpec((1, 1, Cp), lambda n, i: (0, 0, 0)),
            pl.BlockSpec((1, 1, Cp), lambda n, i: (0, 0, 0)),
        ],
        out_specs=pl.BlockSpec((None, th, W, Cp), lambda n, i: (n, i, 0, 0)),
        compiler_params=pltpu.CompilerParams(
            dimension_semantics=("parallel", "parallel"),
            vmem_limit_bytes=48 * 1024 * 1024),
        cost_estimate=pl.CostEstimate(
            flops=int(flops), transcendentals=0,
            bytes_accessed=int(bytes_accessed)),
    )(xp, x_bf, w1r, s1, b1, w2r, s2, b2)

    # Drop channel padding, back to NCHW to match PyTorch convention.
    return jnp.transpose(out_nhwc[..., :P], (0, 3, 1, 2))


def _reference(x_nchw, w1, g1, be1, m1, v1, w2, g2, be2, m2, v2, eps=1e-5):
    """Pure-JAX reference mirroring the kernel's bf16 rounding points."""
    f32 = jnp.float32
    bf = lambda a: a.astype(jnp.bfloat16).astype(f32)
    x = bf(jnp.transpose(x_nchw, (0, 2, 3, 1)))

    def conv3x3(inp, w):
        return jax.lax.conv_general_dilated(
            inp, w, window_strides=(1, 1), padding=((1, 1), (1, 1)),
            dimension_numbers=('NHWC', 'HWIO', 'NHWC'),
            precision=jax.lax.Precision.HIGHEST)

    s1 = g1 / jnp.sqrt(v1 + eps); bb1 = be1 - m1 * s1
    s2 = g2 / jnp.sqrt(v2 + eps); bb2 = be2 - m2 * s2

    out = jnp.maximum(conv3x3(x, bf(w1)) * s1 + bb1, 0.0)
    out = conv3x3(bf(out), bf(w2)) * s2 + bb2
    out = jnp.maximum(out + x, 0.0)
    return jnp.transpose(out, (0, 3, 1, 2))


if __name__ == "__main__":
    N, C, H, W = 2, 4, 16, 16   # inplanes = planes = 4, stride 1
    P = C

    key = jax.random.PRNGKey(0)
    ks = jax.random.split(key, 11)

    x = jax.random.normal(ks[0], (N, C, H, W), jnp.float32)
    w1 = 0.1 * jax.random.normal(ks[1], (3, 3, C, P), jnp.float32)
    w2 = 0.1 * jax.random.normal(ks[2], (3, 3, P, P), jnp.float32)
    g1 = 0.5 + jax.random.uniform(ks[3], (P,), jnp.float32)
    be1 = 0.1 * jax.random.normal(ks[4], (P,), jnp.float32)
    m1 = 0.1 * jax.random.normal(ks[5], (P,), jnp.float32)
    v1 = 0.5 + jax.random.uniform(ks[6], (P,), jnp.float32)
    g2 = 0.5 + jax.random.uniform(ks[7], (P,), jnp.float32)
    be2 = 0.1 * jax.random.normal(ks[8], (P,), jnp.float32)
    m2 = 0.1 * jax.random.normal(ks[9], (P,), jnp.float32)
    v2 = 0.5 + jax.random.uniform(ks[10], (P,), jnp.float32)

    # tile_rows=8 -> 2 row tiles per image, grid=(2, 2): exercises the halo /
    # boundary-mask logic at both image edges and at an interior tile seam.
    out = basic_block_forward(x, w1, g1, be1, m1, v1, w2, g2, be2, m2, v2,
                              tile_rows=8)
    out = jax.block_until_ready(out)

    ref = _reference(x, w1, g1, be1, m1, v1, w2, g2, be2, m2, v2)
    assert out.shape == (N, P, H, W)
    err = float(jnp.max(jnp.abs(out - ref)))
    assert jnp.allclose(out, ref, atol=2e-3, rtol=2e-3), f"max err {err}"

    print("KERNEL_OK")
</pallas_src>

<mosaic_0001>
module attributes {stable_mosaic.version = 11 : i64} {
  func.func @basic_block_kernel(%arg0: i32, %arg1: i32, %arg2: memref<1x20x18x128xbf16, #tpu.memory_space<vmem>>, %arg3: memref<1x8x16x128xbf16, #tpu.memory_space<vmem>>, %arg4: memref<1152x128xbf16, #tpu.memory_space<vmem>>, %arg5: memref<1x1x128xf32, #tpu.memory_space<vmem>>, %arg6: memref<1x1x128xf32, #tpu.memory_space<vmem>>, %arg7: memref<1152x128xbf16, #tpu.memory_space<vmem>>, %arg8: memref<1x1x128xf32, #tpu.memory_space<vmem>>, %arg9: memref<1x1x128xf32, #tpu.memory_space<vmem>>, %arg10: memref<1x8x16x128xf32, #tpu.memory_space<vmem>>) attributes {dimension_semantics = [#tpu.dimension_semantics<parallel>, #tpu.dimension_semantics<parallel>], iteration_bounds = array<i64: 2, 2>, scalar_prefetch = 0 : i64, scratch_operands = 0 : i64, tpu.core_type = #tpu.core_type<tc>, window_params = [{transform_indices = @transform_0, window_bounds = array<i64: 1, 20, 18, 128>}, {transform_indices = @transform_1, window_bounds = array<i64: 1, 8, 16, 128>}, {pipeline_mode = #tpu.pipeline_mode<synchronous>, transform_indices = @transform_2, window_bounds = array<i64: 1152, 128>}, {pipeline_mode = #tpu.pipeline_mode<synchronous>, transform_indices = @transform_3, window_bounds = array<i64: 1, 1, 128>}, {pipeline_mode = #tpu.pipeline_mode<synchronous>, transform_indices = @transform_4, window_bounds = array<i64: 1, 1, 128>}, {pipeline_mode = #tpu.pipeline_mode<synchronous>, transform_indices = @transform_5, window_bounds = array<i64: 1152, 128>}, {pipeline_mode = #tpu.pipeline_mode<synchronous>, transform_indices = @transform_6, window_bounds = array<i64: 1, 1, 128>}, {pipeline_mode = #tpu.pipeline_mode<synchronous>, transform_indices = @transform_7, window_bounds = array<i64: 1, 1, 128>}, {transform_indices = @transform_8, window_bounds = array<i64: 1, 8, 16, 128>}]} {
    %c8_i32 = arith.constant 8 : i32
    %0 = arith.muli %arg1, %c8_i32 : i32
    %c0 = arith.constant 0 : index
    %1 = arith.index_cast %0 : i32 to index
    %c0_0 = arith.constant 0 : index
    %c0_1 = arith.constant 0 : index
    %2 = vector.load %arg2[%c0, %1, %c0_0, %c0_1] : memref<1x20x18x128xbf16, #tpu.memory_space<vmem>>, vector<1x12x18x128xbf16>
    %3 = vector.shape_cast %2 : vector<1x12x18x128xbf16> to vector<12x18x128xbf16>
    %4 = vector.extract_strided_slice %3 {offsets = [0, 0, 0], sizes = [10, 16, 128], strides = [1, 1, 1]} : vector<12x18x128xbf16> to vector<10x16x128xbf16>
    %5 = vector.extract_strided_slice %3 {offsets = [0, 1, 0], sizes = [10, 16, 128], strides = [1, 1, 1]} : vector<12x18x128xbf16> to vector<10x16x128xbf16>
    %6 = vector.extract_strided_slice %3 {offsets = [0, 2, 0], sizes = [10, 16, 128], strides = [1, 1, 1]} : vector<12x18x128xbf16> to vector<10x16x128xbf16>
    %7 = vector.extract_strided_slice %3 {offsets = [1, 0, 0], sizes = [10, 16, 128], strides = [1, 1, 1]} : vector<12x18x128xbf16> to vector<10x16x128xbf16>
    %8 = vector.extract_strided_slice %3 {offsets = [1, 1, 0], sizes = [10, 16, 128], strides = [1, 1, 1]} : vector<12x18x128xbf16> to vector<10x16x128xbf16>
    %9 = vector.extract_strided_slice %3 {offsets = [1, 2, 0], sizes = [10, 16, 128], strides = [1, 1, 1]} : vector<12x18x128xbf16> to vector<10x16x128xbf16>
    %10 = vector.extract_strided_slice %3 {offsets = [2, 0, 0], sizes = [10, 16, 128], strides = [1, 1, 1]} : vector<12x18x128xbf16> to vector<10x16x128xbf16>
    %11 = vector.extract_strided_slice %3 {offsets = [2, 1, 0], sizes = [10, 16, 128], strides = [1, 1, 1]} : vector<12x18x128xbf16> to vector<10x16x128xbf16>
    %12 = vector.extract_strided_slice %3 {offsets = [2, 2, 0], sizes = [10, 16, 128], strides = [1, 1, 1]} : vector<12x18x128xbf16> to vector<10x16x128xbf16>
    %13 = tpu.concatenate %4, %5, %6, %7, %8, %9, %10, %11, %12 in 2 : vector<10x16x128xbf16>, vector<10x16x128xbf16>, vector<10x16x128xbf16>, vector<10x16x128xbf16>, vector<10x16x128xbf16>, vector<10x16x128xbf16>, vector<10x16x128xbf16>, vector<10x16x128xbf16>, vector<10x16x128xbf16> -> vector<10x16x1152xbf16>
    %14 = vector.shape_cast %13 : vector<10x16x1152xbf16> to vector<160x1152xbf16>
    %c0_2 = arith.constant 0 : index
    %c0_3 = arith.constant 0 : index
    %15 = vector.load %arg4[%c0_2, %c0_3] : memref<1152x128xbf16, #tpu.memory_space<vmem>>, vector<1152x128xbf16>
    %cst = arith.constant dense<0.000000e+00> : vector<160x128xf32>
    %16 = tpu.matmul %14, %15, %cst {dimension_numbers = #tpu.dot_dimension_numbers<[1], [0], [0], [1], [0, 0, 1, 1], [], []>} : vector<160x1152xbf16>, vector<1152x128xbf16>, vector<160x128xf32> -> vector<160x128xf32>
    %17 = vector.shape_cast %16 : vector<160x128xf32> to vector<10x16x128xf32>
    %c0_4 = arith.constant 0 : index
    %c0_5 = arith.constant 0 : index
    %c0_6 = arith.constant 0 : index
    %18 = vector.load %arg5[%c0_4, %c0_5, %c0_6] : memref<1x1x128xf32, #tpu.memory_space<vmem>>, vector<1x1x128xf32>
    %19 = vector.broadcast %18 : vector<1x1x128xf32> to vector<10x16x128xf32>
    %20 = arith.mulf %17, %19 : vector<10x16x128xf32>
    %c0_7 = arith.constant 0 : index
    %c0_8 = arith.constant 0 : index
    %c0_9 = arith.constant 0 : index
    %21 = vector.load %arg6[%c0_7, %c0_8, %c0_9] : memref<1x1x128xf32, #tpu.memory_space<vmem>>, vector<1x1x128xf32>
    %22 = vector.broadcast %21 : vector<1x1x128xf32> to vector<10x16x128xf32>
    %23 = arith.addf %20, %22 : vector<10x16x128xf32>
    %cst_10 = arith.constant 0.000000e+00 : f32
    %24 = vector.broadcast %cst_10 : f32 to vector<10x16x128xf32>
    %25 = arith.maximumf %23, %24 : vector<10x16x128xf32>
    %c1_i32 = arith.constant 1 : i32
    %26 = arith.subi %0, %c1_i32 : i32
    %27 = tpu.iota {dimensions = array<i32: 0>} : vector<10x1x1xi32>
    %28 = vector.broadcast %26 : i32 to vector<10x1x1xi32>
    %29 = arith.addi %28, %27 : vector<10x1x1xi32>
    %c0_i32 = arith.constant 0 : i32
    %30 = vector.broadcast %c0_i32 : i32 to vector<10x1x1xi32>
    %31 = arith.cmpi sge, %29, %30 : vector<10x1x1xi32>
    %c16_i32 = arith.constant 16 : i32
    %32 = vector.broadcast %c16_i32 : i32 to vector<10x1x1xi32>
    %33 = arith.cmpi slt, %29, %32 : vector<10x1x1xi32>
    %34 = arith.andi %31, %33 : vector<10x1x1xi1>
    %cst_11 = arith.constant 0.000000e+00 : f32
    %35 = vector.shape_cast %34 : vector<10x1x1xi1> to vector<10x1x1xi1>
    %36 = vector.broadcast %35 : vector<10x1x1xi1> to vector<10x16x128xi1>
    %37 = vector.broadcast %cst_11 : f32 to vector<10x16x128xf32>
    %38 = arith.select %36, %25, %37 : vector<10x16x128xi1>, vector<10x16x128xf32>
    %39 = arith.truncf %38 : vector<10x16x128xf32> to vector<10x16x128xbf16>
    %cst_12 = arith.constant 0.000000e+00 : bf16
    %40 = vector.broadcast %cst_12 : bf16 to vector<10x1x128xbf16>
    %41 = tpu.concatenate %40, %39, %40 in 1 : vector<10x1x128xbf16>, vector<10x16x128xbf16>, vector<10x1x128xbf16> -> vector<10x18x128xbf16>
    %42 = vector.extract_strided_slice %41 {offsets = [0, 0, 0], sizes = [8, 16, 128], strides = [1, 1, 1]} : vector<10x18x128xbf16> to vector<8x16x128xbf16>
    %43 = vector.extract_strided_slice %41 {offsets = [0, 1, 0], sizes = [8, 16, 128], strides = [1, 1, 1]} : vector<10x18x128xbf16> to vector<8x16x128xbf16>
    %44 = vector.extract_strided_slice %41 {offsets = [0, 2, 0], sizes = [8, 16, 128], strides = [1, 1, 1]} : vector<10x18x128xbf16> to vector<8x16x128xbf16>
    %45 = vector.extract_strided_slice %41 {offsets = [1, 0, 0], sizes = [8, 16, 128], strides = [1, 1, 1]} : vector<10x18x128xbf16> to vector<8x16x128xbf16>
    %46 = vector.extract_strided_slice %41 {offsets = [1, 1, 0], sizes = [8, 16, 128], strides = [1, 1, 1]} : vector<10x18x128xbf16> to vector<8x16x128xbf16>
    %47 = vector.extract_strided_slice %41 {offsets = [1, 2, 0], sizes = [8, 16, 128], strides = [1, 1, 1]} : vector<10x18x128xbf16> to vector<8x16x128xbf16>
    %48 = vector.extract_strided_slice %41 {offsets = [2, 0, 0], sizes = [8, 16, 128], strides = [1, 1, 1]} : vector<10x18x128xbf16> to vector<8x16x128xbf16>
    %49 = vector.extract_strided_slice %41 {offsets = [2, 1, 0], sizes = [8, 16, 128], strides = [1, 1, 1]} : vector<10x18x128xbf16> to vector<8x16x128xbf16>
    %50 = vector.extract_strided_slice %41 {offsets = [2, 2, 0], sizes = [8, 16, 128], strides = [1, 1, 1]} : vector<10x18x128xbf16> to vector<8x16x128xbf16>
    %51 = tpu.concatenate %42, %43, %44, %45, %46, %47, %48, %49, %50 in 2 : vector<8x16x128xbf16>, vector<8x16x128xbf16>, vector<8x16x128xbf16>, vector<8x16x128xbf16>, vector<8x16x128xbf16>, vector<8x16x128xbf16>, vector<8x16x128xbf16>, vector<8x16x128xbf16>, vector<8x16x128xbf16> -> vector<8x16x1152xbf16>
    %52 = vector.shape_cast %51 : vector<8x16x1152xbf16> to vector<128x1152xbf16>
    %c0_13 = arith.constant 0 : index
    %c0_14 = arith.constant 0 : index
    %53 = vector.load %arg7[%c0_13, %c0_14] : memref<1152x128xbf16, #tpu.memory_space<vmem>>, vector<1152x128xbf16>
    %cst_15 = arith.constant dense<0.000000e+00> : vector<128x128xf32>
    %54 = tpu.matmul %52, %53, %cst_15 {dimension_numbers = #tpu.dot_dimension_numbers<[1], [0], [0], [1], [0, 0, 1, 1], [], []>} : vector<128x1152xbf16>, vector<1152x128xbf16>, vector<128x128xf32> -> vector<128x128xf32>
    %55 = vector.shape_cast %54 : vector<128x128xf32> to vector<8x16x128xf32>
    %c0_16 = arith.constant 0 : index
    %c0_17 = arith.constant 0 : index
    %c0_18 = arith.constant 0 : index
    %56 = vector.load %arg8[%c0_16, %c0_17, %c0_18] : memref<1x1x128xf32, #tpu.memory_space<vmem>>, vector<1x1x128xf32>
    %57 = vector.broadcast %56 : vector<1x1x128xf32> to vector<8x16x128xf32>
    %58 = arith.mulf %55, %57 : vector<8x16x128xf32>
    %c0_19 = arith.constant 0 : index
    %c0_20 = arith.constant 0 : index
    %c0_21 = arith.constant 0 : index
    %59 = vector.load %arg9[%c0_19, %c0_20, %c0_21] : memref<1x1x128xf32, #tpu.memory_space<vmem>>, vector<1x1x128xf32>
    %60 = vector.broadcast %59 : vector<1x1x128xf32> to vector<8x16x128xf32>
    %61 = arith.addf %58, %60 : vector<8x16x128xf32>
    %c0_22 = arith.constant 0 : index
    %c0_23 = arith.constant 0 : index
    %c0_24 = arith.constant 0 : index
    %c0_25 = arith.constant 0 : index
    %62 = vector.load %arg3[%c0_22, %c0_23, %c0_24, %c0_25] : memref<1x8x16x128xbf16, #tpu.memory_space<vmem>>, vector<1x8x16x128xbf16>
    %63 = vector.shape_cast %62 : vector<1x8x16x128xbf16> to vector<8x16x128xbf16>
    %64 = arith.extf %63 : vector<8x16x128xbf16> to vector<8x16x128xf32>
    %65 = arith.addf %61, %64 : vector<8x16x128xf32>
    %cst_26 = arith.constant 0.000000e+00 : f32
    %66 = vector.broadcast %cst_26 : f32 to vector<8x16x128xf32>
    %67 = arith.maximumf %65, %66 : vector<8x16x128xf32>
    %c0_27 = arith.constant 0 : index
    %c0_28 = arith.constant 0 : index
    %c0_29 = arith.constant 0 : index
    %c0_30 = arith.constant 0 : index
    %68 = vector.load %arg10[%c0_27, %c0_28, %c0_29, %c0_30] : memref<1x8x16x128xf32, #tpu.memory_space<vmem>>, vector<1x8x16x128xf32>
    %69 = vector.shape_cast %68 : vector<1x8x16x128xf32> to vector<8x16x128xf32>
    %70 = vector.shape_cast %67 : vector<8x16x128xf32> to vector<1x8x16x128xf32>
    tpu.vector_store %arg10[%c0_27, %c0_28, %c0_29, %c0_30], %70 {strides = array<i32>} : memref<1x8x16x128xf32, #tpu.memory_space<vmem>>, vector<1x8x16x128xf32>,
    return
  }
  func.func @transform_0(%arg0: i32, %arg1: i32) -> (i32, i32, i32, i32) {
    %c0_i32 = arith.constant 0 : i32
    %c0_i32_0 = arith.constant 0 : i32
    %c0_i32_1 = arith.constant 0 : i32
    %c0_i32_2 = arith.constant 0 : i32
    return %arg0, %c0_i32, %c0_i32_0, %c0_i32_1 : i32, i32, i32, i32
  }
  func.func @transform_1(%arg0: i32, %arg1: i32) -> (i32, i32, i32, i32) {
    %c0_i32 = arith.constant 0 : i32
    %c0_i32_0 = arith.constant 0 : i32
    %c0_i32_1 = arith.constant 0 : i32
    return %arg0, %arg1, %c0_i32, %c0_i32_0 : i32, i32, i32, i32
  }
  func.func @transform_2(%arg0: i32, %arg1: i32) -> (i32, i32) {
    %c0_i32 = arith.constant 0 : i32
    %c0_i32_0 = arith.constant 0 : i32
    %c0_i32_1 = arith.constant 0 : i32
    return %c0_i32, %c0_i32_0 : i32, i32
  }
  func.func @transform_3(%arg0: i32, %arg1: i32) -> (i32, i32, i32) {
    %c0_i32 = arith.constant 0 : i32
    %c0_i32_0 = arith.constant 0 : i32
    %c0_i32_1 = arith.constant 0 : i32
    %c0_i32_2 = arith.constant 0 : i32
    return %c0_i32, %c0_i32_0, %c0_i32_1 : i32, i32, i32
  }
  func.func @transform_4(%arg0: i32, %arg1: i32) -> (i32, i32, i32) {
    %c0_i32 = arith.constant 0 : i32
    %c0_i32_0 = arith.constant 0 : i32
    %c0_i32_1 = arith.constant 0 : i32
    %c0_i32_2 = arith.constant 0 : i32
    return %c0_i32, %c0_i32_0, %c0_i32_1 : i32, i32, i32
  }
  func.func @transform_5(%arg0: i32, %arg1: i32) -> (i32, i32) {
    %c0_i32 = arith.constant 0 : i32
    %c0_i32_0 = arith.constant 0 : i32
    %c0_i32_1 = arith.constant 0 : i32
    return %c0_i32, %c0_i32_0 : i32, i32
  }
  func.func @transform_6(%arg0: i32, %arg1: i32) -> (i32, i32, i32) {
    %c0_i32 = arith.constant 0 : i32
    %c0_i32_0 = arith.constant 0 : i32
    %c0_i32_1 = arith.constant 0 : i32
    %c0_i32_2 = arith.constant 0 : i32
    return %c0_i32, %c0_i32_0, %c0_i32_1 : i32, i32, i32
  }
  func.func @transform_7(%arg0: i32, %arg1: i32) -> (i32, i32, i32) {
    %c0_i32 = arith.constant 0 : i32
    %c0_i32_0 = arith.constant 0 : i32
    %c0_i32_1 = arith.constant 0 : i32
    %c0_i32_2 = arith.constant 0 : i32
    return %c0_i32, %c0_i32_0, %c0_i32_1 : i32, i32, i32
  }
  func.func @transform_8(%arg0: i32, %arg1: i32) -> (i32, i32, i32, i32) {
    %c0_i32 = arith.constant 0 : i32
    %c0_i32_0 = arith.constant 0 : i32
    %c0_i32_1 = arith.constant 0 : i32
    return %arg0, %arg1, %c0_i32, %c0_i32_0 : i32, i32, i32, i32
  }
}

</mosaic_0001>

<llo_original>
// kernel: tpu_custom_call.1
$region0: #{tpu_custom_call.1}
  #allocation0 [shape = 'u32[]', space=smem, size = 0x4, offset = 0x4, fixed_abs, tag = 'smem constant byte address 0x4 - core index']
  #allocation1 [shape = 'u32[144,128]{1,0:T(1,128)}', space=vmem, size = 0x12000, scoped, tag = 'internal scratch']
  %s0 = inlined_call_operand.vmem [shape: bf16[2,20,18,128], index: 0, kind: input, shape index: {}]
  %s1 = inlined_call_operand.vmem [shape: bf16[2,16,16,128], index: 1, kind: input, shape index: {}]
  %s2 = inlined_call_operand.vmem [shape: bf16[1152,128], index: 2, kind: input, shape index: {}]
  %s3 = inlined_call_operand.vmem [shape: f32[1,1,128], index: 3, kind: input, shape index: {}]
  %s4 = inlined_call_operand.vmem [shape: f32[1,1,128], index: 4, kind: input, shape index: {}]
  %s5 = inlined_call_operand.hbm [shape: bf16[1152,128], index: 5, kind: input, shape index: {}]
  %s6 = inlined_call_operand.vmem [shape: f32[1,1,128], index: 6, kind: input, shape index: {}]
  %s7 = inlined_call_operand.vmem [shape: f32[1,1,128], index: 7, kind: input, shape index: {}]
  %s8 = inlined_call_operand.hbm [shape: f32[2,16,16,128], index: 8, kind: output, shape index: {}]
  %s9 = sld [smem:[#allocation0]]
  $region69: #{tpu_custom_call.1} parent=0
    _
  %s11 = ssub.s32 1, %s9
  %s12 = scalar_select 0, %s11, %s9
  $region1: #{tpu_custom_call.1} parent=0
    #allocation2 [shape = 'u8[294912]{0}', space=vmem, size = 0x48000, scoped, tag = 'input window, operand 5, single buffered']
    #allocation3 [shape = 's32[2]{0}', space=sflag, size = 0x8, scoped, tag = 'scoped memory for tpu_custom_call.1']
    #allocation4 [shape = 's32[2]{0}', space=sflag, size = 0x8, scoped, tag = 'scoped memory for tpu_custom_call.1']
    #allocation5 [shape = 'u8[131072]{0}', space=vmem, size = 0x20000, scoped, tag = 'output window, operand 0']
    %13 = vsyncpa [#allocation3], 0
    %14 = vsyncpa [#allocation4], 0
    %s15 = scalar_lea.sflag [#allocation4], 1
    %16 = vsyncpa %s15, 0
    loop: start=0, step=1, limit=6
    $region2: #{tpu_custom_call.1} parent=1 // loop_pre_header
      _
    $region3: #{tpu_custom_call.1} parent=1 // loop_header
      %s18 = sphi 0, %s22
      %p19 = scmp.ge.s32.totalorder %s18, 6
      %s25 = sphi 0, %s37
      %s26 = sphi 0, %s33
      %s27 = sphi 0, %s25
      %s28 = sphi 0, %s26
      %s29 = sphi 0, %s27
      %s30 = sphi 0, %s28
      %s40 = sphi 0, %s42
      %s43 = sphi 0, %s40
      %s44 = sphi 0, %s43
      %s60 = sphi 0, %s44
      %s68 = sphi 0, %s70
      %s71 = sphi 0, %s68
      %s72 = sphi 0, %s71
      %s88 = sphi 0, %s72
      %s92 = sphi 0, %s92
      %s94 = sphi 0, %s92
      %s95 = sphi 0, %s94
      %s109 = sphi 0, %s95
      %s113 = sphi 0, %s113
      %s115 = sphi 0, %s113
      %s116 = sphi 0, %s115
      %s130 = sphi 0, %s116
      %s134 = sphi 0, %s134
      %s136 = sphi 0, %s134
      %s137 = sphi 0, %s136
      %s151 = sphi 0, %s137
      %s155 = sphi 0, %s155
      %s157 = sphi 0, %s155
      %s158 = sphi 0, %s157
      %s172 = sphi 0, %s158
      %s176 = sphi 0, %s176
      %s178 = sphi 0, %s176
      %s179 = sphi 0, %s178
      %s193 = sphi 0, %s179
      %s197 = sphi 0, %s197
      %s199 = sphi 0, %s197
      %s200 = sphi 0, %s199
      %s214 = sphi 0, %s200
      %s222 = sphi 0, %s224
      %s225 = sphi 0, %s222
      %s226 = sphi 0, %s225
      %s242 = sphi 0, %s226
    $region4: #{tpu_custom_call.1} parent=1 // loop_header_branch
      %21 = sbr.rel (%p19) target = $region8
    $region5: #{tpu_custom_call.1} parent=1 // loop_body
      %s23 = ssub.s32 %s18, 1
      %s24 = ssub.s32 %s18, 2
      %s31 = sadd.s32 1, %s26
      %p32 = scmp.ge.s32.totalorder %s31, 2
      %s33 = scalar_select %p32, 0, %s31
      %s34 = sadd.s32 1, %s25
      %s35 = scalar_select %p32, %s34, %s25
      %p36 = scmp.ge.s32.totalorder %s35, 2
      %s37 = scalar_select %p36, 0, %s35
      %s38 = ssub.s32 %s25, %s37
      %p39 = scmp.eq.s32.totalorder %s38, 0
      %s41 = sadd.s32 %s40, 1
      %s42 = scalar_select %p39, %s40, %s41
      %p45 = pneg %p39
      %p46 = scmp.eq.s32.totalorder %s18, 3
      %p47 = por %p45, %p46
      %p48 = scmp.ne.s32.totalorder %s40, %s43
      %p49 = scmp.eq.s32.totalorder %s18, 0
      %p50 = por %p48, %p49
      %p51 = scmp.ne.s32.totalorder %s40, %s43
      %p52 = scmp.eq.s32.totalorder %s23, 3
      %p53 = por %p51, %p52
      %p54 = scmp.ne.s32.totalorder %s43, %s44
      %p55 = scmp.eq.s32.totalorder %s23, 0
      %p56 = por %p54, %p55
      %p57 = scmp.ne.s32.totalorder %s43, %s44
      %p58 = scmp.eq.s32.totalorder %s24, 3
      %p59 = por %p57, %p58
      %p61 = scmp.ne.s32.totalorder %s44, %s60
      %p62 = scmp.eq.s32.totalorder %s24, 0
      %p63 = por %p61, %p62
      %s64 = ssub.s32 %s25, %s37
      %s65 = ssub.s32 %s26, %s33
      %s66 = sor.u32 %s64, %s65
      %p67 = scmp.eq.s32.totalorder %s66, 0
      %s69 = sadd.s32 %s68, 1
      %s70 = scalar_select %p67, %s68, %s69
      %p73 = pneg %p67
      %p74 = scmp.eq.s32.totalorder %s18, 3
      %p75 = por %p73, %p74
      %p76 = scmp.ne.s32.totalorder %s68, %s71
      %p77 = scmp.eq.s32.totalorder %s18, 0
      %p78 = por %p76, %p77
      %p79 = scmp.ne.s32.totalorder %s68, %s71
      %p80 = scmp.eq.s32.totalorder %s23, 3
      %p81 = por %p79, %p80
      %p82 = scmp.ne.s32.totalorder %s71, %s72
      %p83 = scmp.eq.s32.totalorder %s23, 0
      %p84 = por %p82, %p83
      %p85 = scmp.ne.s32.totalorder %s71, %s72
      %p86 = scmp.eq.s32.totalorder %s24, 3
      %p87 = por %p85, %p86
      %p89 = scmp.ne.s32.totalorder %s72, %s88
      %p90 = scmp.eq.s32.totalorder %s24, 0
      %p91 = por %p89, %p90
      %s93 = sadd.s32 %s92, 1
      %p96 = scmp.eq.s32.totalorder %s18, 3
      %p97 = scmp.ne.s32.totalorder %s92, %s94
      %p98 = scmp.eq.s32.totalorder %s18, 0
      %p99 = por %p97, %p98
      %p100 = scmp.ne.s32.totalorder %s92, %s94
      %p101 = scmp.eq.s32.totalorder %s23, 3
      %p102 = por %p100, %p101
      %p103 = scmp.ne.s32.totalorder %s94, %s95
      %p104 = scmp.eq.s32.totalorder %s23, 0
      %p105 = por %p103, %p104
      %p106 = scmp.ne.s32.totalorder %s94, %s95
      %p107 = scmp.eq.s32.totalorder %s24, 3
      %p108 = por %p106, %p107
      %p110 = scmp.ne.s32.totalorder %s95, %s109
      %p111 = scmp.eq.s32.totalorder %s24, 0
      %p112 = por %p110, %p111
      %s114 = sadd.s32 %s113, 1
      %p117 = scmp.eq.s32.totalorder %s18, 3
      %p118 = scmp.ne.s32.totalorder %s113, %s115
      %p119 = scmp.eq.s32.totalorder %s18, 0
      %p120 = por %p118, %p119
      %p121 = scmp.ne.s32.totalorder %s113, %s115
      %p122 = scmp.eq.s32.totalorder %s23, 3
      %p123 = por %p121, %p122
      %p124 = scmp.ne.s32.totalorder %s115, %s116
      %p125 = scmp.eq.s32.totalorder %s23, 0
      %p126 = por %p124, %p125
      %p127 = scmp.ne.s32.totalorder %s115, %s116
      %p128 = scmp.eq.s32.totalorder %s24, 3
      %p129 = por %p127, %p128
      %p131 = scmp.ne.s32.totalorder %s116, %s130
      %p132 = scmp.eq.s32.totalorder %s24, 0
      %p133 = por %p131, %p132
      %s135 = sadd.s32 %s134, 1
      %p138 = scmp.eq.s32.totalorder %s18, 3
      %p139 = scmp.ne.s32.totalorder %s134, %s136
      %p140 = scmp.eq.s32.totalorder %s18, 0
      %p141 = por %p139, %p140
      %p142 = scmp.ne.s32.totalorder %s134, %s136
      %p143 = scmp.eq.s32.totalorder %s23, 3
      %p144 = por %p142, %p143
      %p145 = scmp.ne.s32.totalorder %s136, %s137
      %p146 = scmp.eq.s32.totalorder %s23, 0
      %p147 = por %p145, %p146
      %p148 = scmp.ne.s32.totalorder %s136, %s137
      %p149 = scmp.eq.s32.totalorder %s24, 3
      %p150 = por %p148, %p149
      %p152 = scmp.ne.s32.totalorder %s137, %s151
      %p153 = scmp.eq.s32.totalorder %s24, 0
      %p154 = por %p152, %p153
      %s156 = sadd.s32 %s155, 1
      %p159 = scmp.eq.s32.totalorder %s18, 3
      %p160 = scmp.ne.s32.totalorder %s155, %s157
      %p161 = scmp.eq.s32.totalorder %s18, 0
      %p162 = por %p160, %p161
      %p163 = scmp.ne.s32.totalorder %s155, %s157
      %p164 = scmp.eq.s32.totalorder %s23, 3
      %p165 = por %p163, %p164
      %p166 = scmp.ne.s32.totalorder %s157, %s158
      %p167 = scmp.eq.s32.totalorder %s23, 0
      %p168 = por %p166, %p167
      %p169 = scmp.ne.s32.totalorder %s157, %s158
      %p170 = scmp.eq.s32.totalorder %s24, 3
      %p171 = por %p169, %p170
      %p173 = scmp.ne.s32.totalorder %s158, %s172
      %p174 = scmp.eq.s32.totalorder %s24, 0
      %p175 = por %p173, %p174
      %s177 = sadd.s32 %s176, 1
      %p180 = scmp.eq.s32.totalorder %s18, 3
      %p181 = scmp.ne.s32.totalorder %s176, %s178
      %p182 = scmp.eq.s32.totalorder %s18, 0
      %p183 = por %p181, %p182
      %p184 = scmp.ne.s32.totalorder %s176, %s178
      %p185 = scmp.eq.s32.totalorder %s23, 3
      %p186 = por %p184, %p185
      %p187 = scmp.ne.s32.totalorder %s178, %s179
      %p188 = scmp.eq.s32.totalorder %s23, 0
      %p189 = por %p187, %p188
      %p190 = scmp.ne.s32.totalorder %s178, %s179
      %p191 = scmp.eq.s32.totalorder %s24, 3
      %p192 = por %p190, %p191
      %p194 = scmp.ne.s32.totalorder %s179, %s193
      %p195 = scmp.eq.s32.totalorder %s24, 0
      %p196 = por %p194, %p195
      %s198 = sadd.s32 %s197, 1
      %p201 = scmp.eq.s32.totalorder %s18, 3
      %p202 = scmp.ne.s32.totalorder %s197, %s199
      %p203 = scmp.eq.s32.totalorder %s18, 0
      %p204 = por %p202, %p203
      %p205 = scmp.ne.s32.totalorder %s197, %s199
      %p206 = scmp.eq.s32.totalorder %s23, 3
      %p207 = por %p205, %p206
      %p208 = scmp.ne.s32.totalorder %s199, %s200
      %p209 = scmp.eq.s32.totalorder %s23, 0
      %p210 = por %p208, %p209
      %p211 = scmp.ne.s32.totalorder %s199, %s200
      %p212 = scmp.eq.s32.totalorder %s24, 3
      %p213 = por %p211, %p212
      %p215 = scmp.ne.s32.totalorder %s200, %s214
      %p216 = scmp.eq.s32.totalorder %s24, 0
      %p217 = por %p215, %p216
      %s218 = ssub.s32 %s25, %s37
      %s219 = ssub.s32 %s26, %s33
      %s220 = sor.u32 %s218, %s219
      %p221 = scmp.eq.s32.totalorder %s220, 0
      %s223 = sadd.s32 %s222, 1
      %s224 = scalar_select %p221, %s222, %s223
      %p227 = pneg %p221
      %p228 = scmp.eq.s32.totalorder %s18, 3
      %p229 = por %p227, %p228
      %p230 = scmp.ne.s32.totalorder %s222, %s225
      %p231 = scmp.eq.s32.totalorder %s18, 0
      %p232 = por %p230, %p231
      %p233 = scmp.ne.s32.totalorder %s222, %s225
      %p234 = scmp.eq.s32.totalorder %s23, 3
      %p235 = por %p233, %p234
      %p236 = scmp.ne.s32.totalorder %s225, %s226
      %p237 = scmp.eq.s32.totalorder %s23, 0
      %p238 = por %p236, %p237
      %p239 = scmp.ne.s32.totalorder %s225, %s226
      %p240 = scmp.eq.s32.totalorder %s24, 3
      %p241 = por %p239, %p240
      %p243 = scmp.ne.s32.totalorder %s226, %s242
      %p244 = scmp.eq.s32.totalorder %s24, 0
      %p245 = por %p243, %p244
      %p246 = scmp.le.s32.totalorder 1, %s18
      %p247 = scmp.lt.s32.totalorder %s18, 5
      %p248 = pnand %p246, %p247
      %p249 = pneg %p248
      // Predicated region
      $region9: #{tpu_custom_call.1} parent=5 // pred_check
        _
      $region10: #{tpu_custom_call.1} parent=5 // pred_check_branch
        %251 = sbr.rel (%p248) target = $region12
      $region11: #{tpu_custom_call.1} parent=5 // pred_region
        %s252 = ssub.s32 %s18, 1
        // Predicated region
        $region13: #{tpu_custom_call.1} parent=11 // pred_check
          %p253 = pneg %p105
        $region14: #{tpu_custom_call.1} parent=11 // pred_check_branch
          %255 = sbr.rel (%p253) target = $region16
        $region15: #{tpu_custom_call.1} parent=11 // pred_region
          _
        $region16: #{tpu_custom_call.1} parent=11 // pred_fallthru
          _
        // Predicated region
        $region17: #{tpu_custom_call.1} parent=11 // pred_check
          %p256 = pneg %p126
        $region18: #{tpu_custom_call.1} parent=11 // pred_check_branch
          %258 = sbr.rel (%p256) target = $region20
        $region19: #{tpu_custom_call.1} parent=11 // pred_region
          _
        $region20: #{tpu_custom_call.1} parent=11 // pred_fallthru
          _
        // Predicated region
        $region21: #{tpu_custom_call.1} parent=11 // pred_check
          %p259 = pneg %p147
        $region22: #{tpu_custom_call.1} parent=11 // pred_check_branch
          %261 = sbr.rel (%p259) target = $region24
        $region23: #{tpu_custom_call.1} parent=11 // pred_region
          _
        $region24: #{tpu_custom_call.1} parent=11 // pred_fallthru
          _
        // Predicated region
        $region25: #{tpu_custom_call.1} parent=11 // pred_check
          %p262 = pneg %p168
        $region26: #{tpu_custom_call.1} parent=11 // pred_check_branch
          %264 = sbr.rel (%p262) target = $region28
        $region27: #{tpu_custom_call.1} parent=11 // pred_region
          %s266 = ssub.s32 9216, 9216
          %267 = vsyncadd [#allocation3], %s266
          %s268 = sshll.u32 [#allocation2], 4
          %s269 = int_to_ptr.vmem [resolvable:$true] %s268
          %274 = dma.hbm_to_vmem [thread:$0]  %s5, 9216, %s269, [#allocation3], 64, 64, 4
        $region28: #{tpu_custom_call.1} parent=11 // pred_fallthru
          _
        // Predicated region
        $region29: #{tpu_custom_call.1} parent=11 // pred_check
          %p275 = pneg %p189
        $region30: #{tpu_custom_call.1} parent=11 // pred_check_branch
          %277 = sbr.rel (%p275) target = $region32
        $region31: #{tpu_custom_call.1} parent=11 // pred_region
          _
        $region32: #{tpu_custom_call.1} parent=11 // pred_fallthru
          _
        // Predicated region
        $region33: #{tpu_custom_call.1} parent=11 // pred_check
          %p278 = pneg %p210
        $region34: #{tpu_custom_call.1} parent=11 // pred_check_branch
          %280 = sbr.rel (%p278) target = $region36
        $region35: #{tpu_custom_call.1} parent=11 // pred_region
          _
        $region36: #{tpu_custom_call.1} parent=11 // pred_fallthru
          _
      $region12: #{tpu_custom_call.1} parent=5 // pred_fallthru
        _
      %p281 = scmp.lt.s32.totalorder %s18, 4
      // Predicated region
      $region37: #{tpu_custom_call.1} parent=5 // pred_check
        %p282 = pneg %p281
      $region38: #{tpu_custom_call.1} parent=5 // pred_check_branch
        %284 = sbr.rel (%p282) target = $region40
      $region39: #{tpu_custom_call.1} parent=5 // pred_region
        // Predicated region
        $region41: #{tpu_custom_call.1} parent=39 // pred_check
          %p285 = pneg %p50
        $region42: #{tpu_custom_call.1} parent=39 // pred_check_branch
          %287 = sbr.rel (%p285) target = $region44
        $region43: #{tpu_custom_call.1} parent=39 // pred_region
          %p288 = scmp.lt.s32.totalorder %s25, 1
          %s289 = scalar_select %p288, %s25, 1
          %s290 = smul.addr %s289, 60
          %s291 = smul.addr %s290, 4
          %s292 = scalar_lea.vmem %s0, %s291
        $region44: #{tpu_custom_call.1} parent=39 // pred_fallthru
          _
        // Predicated region
        $region45: #{tpu_custom_call.1} parent=39 // pred_check
          %p293 = pneg %p78
        $region46: #{tpu_custom_call.1} parent=39 // pred_check_branch
          %295 = sbr.rel (%p293) target = $region48
        $region47: #{tpu_custom_call.1} parent=39 // pred_region
          %s296 = smul.u32 8, %s26
          %p297 = scmp.lt.s32.totalorder %s25, 1
          %s298 = scalar_select %p297, %s25, 1
          %p299 = scmp.lt.s32.totalorder %s296, 15
          %s300 = scalar_select %p299, %s296, 15
          %s301 = smul.addr %s300, 2
          %s302 = smul.addr %s298, 32
          %s303 = sadd.s32 %s301, %s302
          %s304 = smul.addr %s303, 4
          %s305 = scalar_lea.vmem %s1, %s304
          %s306 = smul.u32 8, %s26
        $region48: #{tpu_custom_call.1} parent=39 // pred_fallthru
          _
      $region40: #{tpu_custom_call.1} parent=5 // pred_fallthru
        _
      %p307 = scmp.le.s32.totalorder 1, %s18
      %p308 = scmp.lt.s32.totalorder %s18, 5
      %p309 = pnand %p307, %p308
      %p310 = pneg %p309
      // Predicated region
      $region49: #{tpu_custom_call.1} parent=5 // pred_check
        _
      $region50: #{tpu_custom_call.1} parent=5 // pred_check_branch
        %312 = sbr.rel (%p309) target = $region52
      $region51: #{tpu_custom_call.1} parent=5 // pred_region
        %s313 = ssub.s32 %s18, 1
        // Predicated region
        $region53: #{tpu_custom_call.1} parent=51 // pred_check
          %p314 = pneg %p168
        $region54: #{tpu_custom_call.1} parent=51 // pred_check_branch
          %316 = sbr.rel (%p314) target = $region56
        $region55: #{tpu_custom_call.1} parent=51 // pred_region
          %317 = dma.done [#allocation3], 9216
        $region56: #{tpu_custom_call.1} parent=51 // pred_fallthru
          _
        %p318 = scmp.lt.s32.totalorder %s27, 1
        %s319 = scalar_select %p318, %s27, 1
        %s320 = smul.addr %s319, 60
        %s321 = smul.addr %s320, 4
        %s322 = scalar_lea.vmem %s0, %s321
        %p323 = pneg %p56
        %p324 = pneg %p53
        %s325 = smul.u32 8, %s28
        %p326 = scmp.lt.s32.totalorder %s27, 1
        %s327 = scalar_select %p326, %s27, 1
        %p328 = scmp.lt.s32.totalorder %s325, 15
        %s329 = scalar_select %p328, %s325, 15
        %s330 = smul.addr %s329, 2
        %s331 = smul.addr %s327, 32
        %s332 = sadd.s32 %s330, %s331
        %s333 = smul.addr %s332, 4
        %s334 = scalar_lea.vmem %s1, %s333
        %p335 = pneg %p84
        %p336 = pneg %p81
        %p337 = pneg %p105
        %p338 = pneg %p102
        %p339 = pneg %p126
        %p340 = pneg %p123
        %p341 = pneg %p147
        %p342 = pneg %p144
        %p343 = pneg %p168
        %p344 = pneg %p165
        %p345 = pneg %p189
        %p346 = pneg %p186
        %p347 = pneg %p210
        %p348 = pneg %p207
        %p349 = pneg %p238
        %p350 = pneg %p235
        %s351 = sand.u32 %s225, 1
        %s352 = scalar_lea.sflag [#allocation4], %s351
        %s353 = sand.u32 %s225, 1
        %s354 = smul.addr %s353, 128
        %s355 = scalar_lea.vmem [#allocation5], %s354
        %p356 = scmp.lt.s32.totalorder %s27, 1
        %s357 = scalar_select %p356, %s27, 1
        %s358 = smul.addr %s357, 60
        %s359 = smul.addr %s358, 4
        %s360 = scalar_lea.vmem %s0, %s359
        %s361 = smul.u32 8, %s28
        %p362 = scmp.lt.s32.totalorder %s27, 1
        %s363 = scalar_select %p362, %s27, 1
        %p364 = scmp.lt.s32.totalorder %s361, 15
        %s365 = scalar_select %p364, %s361, 15
        %s366 = smul.addr %s365, 2
        %s367 = smul.addr %s363, 32
        %s368 = sadd.s32 %s366, %s367
        %s369 = smul.addr %s368, 4
        %s370 = scalar_lea.vmem %s1, %s369
        %s371 = smul.u32 8, %s28
        %s372 = smul.u32 8, %s28
        %s374 = smul.u32 %s28, 8
        %s375 = smul.u32 %s374, 3
        %s376 = smul.addr %s375, 4
        %s377 = scalar_lea.vmem %s360, %s376
        %v378 = vld [vmem:[%s377] sm:$0xf]
        %v379 = vld [vmem:[%s377 + $0x4] sm:$0xf]
        %v380 = vld [vmem:[%s377 + $0x8] sm:$0x1]
        %v381 = vld [vmem:[%s377 + $0xc] sm:$0xf]
        %v382 = vld [vmem:[%s377 + $0x10] sm:$0xf]
        %v383 = vld [vmem:[%s377 + $0x14] sm:$0x1]
        %v384 = vld [vmem:[%s377 + $0x18] sm:$0xf]
        %v385 = vld [vmem:[%s377 + $0x1c] sm:$0xf]
        %v386 = vld [vmem:[%s377 + $0x20] sm:$0x1]
        %v387 = vld [vmem:[%s377 + $0x24] sm:$0xf]
        %v388 = vld [vmem:[%s377 + $0x28] sm:$0xf]
        %v389 = vld [vmem:[%s377 + $0x2c] sm:$0x1]
        %v390 = vld [vmem:[%s377 + $0x30] sm:$0xf]
        %v391 = vld [vmem:[%s377 + $0x34] sm:$0xf]
        %v392 = vld [vmem:[%s377 + $0x38] sm:$0x1]
        %v393 = vld [vmem:[%s377 + $0x3c] sm:$0xf]
        %v394 = vld [vmem:[%s377 + $0x40] sm:$0xf]
        %v395 = vld [vmem:[%s377 + $0x44] sm:$0x1]
        %v396 = vld [vmem:[%s377 + $0x48] sm:$0xf]
        %v397 = vld [vmem:[%s377 + $0x4c] sm:$0xf]
        %v398 = vld [vmem:[%s377 + $0x50] sm:$0x1]
        %v399 = vld [vmem:[%s377 + $0x54] sm:$0xf]
        %v400 = vld [vmem:[%s377 + $0x58] sm:$0xf]
        %v401 = vld [vmem:[%s377 + $0x5c] sm:$0x1]
        %v402 = vld [vmem:[%s377 + $0x60] sm:$0xf]
        %v403 = vld [vmem:[%s377 + $0x64] sm:$0xf]
        %v404 = vld [vmem:[%s377 + $0x68] sm:$0x1]
        %v405 = vld [vmem:[%s377 + $0x6c] sm:$0xf]
        %v406 = vld [vmem:[%s377 + $0x70] sm:$0xf]
        %v407 = vld [vmem:[%s377 + $0x74] sm:$0x1]
        %v408 = vld [vmem:[%s377 + $0x78] sm:$0xf]
        %v409 = vld [vmem:[%s377 + $0x7c] sm:$0xf]
        %v410 = vld [vmem:[%s377 + $0x80] sm:$0x1]
        %v411 = vld [vmem:[%s377 + $0x84] sm:$0xf]
        %v412 = vld [vmem:[%s377 + $0x88] sm:$0xf]
        %v413 = vld [vmem:[%s377 + $0x8c] sm:$0x1]
        %v434 = vunpack.c.l.b16 %v378
        %v435 = vunpack.c.l.b16 %v379
        %v436 = vunpack.c.l.b16 %v381
        %v437 = vunpack.c.l.b16 %v382
        %v438 = vunpack.c.l.b16 %v384
        %v439 = vunpack.c.l.b16 %v385
        %v440 = vunpack.c.l.b16 %v387
        %v441 = vunpack.c.l.b16 %v388
        %v442 = vunpack.c.l.b16 %v390
        %v443 = vunpack.c.l.b16 %v391
        %v444 = vunpack.c.l.b16 %v393
        %v445 = vunpack.c.l.b16 %v394
        %v446 = vunpack.c.l.b16 %v396
        %v447 = vunpack.c.l.b16 %v397
        %v448 = vunpack.c.l.b16 %v399
        %v449 = vunpack.c.l.b16 %v400
        %v450 = vunpack.c.l.b16 %v402
        %v451 = vunpack.c.l.b16 %v403
        %v452 = vunpack.c.l.b16 %v405
        %v453 = vunpack.c.l.b16 %v406
        %v454 = vpack.c.b16 %v435, %v434
        %v455 = vpack.c.b16 %v437, %v436
        %v456 = vpack.c.b16 %v439, %v438
        %v457 = vpack.c.b16 %v441, %v440
        %v458 = vpack.c.b16 %v443, %v442
        %v459 = vpack.c.b16 %v445, %v444
        %v460 = vpack.c.b16 %v447, %v446
        %v461 = vpack.c.b16 %v449, %v448
        %v462 = vpack.c.b16 %v451, %v450
        %v463 = vpack.c.b16 %v453, %v452
        %v484 = vunpack.c.l.b16 %v380
        %v485 = vunpack.c.l.b16 %v383
        %v486 = vunpack.c.l.b16 %v386
        %v487 = vunpack.c.l.b16 %v389
        %v488 = vunpack.c.l.b16 %v392
        %v489 = vunpack.c.l.b16 %v395
        %v490 = vunpack.c.l.b16 %v398
        %v491 = vunpack.c.l.b16 %v401
        %v492 = vunpack.c.l.b16 %v404
        %v493 = vunpack.c.l.b16 %v407
        %v494 = vpack.c.b16 %v484, %v484
        %v495 = vpack.c.b16 %v485, %v485
        %v496 = vpack.c.b16 %v486, %v486
        %v497 = vpack.c.b16 %v487, %v487
        %v498 = vpack.c.b16 %v488, %v488
        %v499 = vpack.c.b16 %v489, %v489
        %v500 = vpack.c.b16 %v490, %v490
        %v501 = vpack.c.b16 %v491, %v491
        %v502 = vpack.c.b16 %v492, %v492
        %v503 = vpack.c.b16 %v493, %v493
        %vm504 = vsmask.f32 7424
        %v506 = vshrl.u32 %v454, 16
        %v508 = vshll.u32 %v454, 16
        %v510 = vrot.slane %v508, 1
        %v511 = vor.u32 %v506, %v510
        %v513 = vshll.u32 %v494, 16
        %v515 = vrot.slane %v513, 1
        %v516 = vsel %vm504, %v511, %v515
        %v518 = vshrl.u32 %v455, 16
        %v520 = vshll.u32 %v455, 16
        %v522 = vrot.slane %v520, 1
        %v523 = vor.u32 %v518, %v522
        %v525 = vshll.u32 %v495, 16
        %v527 = vrot.slane %v525, 1
        %v528 = vsel %vm504, %v523, %v527
        %v530 = vshrl.u32 %v456, 16
        %v532 = vshll.u32 %v456, 16
        %v534 = vrot.slane %v532, 1
        %v535 = vor.u32 %v530, %v534
        %v537 = vshll.u32 %v496, 16
        %v539 = vrot.slane %v537, 1
        %v540 = vsel %vm504, %v535, %v539
        %v542 = vshrl.u32 %v457, 16
        %v544 = vshll.u32 %v457, 16
        %v546 = vrot.slane %v544, 1
        %v547 = vor.u32 %v542, %v546
        %v549 = vshll.u32 %v497, 16
        %v551 = vrot.slane %v549, 1
        %v552 = vsel %vm504, %v547, %v551
        %v554 = vshrl.u32 %v458, 16
        %v556 = vshll.u32 %v458, 16
        %v558 = vrot.slane %v556, 1
        %v559 = vor.u32 %v554, %v558
        %v561 = vshll.u32 %v498, 16
        %v563 = vrot.slane %v561, 1
        %v564 = vsel %vm504, %v559, %v563
        %v566 = vshrl.u32 %v459, 16
        %v568 = vshll.u32 %v459, 16
        %v570 = vrot.slane %v568, 1
        %v571 = vor.u32 %v566, %v570
        %v573 = vshll.u32 %v499, 16
        %v575 = vrot.slane %v573, 1
        %v576 = vsel %vm504, %v571, %v575
        %v578 = vshrl.u32 %v460, 16
        %v580 = vshll.u32 %v460, 16
        %v582 = vrot.slane %v580, 1
        %v583 = vor.u32 %v578, %v582
        %v585 = vshll.u32 %v500, 16
        %v587 = vrot.slane %v585, 1
        %v588 = vsel %vm504, %v583, %v587
        %v590 = vshrl.u32 %v461, 16
        %v592 = vshll.u32 %v461, 16
        %v594 = vrot.slane %v592, 1
        %v595 = vor.u32 %v590, %v594
        %v597 = vshll.u32 %v501, 16
        %v599 = vrot.slane %v597, 1
        %v600 = vsel %vm504, %v595, %v599
        %v602 = vshrl.u32 %v462, 16
        %v604 = vshll.u32 %v462, 16
        %v606 = vrot.slane %v604, 1
        %v607 = vor.u32 %v602, %v606
        %v609 = vshll.u32 %v502, 16
        %v611 = vrot.slane %v609, 1
        %v612 = vsel %vm504, %v607, %v611
        %v614 = vshrl.u32 %v463, 16
        %v616 = vshll.u32 %v463, 16
        %v618 = vrot.slane %v616, 1
        %v619 = vor.u32 %v614, %v618
        %v621 = vshll.u32 %v503, 16
        %v623 = vrot.slane %v621, 1
        %v624 = vsel %vm504, %v619, %v623
        %vm635 = vcmask 1046528
        %v636 = vrot.slane %v454, 1
        %v637 = vrot.slane %v494, 1
        %v638 = vsel %vm635, %v636, %v637
        %v639 = vrot.slane %v455, 1
        %v640 = vrot.slane %v495, 1
        %v641 = vsel %vm635, %v639, %v640
        %v642 = vrot.slane %v456, 1
        %v643 = vrot.slane %v496, 1
        %v644 = vsel %vm635, %v642, %v643
        %v645 = vrot.slane %v457, 1
        %v646 = vrot.slane %v497, 1
        %v647 = vsel %vm635, %v645, %v646
        %v648 = vrot.slane %v458, 1
        %v649 = vrot.slane %v498, 1
        %v650 = vsel %vm635, %v648, %v649
        %v651 = vrot.slane %v459, 1
        %v652 = vrot.slane %v499, 1
        %v653 = vsel %vm635, %v651, %v652
        %v654 = vrot.slane %v460, 1
        %v655 = vrot.slane %v500, 1
        %v656 = vsel %vm635, %v654, %v655
        %v657 = vrot.slane %v461, 1
        %v658 = vrot.slane %v501, 1
        %v659 = vsel %vm635, %v657, %v658
        %v660 = vrot.slane %v462, 1
        %v661 = vrot.slane %v502, 1
        %v662 = vsel %vm635, %v660, %v661
        %v663 = vrot.slane %v463, 1
        %v664 = vrot.slane %v503, 1
        %v665 = vsel %vm635, %v663, %v664
        %v678 = vunpack.c.l.b16 %v408
        %v679 = vunpack.c.l.b16 %v409
        %v680 = vpack.c.b16 %v679, %v678
        %v683 = vunpack.c.l.b16 %v410
        %v684 = vpack.c.b16 %v683, %v683
        %v686 = vshrl.u32 %v680, 16
        %v688 = vshll.u32 %v680, 16
        %v690 = vrot.slane %v688, 1
        %v691 = vor.u32 %v686, %v690
        %v693 = vshll.u32 %v684, 16
        %v695 = vrot.slane %v693, 1
        %v696 = vsel %vm504, %v691, %v695
        %v698 = vrot.slane %v680, 1
        %v699 = vrot.slane %v684, 1
        %v700 = vsel %vm635, %v698, %v699
        %v704 = vunpack.c.l.b16 %v411
        %v705 = vunpack.c.l.b16 %v412
        %v706 = vpack.c.b16 %v705, %v704
        %v709 = vunpack.c.l.b16 %v413
        %v710 = vpack.c.b16 %v709, %v709
        %v712 = vshrl.u32 %v706, 16
        %v714 = vshll.u32 %v706, 16
        %v716 = vrot.slane %v714, 1
        %v717 = vor.u32 %v712, %v716
        %v719 = vshll.u32 %v710, 16
        %v721 = vrot.slane %v719, 1
        %v722 = vsel %vm504, %v717, %v721
        %v724 = vrot.slane %v706, 1
        %v725 = vrot.slane %v710, 1
        %v726 = vsel %vm635, %v724, %v725
        %v728 = vld [vmem:[%s2] sm:$0xf]
        %v729 = vld [vmem:[%s2 + $0x4] sm:$0xf]
        %v730 = vld [vmem:[%s2 + $0x8] sm:$0xf]
        %v731 = vld [vmem:[%s2 + $0xc] sm:$0xf]
        %v732 = vld [vmem:[%s2 + $0x10] sm:$0xf]
        %v733 = vld [vmem:[%s2 + $0x14] sm:$0xf]
        %v734 = vld [vmem:[%s2 + $0x18] sm:$0xf]
        %v735 = vld [vmem:[%s2 + $0x1c] sm:$0xf]
        %v736 = vld [vmem:[%s2 + $0x20] sm:$0xf]
        %v737 = vld [vmem:[%s2 + $0x24] sm:$0xf]
        %v738 = vld [vmem:[%s2 + $0x28] sm:$0xf]
        %v739 = vld [vmem:[%s2 + $0x2c] sm:$0xf]
        %v740 = vld [vmem:[%s2 + $0x30] sm:$0xf]
        %v741 = vld [vmem:[%s2 + $0x34] sm:$0xf]
        %v742 = vld [vmem:[%s2 + $0x38] sm:$0xf]
        %v743 = vld [vmem:[%s2 + $0x3c] sm:$0xf]
        %v744 = vld [vmem:[%s2 + $0x40] sm:$0xf]
        %v745 = vld [vmem:[%s2 + $0x44] sm:$0xf]
        %v746 = vld [vmem:[%s2 + $0x48] sm:$0xf]
        %v747 = vld [vmem:[%s2 + $0x4c] sm:$0xf]
        %v748 = vld [vmem:[%s2 + $0x50] sm:$0xf]
        %v749 = vld [vmem:[%s2 + $0x54] sm:$0xf]
        %v750 = vld [vmem:[%s2 + $0x58] sm:$0xf]
        %v751 = vld [vmem:[%s2 + $0x5c] sm:$0xf]
        %v752 = vld [vmem:[%s2 + $0x60] sm:$0xf]
        %v753 = vld [vmem:[%s2 + $0x64] sm:$0xf]
        %v754 = vld [vmem:[%s2 + $0x68] sm:$0xf]
        %v755 = vld [vmem:[%s2 + $0x6c] sm:$0xf]
        %v756 = vld [vmem:[%s2 + $0x70] sm:$0xf]
        %v757 = vld [vmem:[%s2 + $0x74] sm:$0xf]
        %v758 = vld [vmem:[%s2 + $0x78] sm:$0xf]
        %v759 = vld [vmem:[%s2 + $0x7c] sm:$0xf]
        %v760 = vld [vmem:[%s2 + $0x80] sm:$0xf]
        %v761 = vld [vmem:[%s2 + $0x84] sm:$0xf]
        %v762 = vld [vmem:[%s2 + $0x88] sm:$0xf]
        %v763 = vld [vmem:[%s2 + $0x8c] sm:$0xf]
        %v764 = vld [vmem:[%s2 + $0x90] sm:$0xf]
        %v765 = vld [vmem:[%s2 + $0x94] sm:$0xf]
        %v766 = vld [vmem:[%s2 + $0x98] sm:$0xf]
        %v767 = vld [vmem:[%s2 + $0x9c] sm:$0xf]
        %v768 = vld [vmem:[%s2 + $0xa0] sm:$0xf]
        %v769 = vld [vmem:[%s2 + $0xa4] sm:$0xf]
        %v770 = vld [vmem:[%s2 + $0xa8] sm:$0xf]
        %v771 = vld [vmem:[%s2 + $0xac] sm:$0xf]
        %v772 = vld [vmem:[%s2 + $0xb0] sm:$0xf]
        %v773 = vld [vmem:[%s2 + $0xb4] sm:$0xf]
        %v774 = vld [vmem:[%s2 + $0xb8] sm:$0xf]
        %v775 = vld [vmem:[%s2 + $0xbc] sm:$0xf]
        %v776 = vld [vmem:[%s2 + $0xc0] sm:$0xf]
        %v777 = vld [vmem:[%s2 + $0xc4] sm:$0xf]
        %v778 = vld [vmem:[%s2 + $0xc8] sm:$0xf]
        %v779 = vld [vmem:[%s2 + $0xcc] sm:$0xf]
        %v780 = vld [vmem:[%s2 + $0xd0] sm:$0xf]
        %v781 = vld [vmem:[%s2 + $0xd4] sm:$0xf]
        %v782 = vld [vmem:[%s2 + $0xd8] sm:$0xf]
        %v783 = vld [vmem:[%s2 + $0xdc] sm:$0xf]
        %v784 = vld [vmem:[%s2 + $0xe0] sm:$0xf]
        %v785 = vld [vmem:[%s2 + $0xe4] sm:$0xf]
        %v786 = vld [vmem:[%s2 + $0xe8] sm:$0xf]
        %v787 = vld [vmem:[%s2 + $0xec] sm:$0xf]
        %v788 = vld [vmem:[%s2 + $0xf0] sm:$0xf]
        %v789 = vld [vmem:[%s2 + $0xf4] sm:$0xf]
        %v790 = vld [vmem:[%s2 + $0xf8] sm:$0xf]
        %v791 = vld [vmem:[%s2 + $0xfc] sm:$0xf]
        %v792 = vld [vmem:[%s2 + $0x100] sm:$0xf]
        %v793 = vld [vmem:[%s2 + $0x104] sm:$0xf]
        %v794 = vld [vmem:[%s2 + $0x108] sm:$0xf]
        %v795 = vld [vmem:[%s2 + $0x10c] sm:$0xf]
        %v796 = vld [vmem:[%s2 + $0x110] sm:$0xf]
        %v797 = vld [vmem:[%s2 + $0x114] sm:$0xf]
        %v798 = vld [vmem:[%s2 + $0x118] sm:$0xf]
        %v799 = vld [vmem:[%s2 + $0x11c] sm:$0xf]
        %v800 = vld [vmem:[%s2 + $0x120] sm:$0xf]
        %v801 = vld [vmem:[%s2 + $0x124] sm:$0xf]
        %v802 = vld [vmem:[%s2 + $0x128] sm:$0xf]
        %v803 = vld [vmem:[%s2 + $0x12c] sm:$0xf]
        %v804 = vld [vmem:[%s2 + $0x130] sm:$0xf]
        %v805 = vld [vmem:[%s2 + $0x134] sm:$0xf]
        %v806 = vld [vmem:[%s2 + $0x138] sm:$0xf]
        %v807 = vld [vmem:[%s2 + $0x13c] sm:$0xf]
        %v808 = vld [vmem:[%s2 + $0x140] sm:$0xf]
        %v809 = vld [vmem:[%s2 + $0x144] sm:$0xf]
        %v810 = vld [vmem:[%s2 + $0x148] sm:$0xf]
        %v811 = vld [vmem:[%s2 + $0x14c] sm:$0xf]
        %v812 = vld [vmem:[%s2 + $0x150] sm:$0xf]
        %v813 = vld [vmem:[%s2 + $0x154] sm:$0xf]
        %v814 = vld [vmem:[%s2 + $0x158] sm:$0xf]
        %v815 = vld [vmem:[%s2 + $0x15c] sm:$0xf]
        %v816 = vld [vmem:[%s2 + $0x160] sm:$0xf]
        %v817 = vld [vmem:[%s2 + $0x164] sm:$0xf]
        %v818 = vld [vmem:[%s2 + $0x168] sm:$0xf]
        %v819 = vld [vmem:[%s2 + $0x16c] sm:$0xf]
        %v820 = vld [vmem:[%s2 + $0x170] sm:$0xf]
        %v821 = vld [vmem:[%s2 + $0x174] sm:$0xf]
        %v822 = vld [vmem:[%s2 + $0x178] sm:$0xf]
        %v823 = vld [vmem:[%s2 + $0x17c] sm:$0xf]
        %v824 = vld [vmem:[%s2 + $0x180] sm:$0xf]
        %v825 = vld [vmem:[%s2 + $0x184] sm:$0xf]
        %v826 = vld [vmem:[%s2 + $0x188] sm:$0xf]
        %v827 = vld [vmem:[%s2 + $0x18c] sm:$0xf]
        %v828 = vld [vmem:[%s2 + $0x190] sm:$0xf]
        %v829 = vld [vmem:[%s2 + $0x194] sm:$0xf]
        %v830 = vld [vmem:[%s2 + $0x198] sm:$0xf]
        %v831 = vld [vmem:[%s2 + $0x19c] sm:$0xf]
        %v832 = vld [vmem:[%s2 + $0x1a0] sm:$0xf]
        %v833 = vld [vmem:[%s2 + $0x1a4] sm:$0xf]
        %v834 = vld [vmem:[%s2 + $0x1a8] sm:$0xf]
        %v835 = vld [vmem:[%s2 + $0x1ac] sm:$0xf]
        %v836 = vld [vmem:[%s2 + $0x1b0] sm:$0xf]
        %v837 = vld [vmem:[%s2 + $0x1b4] sm:$0xf]
        %v838 = vld [vmem:[%s2 + $0x1b8] sm:$0xf]
        %v839 = vld [vmem:[%s2 + $0x1bc] sm:$0xf]
        %v840 = vld [vmem:[%s2 + $0x1c0] sm:$0xf]
        %v841 = vld [vmem:[%s2 + $0x1c4] sm:$0xf]
        %v842 = vld [vmem:[%s2 + $0x1c8] sm:$0xf]
        %v843 = vld [vmem:[%s2 + $0x1cc] sm:$0xf]
        %v844 = vld [vmem:[%s2 + $0x1d0] sm:$0xf]
        %v845 = vld [vmem:[%s2 + $0x1d4] sm:$0xf]
        %v846 = vld [vmem:[%s2 + $0x1d8] sm:$0xf]
        %v847 = vld [vmem:[%s2 + $0x1dc] sm:$0xf]
        %v848 = vld [vmem:[%s2 + $0x1e0] sm:$0xf]
        %v849 = vld [vmem:[%s2 + $0x1e4] sm:$0xf]
        %v850 = vld [vmem:[%s2 + $0x1e8] sm:$0xf]
        %v851 = vld [vmem:[%s2 + $0x1ec] sm:$0xf]
        %v852 = vld [vmem:[%s2 + $0x1f0] sm:$0xf]
        %v853 = vld [vmem:[%s2 + $0x1f4] sm:$0xf]
        %v854 = vld [vmem:[%s2 + $0x1f8] sm:$0xf]
        %v855 = vld [vmem:[%s2 + $0x1fc] sm:$0xf]
        %v856 = vld [vmem:[%s2 + $0x200] sm:$0xf]
        %v857 = vld [vmem:[%s2 + $0x204] sm:$0xf]
        %v858 = vld [vmem:[%s2 + $0x208] sm:$0xf]
        %v859 = vld [vmem:[%s2 + $0x20c] sm:$0xf]
        %v860 = vld [vmem:[%s2 + $0x210] sm:$0xf]
        %v861 = vld [vmem:[%s2 + $0x214] sm:$0xf]
        %v862 = vld [vmem:[%s2 + $0x218] sm:$0xf]
        %v863 = vld [vmem:[%s2 + $0x21c] sm:$0xf]
        %v864 = vld [vmem:[%s2 + $0x220] sm:$0xf]
        %v865 = vld [vmem:[%s2 + $0x224] sm:$0xf]
        %v866 = vld [vmem:[%s2 + $0x228] sm:$0xf]
        %v867 = vld [vmem:[%s2 + $0x22c] sm:$0xf]
        %v868 = vld [vmem:[%s2 + $0x230] sm:$0xf]
        %v869 = vld [vmem:[%s2 + $0x234] sm:$0xf]
        %v870 = vld [vmem:[%s2 + $0x238] sm:$0xf]
        %v871 = vld [vmem:[%s2 + $0x23c] sm:$0xf]
        %v1016 = vunpack.c.l.b16 %v728
        %v1017 = vunpack.c.l.b16 %v729
        %v1018 = vunpack.c.l.b16 %v730
        %v1019 = vunpack.c.l.b16 %v731
        %v1020 = vunpack.c.l.b16 %v732
        %v1021 = vunpack.c.l.b16 %v733
        %v1022 = vunpack.c.l.b16 %v734
        %v1023 = vunpack.c.l.b16 %v735
        %v1024 = vunpack.c.l.b16 %v736
        %v1025 = vunpack.c.l.b16 %v737
        %v1026 = vunpack.c.l.b16 %v738
        %v1027 = vunpack.c.l.b16 %v739
        %v1028 = vunpack.c.l.b16 %v740
        %v1029 = vunpack.c.l.b16 %v741
        %v1030 = vunpack.c.l.b16 %v742
        %v1031 = vunpack.c.l.b16 %v743
        %v1032 = vunpack.c.l.b16 %v744
        %v1033 = vunpack.c.l.b16 %v745
        %v1034 = vunpack.c.l.b16 %v746
        %v1035 = vunpack.c.l.b16 %v747
        %v1036 = vunpack.c.l.b16 %v748
        %v1037 = vunpack.c.l.b16 %v749
        %v1038 = vunpack.c.l.b16 %v750
        %v1039 = vunpack.c.l.b16 %v751
        %v1040 = vunpack.c.l.b16 %v752
        %v1041 = vunpack.c.l.b16 %v753
        %v1042 = vunpack.c.l.b16 %v754
        %v1043 = vunpack.c.l.b16 %v755
        %v1044 = vunpack.c.l.b16 %v756
        %v1045 = vunpack.c.l.b16 %v757
        %v1046 = vunpack.c.l.b16 %v758
        %v1047 = vunpack.c.l.b16 %v759
        %v1048 = vunpack.c.l.b16 %v760
        %v1049 = vunpack.c.l.b16 %v761
        %v1050 = vunpack.c.l.b16 %v762
        %v1051 = vunpack.c.l.b16 %v763
        %v1052 = vunpack.c.l.b16 %v764
        %v1053 = vunpack.c.l.b16 %v765
        %v1054 = vunpack.c.l.b16 %v766
        %v1055 = vunpack.c.l.b16 %v767
        %v1056 = vunpack.c.l.b16 %v768
        %v1057 = vunpack.c.l.b16 %v769
        %v1058 = vunpack.c.l.b16 %v770
        %v1059 = vunpack.c.l.b16 %v771
        %v1060 = vunpack.c.l.b16 %v772
        %v1061 = vunpack.c.l.b16 %v773
        %v1062 = vunpack.c.l.b16 %v774
        %v1063 = vunpack.c.l.b16 %v775
        %v1064 = vunpack.c.l.b16 %v776
        %v1065 = vunpack.c.l.b16 %v777
        %v1066 = vunpack.c.l.b16 %v778
        %v1067 = vunpack.c.l.b16 %v779
        %v1068 = vunpack.c.l.b16 %v780
        %v1069 = vunpack.c.l.b16 %v781
        %v1070 = vunpack.c.l.b16 %v782
        %v1071 = vunpack.c.l.b16 %v783
        %v1072 = vunpack.c.l.b16 %v784
        %v1073 = vunpack.c.l.b16 %v785
        %v1074 = vunpack.c.l.b16 %v786
        %v1075 = vunpack.c.l.b16 %v787
        %v1076 = vunpack.c.l.b16 %v788
        %v1077 = vunpack.c.l.b16 %v789
        %v1078 = vunpack.c.l.b16 %v790
        %v1079 = vunpack.c.l.b16 %v791
        %v1080 = vunpack.c.l.b16 %v792
        %v1081 = vunpack.c.l.b16 %v793
        %v1082 = vunpack.c.l.b16 %v794
        %v1083 = vunpack.c.l.b16 %v795
        %v1084 = vunpack.c.l.b16 %v796
        %v1085 = vunpack.c.l.b16 %v797
        %v1086 = vunpack.c.l.b16 %v798
        %v1087 = vunpack.c.l.b16 %v799
        %v1088 = vunpack.c.l.b16 %v800
        %v1089 = vunpack.c.l.b16 %v801
        %v1090 = vunpack.c.l.b16 %v802
        %v1091 = vunpack.c.l.b16 %v803
        %v1092 = vunpack.c.l.b16 %v804
        %v1093 = vunpack.c.l.b16 %v805
        %v1094 = vunpack.c.l.b16 %v806
        %v1095 = vunpack.c.l.b16 %v807
        %v1096 = vunpack.c.l.b16 %v808
        %v1097 = vunpack.c.l.b16 %v809
        %v1098 = vunpack.c.l.b16 %v810
        %v1099 = vunpack.c.l.b16 %v811
        %v1100 = vunpack.c.l.b16 %v812
        %v1101 = vunpack.c.l.b16 %v813
        %v1102 = vunpack.c.l.b16 %v814
        %v1103 = vunpack.c.l.b16 %v815
        %v1104 = vunpack.c.l.b16 %v816
        %v1105 = vunpack.c.l.b16 %v817
        %v1106 = vunpack.c.l.b16 %v818
        %v1107 = vunpack.c.l.b16 %v819
        %v1108 = vunpack.c.l.b16 %v820
        %v1109 = vunpack.c.l.b16 %v821
        %v1110 = vunpack.c.l.b16 %v822
        %v1111 = vunpack.c.l.b16 %v823
        %v1112 = vunpack.c.l.b16 %v824
        %v1113 = vunpack.c.l.b16 %v825
        %v1114 = vunpack.c.l.b16 %v826
        %v1115 = vunpack.c.l.b16 %v827
        %v1116 = vunpack.c.l.b16 %v828
        %v1117 = vunpack.c.l.b16 %v829
        %v1118 = vunpack.c.l.b16 %v830
        %v1119 = vunpack.c.l.b16 %v831
        %v1120 = vunpack.c.l.b16 %v832
        %v1121 = vunpack.c.l.b16 %v833
        %v1122 = vunpack.c.l.b16 %v834
        %v1123 = vunpack.c.l.b16 %v835
        %v1124 = vunpack.c.l.b16 %v836
        %v1125 = vunpack.c.l.b16 %v837
        %v1126 = vunpack.c.l.b16 %v838
        %v1127 = vunpack.c.l.b16 %v839
        %v1128 = vunpack.c.l.b16 %v840
        %v1129 = vunpack.c.l.b16 %v841
        %v1130 = vunpack.c.l.b16 %v842
        %v1131 = vunpack.c.l.b16 %v843
        %v1132 = vunpack.c.l.b16 %v844
        %v1133 = vunpack.c.l.b16 %v845
        %v1134 = vunpack.c.l.b16 %v846
        %v1135 = vunpack.c.l.b16 %v847
        %v1136 = vunpack.c.l.b16 %v848
        %v1137 = vunpack.c.l.b16 %v849
        %v1138 = vunpack.c.l.b16 %v850
        %v1139 = vunpack.c.l.b16 %v851
        %v1140 = vunpack.c.l.b16 %v852
        %v1141 = vunpack.c.l.b16 %v853
        %v1142 = vunpack.c.l.b16 %v854
        %v1143 = vunpack.c.l.b16 %v855
        %v1144 = vunpack.c.l.b16 %v856
        %v1145 = vunpack.c.l.b16 %v857
        %v1146 = vunpack.c.l.b16 %v858
        %v1147 = vunpack.c.l.b16 %v859
        %v1148 = vunpack.c.l.b16 %v860
        %v1149 = vunpack.c.l.b16 %v861
        %v1150 = vunpack.c.l.b16 %v862
        %v1151 = vunpack.c.l.b16 %v863
        %v1152 = vunpack.c.l.b16 %v864
        %v1153 = vunpack.c.l.b16 %v865
        %v1154 = vunpack.c.l.b16 %v866
        %v1155 = vunpack.c.l.b16 %v867
        %v1156 = vunpack.c.l.b16 %v868
        %v1157 = vunpack.c.l.b16 %v869
        %v1158 = vunpack.c.l.b16 %v870
        %v1159 = vunpack.c.l.b16 %v871
        %v1160 = vpack.c.b16 %v1017, %v1016
        %v1161 = vpack.c.b16 %v1019, %v1018
        %v1162 = vpack.c.b16 %v1021, %v1020
        %v1163 = vpack.c.b16 %v1023, %v1022
        %v1164 = vpack.c.b16 %v1025, %v1024
        %v1165 = vpack.c.b16 %v1027, %v1026
        %v1166 = vpack.c.b16 %v1029, %v1028
        %v1167 = vpack.c.b16 %v1031, %v1030
        %v1168 = vpack.c.b16 %v1033, %v1032
        %v1169 = vpack.c.b16 %v1035, %v1034
        %v1170 = vpack.c.b16 %v1037, %v1036
        %v1171 = vpack.c.b16 %v1039, %v1038
        %v1172 = vpack.c.b16 %v1041, %v1040
        %v1173 = vpack.c.b16 %v1043, %v1042
        %v1174 = vpack.c.b16 %v1045, %v1044
        %v1175 = vpack.c.b16 %v1047, %v1046
        %v1176 = vpack.c.b16 %v1049, %v1048
        %v1177 = vpack.c.b16 %v1051, %v1050
        %v1178 = vpack.c.b16 %v1053, %v1052
        %v1179 = vpack.c.b16 %v1055, %v1054
        %v1180 = vpack.c.b16 %v1057, %v1056
        %v1181 = vpack.c.b16 %v1059, %v1058
        %v1182 = vpack.c.b16 %v1061, %v1060
        %v1183 = vpack.c.b16 %v1063, %v1062
        %v1184 = vpack.c.b16 %v1065, %v1064
        %v1185 = vpack.c.b16 %v1067, %v1066
        %v1186 = vpack.c.b16 %v1069, %v1068
        %v1187 = vpack.c.b16 %v1071, %v1070
        %v1188 = vpack.c.b16 %v1073, %v1072
        %v1189 = vpack.c.b16 %v1075, %v1074
        %v1190 = vpack.c.b16 %v1077, %v1076
        %v1191 = vpack.c.b16 %v1079, %v1078
        %v1192 = vpack.c.b16 %v1081, %v1080
        %v1193 = vpack.c.b16 %v1083, %v1082
        %v1194 = vpack.c.b16 %v1085, %v1084
        %v1195 = vpack.c.b16 %v1087, %v1086
        %v1196 = vpack.c.b16 %v1089, %v1088
        %v1197 = vpack.c.b16 %v1091, %v1090
        %v1198 = vpack.c.b16 %v1093, %v1092
        %v1199 = vpack.c.b16 %v1095, %v1094
        %v1200 = vpack.c.b16 %v1097, %v1096
        %v1201 = vpack.c.b16 %v1099, %v1098
        %v1202 = vpack.c.b16 %v1101, %v1100
        %v1203 = vpack.c.b16 %v1103, %v1102
        %v1204 = vpack.c.b16 %v1105, %v1104
        %v1205 = vpack.c.b16 %v1107, %v1106
        %v1206 = vpack.c.b16 %v1109, %v1108
        %v1207 = vpack.c.b16 %v1111, %v1110
        %v1208 = vpack.c.b16 %v1113, %v1112
        %v1209 = vpack.c.b16 %v1115, %v1114
        %v1210 = vpack.c.b16 %v1117, %v1116
        %v1211 = vpack.c.b16 %v1119, %v1118
        %v1212 = vpack.c.b16 %v1121, %v1120
        %v1213 = vpack.c.b16 %v1123, %v1122
        %v1214 = vpack.c.b16 %v1125, %v1124
        %v1215 = vpack.c.b16 %v1127, %v1126
        %v1216 = vpack.c.b16 %v1129, %v1128
        %v1217 = vpack.c.b16 %v1131, %v1130
        %v1218 = vpack.c.b16 %v1133, %v1132
        %v1219 = vpack.c.b16 %v1135, %v1134
        %v1220 = vpack.c.b16 %v1137, %v1136
        %v1221 = vpack.c.b16 %v1139, %v1138
        %v1222 = vpack.c.b16 %v1141, %v1140
        %v1223 = vpack.c.b16 %v1143, %v1142
        %v1224 = vpack.c.b16 %v1145, %v1144
        %v1225 = vpack.c.b16 %v1147, %v1146
        %v1226 = vpack.c.b16 %v1149, %v1148
        %v1227 = vpack.c.b16 %v1151, %v1150
        %v1228 = vpack.c.b16 %v1153, %v1152
        %v1229 = vpack.c.b16 %v1155, %v1154
        %v1230 = vpack.c.b16 %v1157, %v1156
        %v1231 = vpack.c.b16 %v1159, %v1158
        %1304 = vmatprep.subr.bf16.mxu0 0
        %1305 = vmatpush1.bf16.msra.mxu0 %v1167
        %1306 = vmatprep.subr.bf16.mxu0 0
        %1307 = vmatpush1.bf16.msra.mxu0 %v1166
        %1308 = vmatprep.subr.bf16.mxu0 0
        %1309 = vmatpush1.bf16.msra.mxu0 %v1165
        %1310 = vmatprep.subr.bf16.mxu0 0
        %1311 = vmatpush1.bf16.msra.mxu0 %v1164
        %1312 = vmatprep.subr.bf16.mxu0 0
        %1313 = vmatpush1.bf16.msra.mxu0 %v1163
        %1314 = vmatprep.subr.bf16.mxu0 0
        %1315 = vmatpush1.bf16.msra.mxu0 %v1162
        %1316 = vmatprep.subr.bf16.mxu0 0
        %1317 = vmatpush1.bf16.msra.mxu0 %v1161
        %1318 = vmatprep.subr.bf16.mxu0 0
        %1319 = vmatpush1.bf16.msra.mxu0 %v1160
        %1320 = vmatprep.subr.bf16.mxu0 0
        %1321 = vmatpush2.bf16.msra.mxu0 %v1175
        %1322 = vmatprep.subr.bf16.mxu0 0
        %1323 = vmatpush2.bf16.msra.mxu0 %v1174
        %1324 = vmatprep.subr.bf16.mxu0 0
        %1325 = vmatpush2.bf16.msra.mxu0 %v1173
        %1326 = vmatprep.subr.bf16.mxu0 0
        %1327 = vmatpush2.bf16.msra.mxu0 %v1172
        %1328 = vmatprep.subr.bf16.mxu0 0
        %1329 = vmatpush2.bf16.msra.mxu0 %v1171
        %1330 = vmatprep.subr.bf16.mxu0 0
        %1331 = vmatpush2.bf16.msra.mxu0 %v1170
        %1332 = vmatprep.subr.bf16.mxu0 0
        %1333 = vmatpush2.bf16.msra.mxu0 %v1169
        %1334 = vmatprep.subr.bf16.mxu0 0
        %1335 = vmatpush2.bf16.msra.mxu0 %v1168
        %1336 = vmatprep.mubr.bf16.mxu0 %v516
        %1337 = vmatmul.mubr.bf16.gmra.mxu0 %v454
        %v1338 = vpop.f32.mrf.mxu0
        %v1339 = vadd.f32 0.0, %v1338
        %v1340 = vpop.f32.mrf.mxu0
        %v1341 = vpop.f32.mrf.mxu0
        %v1342 = vadd.f32 0.0, %v1341
        %v1343 = vpop.f32.mrf.mxu0
        %1344 = vmatprep.mubr.bf16.mxu0 %v528
        %1345 = vmatmul.mubr.bf16.gmra.mxu0 %v455
        %v1346 = vpop.f32.mrf.mxu0
        %v1347 = vadd.f32 0.0, %v1346
        %v1348 = vpop.f32.mrf.mxu0
        %v1349 = vpop.f32.mrf.mxu0
        %v1350 = vadd.f32 0.0, %v1349
        %v1351 = vpop.f32.mrf.mxu0
        %1352 = vmatprep.mubr.bf16.mxu0 %v540
        %1353 = vmatmul.mubr.bf16.gmra.mxu0 %v456
        %v1354 = vpop.f32.mrf.mxu0
        %v1355 = vadd.f32 0.0, %v1354
        %v1356 = vpop.f32.mrf.mxu0
        %v1357 = vpop.f32.mrf.mxu0
        %v1358 = vadd.f32 0.0, %v1357
        %v1359 = vpop.f32.mrf.mxu0
        %1360 = vmatprep.mubr.bf16.mxu0 %v552
        %1361 = vmatmul.mubr.bf16.gmra.mxu0 %v457
        %v1362 = vpop.f32.mrf.mxu0
        %v1363 = vadd.f32 0.0, %v1362
        %v1364 = vpop.f32.mrf.mxu0
        %v1365 = vpop.f32.mrf.mxu0
        %v1366 = vadd.f32 0.0, %v1365
        %v1367 = vpop.f32.mrf.mxu0
        %1368 = vmatprep.mubr.bf16.mxu0 %v564
        %1369 = vmatmul.mubr.bf16.gmra.mxu0 %v458
        %v1370 = vpop.f32.mrf.mxu0
        %v1371 = vadd.f32 0.0, %v1370
        %v1372 = vpop.f32.mrf.mxu0
        %v1373 = vpop.f32.mrf.mxu0
        %v1374 = vadd.f32 0.0, %v1373
        %v1375 = vpop.f32.mrf.mxu0
        %1376 = vmatprep.mubr.bf16.mxu0 %v576
        %1377 = vmatmul.mubr.bf16.gmra.mxu0 %v459
        %v1378 = vpop.f32.mrf.mxu0
        %v1379 = vadd.f32 0.0, %v1378
        %v1380 = vpop.f32.mrf.mxu0
        %v1381 = vpop.f32.mrf.mxu0
        %v1382 = vadd.f32 0.0, %v1381
        %v1383 = vpop.f32.mrf.mxu0
        %1384 = vmatprep.mubr.bf16.mxu0 %v588
        %1385 = vmatmul.mubr.bf16.gmra.mxu0 %v460
        %v1386 = vpop.f32.mrf.mxu0
        %v1387 = vadd.f32 0.0, %v1386
        %v1388 = vpop.f32.mrf.mxu0
        %v1389 = vpop.f32.mrf.mxu0
        %v1390 = vadd.f32 0.0, %v1389
        %v1391 = vpop.f32.mrf.mxu0
        %1392 = vmatprep.mubr.bf16.mxu0 %v600
        %1393 = vmatmul.mubr.bf16.gmra.mxu0 %v461
        %v1394 = vpop.f32.mrf.mxu0
        %v1395 = vadd.f32 0.0, %v1394
        %v1396 = vpop.f32.mrf.mxu0
        %v1397 = vpop.f32.mrf.mxu0
        %v1398 = vadd.f32 0.0, %v1397
        %v1399 = vpop.f32.mrf.mxu0
        %1400 = vmatprep.mubr.bf16.mxu0 %v612
        %1401 = vmatmul.mubr.bf16.gmra.mxu0 %v462
        %v1402 = vpop.f32.mrf.mxu0
        %v1403 = vadd.f32 0.0, %v1402
        %v1404 = vpop.f32.mrf.mxu0
        %v1405 = vpop.f32.mrf.mxu0
        %v1406 = vadd.f32 0.0, %v1405
        %v1407 = vpop.f32.mrf.mxu0
        %1408 = vmatprep.mubr.bf16.mxu0 %v624
        %1409 = vmatmul.mubr.bf16.gmra.mxu0 %v463
        %v1410 = vpop.f32.mrf.mxu0
        %v1411 = vadd.f32 0.0, %v1410
        %v1412 = vpop.f32.mrf.mxu0
        %v1413 = vpop.f32.mrf.mxu0
        %v1414 = vadd.f32 0.0, %v1413
        %v1415 = vpop.f32.mrf.mxu0
        %1416 = vdwg.mxu0
        %1417 = vmatprep.subr.bf16.mxu0 0
        %1418 = vmatpush1.bf16.msra.mxu0 %v1183
        %1419 = vmatprep.subr.bf16.mxu0 0
        %1420 = vmatpush1.bf16.msra.mxu0 %v1182
        %1421 = vmatprep.subr.bf16.mxu0 0
        %1422 = vmatpush1.bf16.msra.mxu0 %v1181
        %1423 = vmatprep.subr.bf16.mxu0 0
        %1424 = vmatpush1.bf16.msra.mxu0 %v1180
        %1425 = vmatprep.subr.bf16.mxu0 0
        %1426 = vmatpush1.bf16.msra.mxu0 %v1179
        %1427 = vmatprep.subr.bf16.mxu0 0
        %1428 = vmatpush1.bf16.msra.mxu0 %v1178
        %1429 = vmatprep.subr.bf16.mxu0 0
        %1430 = vmatpush1.bf16.msra.mxu0 %v1177
        %1431 = vmatprep.subr.bf16.mxu0 0
        %1432 = vmatpush1.bf16.msra.mxu0 %v1176
        %1433 = vmatprep.subr.bf16.mxu0 0
        %1434 = vmatpush2.bf16.msra.mxu0 %v1191
        %1435 = vmatprep.subr.bf16.mxu0 0
        %1436 = vmatpush2.bf16.msra.mxu0 %v1190
        %1437 = vmatprep.subr.bf16.mxu0 0
        %1438 = vmatpush2.bf16.msra.mxu0 %v1189
        %1439 = vmatprep.subr.bf16.mxu0 0
        %1440 = vmatpush2.bf16.msra.mxu0 %v1188
        %1441 = vmatprep.subr.bf16.mxu0 0
        %1442 = vmatpush2.bf16.msra.mxu0 %v1187
        %1443 = vmatprep.subr.bf16.mxu0 0
        %1444 = vmatpush2.bf16.msra.mxu0 %v1186
        %1445 = vmatprep.subr.bf16.mxu0 0
        %1446 = vmatpush2.bf16.msra.mxu0 %v1185
        %1447 = vmatprep.subr.bf16.mxu0 0
        %1448 = vmatpush2.bf16.msra.mxu0 %v1184
        %1449 = vmatprep.mubr.bf16.mxu0 %v455
        %1450 = vmatmul.mubr.bf16.gmra.mxu0 %v638
        %v1451 = vpop.f32.mrf.mxu0
        %v1452 = vadd.f32 %v1339, %v1451
        %v1453 = vpop.f32.mrf.mxu0
        %v1454 = vpop.f32.mrf.mxu0
        %v1455 = vadd.f32 %v1342, %v1454
        %v1456 = vpop.f32.mrf.mxu0
        %1457 = vmatprep.mubr.bf16.mxu0 %v456
        %1458 = vmatmul.mubr.bf16.gmra.mxu0 %v641
        %v1459 = vpop.f32.mrf.mxu0
        %v1460 = vadd.f32 %v1347, %v1459
        %v1461 = vpop.f32.mrf.mxu0
        %v1462 = vpop.f32.mrf.mxu0
        %v1463 = vadd.f32 %v1350, %v1462
        %v1464 = vpop.f32.mrf.mxu0
        %1465 = vmatprep.mubr.bf16.mxu0 %v457
        %1466 = vmatmul.mubr.bf16.gmra.mxu0 %v644
        %v1467 = vpop.f32.mrf.mxu0
        %v1468 = vadd.f32 %v1355, %v1467
        %v1469 = vpop.f32.mrf.mxu0
        %v1470 = vpop.f32.mrf.mxu0
        %v1471 = vadd.f32 %v1358, %v1470
        %v1472 = vpop.f32.mrf.mxu0
        %1473 = vmatprep.mubr.bf16.mxu0 %v458
        %1474 = vmatmul.mubr.bf16.gmra.mxu0 %v647
        %v1475 = vpop.f32.mrf.mxu0
        %v1476 = vadd.f32 %v1363, %v1475
        %v1477 = vpop.f32.mrf.mxu0
        %v1478 = vpop.f32.mrf.mxu0
        %v1479 = vadd.f32 %v1366, %v1478
        %v1480 = vpop.f32.mrf.mxu0
        %1481 = vmatprep.mubr.bf16.mxu0 %v459
        %1482 = vmatmul.mubr.bf16.gmra.mxu0 %v650
        %v1483 = vpop.f32.mrf.mxu0
        %v1484 = vadd.f32 %v1371, %v1483
        %v1485 = vpop.f32.mrf.mxu0
        %v1486 = vpop.f32.mrf.mxu0
        %v1487 = vadd.f32 %v1374, %v1486
        %v1488 = vpop.f32.mrf.mxu0
        %1489 = vmatprep.mubr.bf16.mxu0 %v460
        %1490 = vmatmul.mubr.bf16.gmra.mxu0 %v653
        %v1491 = vpop.f32.mrf.mxu0
        %v1492 = vadd.f32 %v1379, %v1491
        %v1493 = vpop.f32.mrf.mxu0
        %v1494 = vpop.f32.mrf.mxu0
        %v1495 = vadd.f32 %v1382, %v1494
        %v1496 = vpop.f32.mrf.mxu0
        %1497 = vmatprep.mubr.bf16.mxu0 %v461
        %1498 = vmatmul.mubr.bf16.gmra.mxu0 %v656
        %v1499 = vpop.f32.mrf.mxu0
        %v1500 = vadd.f32 %v1387, %v1499
        %v1501 = vpop.f32.mrf.mxu0
        %v1502 = vpop.f32.mrf.mxu0
        %v1503 = vadd.f32 %v1390, %v1502
        %v1504 = vpop.f32.mrf.mxu0
        %1505 = vmatprep.mubr.bf16.mxu0 %v462
        %1506 = vmatmul.mubr.bf16.gmra.mxu0 %v659
        %v1507 = vpop.f32.mrf.mxu0
        %v1508 = vadd.f32 %v1395, %v1507
        %v1509 = vpop.f32.mrf.mxu0
        %v1510 = vpop.f32.mrf.mxu0
        %v1511 = vadd.f32 %v1398, %v1510
        %v1512 = vpop.f32.mrf.mxu0
        %1513 = vmatprep.mubr.bf16.mxu0 %v463
        %1514 = vmatmul.mubr.bf16.gmra.mxu0 %v662
        %v1515 = vpop.f32.mrf.mxu0
        %v1516 = vadd.f32 %v1403, %v1515
        %v1517 = vpop.f32.mrf.mxu0
        %v1518 = vpop.f32.mrf.mxu0
        %v1519 = vadd.f32 %v1406, %v1518
        %v1520 = vpop.f32.mrf.mxu0
        %1521 = vmatprep.mubr.bf16.mxu0 %v680
        %1522 = vmatmul.mubr.bf16.gmra.mxu0 %v665
        %v1523 = vpop.f32.mrf.mxu0
        %v1524 = vadd.f32 %v1411, %v1523
        %v1525 = vpop.f32.mrf.mxu0
        %v1526 = vpop.f32.mrf.mxu0
        %v1527 = vadd.f32 %v1414, %v1526
        %v1528 = vpop.f32.mrf.mxu0
        %1529 = vdwg.mxu0
        %1530 = vmatprep.subr.bf16.mxu0 0
        %1531 = vmatpush1.bf16.msra.mxu0 %v1199
        %1532 = vmatprep.subr.bf16.mxu0 0
        %1533 = vmatpush1.bf16.msra.mxu0 %v1198
        %1534 = vmatprep.subr.bf16.mxu0 0
        %1535 = vmatpush1.bf16.msra.mxu0 %v1197
        %1536 = vmatprep.subr.bf16.mxu0 0
        %1537 = vmatpush1.bf16.msra.mxu0 %v1196
        %1538 = vmatprep.subr.bf16.mxu0 0
        %1539 = vmatpush1.bf16.msra.mxu0 %v1195
        %1540 = vmatprep.subr.bf16.mxu0 0
        %1541 = vmatpush1.bf16.msra.mxu0 %v1194
        %1542 = vmatprep.subr.bf16.mxu0 0
        %1543 = vmatpush1.bf16.msra.mxu0 %v1193
        %1544 = vmatprep.subr.bf16.mxu0 0
        %1545 = vmatpush1.bf16.msra.mxu0 %v1192
        %1546 = vmatprep.subr.bf16.mxu0 0
        %1547 = vmatpush2.bf16.msra.mxu0 %v1207
        %1548 = vmatprep.subr.bf16.mxu0 0
        %1549 = vmatpush2.bf16.msra.mxu0 %v1206
        %1550 = vmatprep.subr.bf16.mxu0 0
        %1551 = vmatpush2.bf16.msra.mxu0 %v1205
        %1552 = vmatprep.subr.bf16.mxu0 0
        %1553 = vmatpush2.bf16.msra.mxu0 %v1204
        %1554 = vmatprep.subr.bf16.mxu0 0
        %1555 = vmatpush2.bf16.msra.mxu0 %v1203
        %1556 = vmatprep.subr.bf16.mxu0 0
        %1557 = vmatpush2.bf16.msra.mxu0 %v1202
        %1558 = vmatprep.subr.bf16.mxu0 0
        %1559 = vmatpush2.bf16.msra.mxu0 %v1201
        %1560 = vmatprep.subr.bf16.mxu0 0
        %1561 = vmatpush2.bf16.msra.mxu0 %v1200
        %1562 = vmatprep.mubr.bf16.mxu0 %v641
        %1563 = vmatmul.mubr.bf16.gmra.mxu0 %v528
        %v1564 = vpop.f32.mrf.mxu0
        %v1565 = vadd.f32 %v1452, %v1564
        %v1566 = vpop.f32.mrf.mxu0
        %v1567 = vpop.f32.mrf.mxu0
        %v1568 = vadd.f32 %v1455, %v1567
        %v1569 = vpop.f32.mrf.mxu0
        %1570 = vmatprep.mubr.bf16.mxu0 %v644
        %1571 = vmatmul.mubr.bf16.gmra.mxu0 %v540
        %v1572 = vpop.f32.mrf.mxu0
        %v1573 = vadd.f32 %v1460, %v1572
        %v1574 = vpop.f32.mrf.mxu0
        %v1575 = vpop.f32.mrf.mxu0
        %v1576 = vadd.f32 %v1463, %v1575
        %v1577 = vpop.f32.mrf.mxu0
        %1578 = vmatprep.mubr.bf16.mxu0 %v647
        %1579 = vmatmul.mubr.bf16.gmra.mxu0 %v552
        %v1580 = vpop.f32.mrf.mxu0
        %v1581 = vadd.f32 %v1468, %v1580
        %v1582 = vpop.f32.mrf.mxu0
        %v1583 = vpop.f32.mrf.mxu0
        %v1584 = vadd.f32 %v1471, %v1583
        %v1585 = vpop.f32.mrf.mxu0
        %1586 = vmatprep.mubr.bf16.mxu0 %v650
        %1587 = vmatmul.mubr.bf16.gmra.mxu0 %v564
        %v1588 = vpop.f32.mrf.mxu0
        %v1589 = vadd.f32 %v1476, %v1588
        %v1590 = vpop.f32.mrf.mxu0
        %v1591 = vpop.f32.mrf.mxu0
        %v1592 = vadd.f32 %v1479, %v1591
        %v1593 = vpop.f32.mrf.mxu0
        %1594 = vmatprep.mubr.bf16.mxu0 %v653
        %1595 = vmatmul.mubr.bf16.gmra.mxu0 %v576
        %v1596 = vpop.f32.mrf.mxu0
        %v1597 = vadd.f32 %v1484, %v1596
        %v1598 = vpop.f32.mrf.mxu0
        %v1599 = vpop.f32.mrf.mxu0
        %v1600 = vadd.f32 %v1487, %v1599
        %v1601 = vpop.f32.mrf.mxu0
        %1602 = vmatprep.mubr.bf16.mxu0 %v656
        %1603 = vmatmul.mubr.bf16.gmra.mxu0 %v588
        %v1604 = vpop.f32.mrf.mxu0
        %v1605 = vadd.f32 %v1492, %v1604
        %v1606 = vpop.f32.mrf.mxu0
        %v1607 = vpop.f32.mrf.mxu0
        %v1608 = vadd.f32 %v1495, %v1607
        %v1609 = vpop.f32.mrf.mxu0
        %1610 = vmatprep.mubr.bf16.mxu0 %v659
        %1611 = vmatmul.mubr.bf16.gmra.mxu0 %v600
        %v1612 = vpop.f32.mrf.mxu0
        %v1613 = vadd.f32 %v1500, %v1612
        %v1614 = vpop.f32.mrf.mxu0
        %v1615 = vpop.f32.mrf.mxu0
        %v1616 = vadd.f32 %v1503, %v1615
        %v1617 = vpop.f32.mrf.mxu0
        %1618 = vmatprep.mubr.bf16.mxu0 %v662
        %1619 = vmatmul.mubr.bf16.gmra.mxu0 %v612
        %v1620 = vpop.f32.mrf.mxu0
        %v1621 = vadd.f32 %v1508, %v1620
        %v1622 = vpop.f32.mrf.mxu0
        %v1623 = vpop.f32.mrf.mxu0
        %v1624 = vadd.f32 %v1511, %v1623
        %v1625 = vpop.f32.mrf.mxu0
        %1626 = vmatprep.mubr.bf16.mxu0 %v665
        %1627 = vmatmul.mubr.bf16.gmra.mxu0 %v624
        %v1628 = vpop.f32.mrf.mxu0
        %v1629 = vadd.f32 %v1516, %v1628
        %v1630 = vpop.f32.mrf.mxu0
        %v1631 = vpop.f32.mrf.mxu0
        %v1632 = vadd.f32 %v1519, %v1631
        %v1633 = vpop.f32.mrf.mxu0
        %1634 = vmatprep.mubr.bf16.mxu0 %v700
        %1635 = vmatmul.mubr.bf16.gmra.mxu0 %v696
        %v1636 = vpop.f32.mrf.mxu0
        %v1637 = vadd.f32 %v1524, %v1636
        %v1638 = vpop.f32.mrf.mxu0
        %v1639 = vpop.f32.mrf.mxu0
        %v1640 = vadd.f32 %v1527, %v1639
        %v1641 = vpop.f32.mrf.mxu0
        %1642 = vdwg.mxu0
        %1643 = vmatprep.subr.bf16.mxu0 0
        %1644 = vmatpush1.bf16.msra.mxu0 %v1215
        %1645 = vmatprep.subr.bf16.mxu0 0
        %1646 = vmatpush1.bf16.msra.mxu0 %v1214
        %1647 = vmatprep.subr.bf16.mxu0 0
        %1648 = vmatpush1.bf16.msra.mxu0 %v1213
        %1649 = vmatprep.subr.bf16.mxu0 0
        %1650 = vmatpush1.bf16.msra.mxu0 %v1212
        %1651 = vmatprep.subr.bf16.mxu0 0
        %1652 = vmatpush1.bf16.msra.mxu0 %v1211
        %1653 = vmatprep.subr.bf16.mxu0 0
        %1654 = vmatpush1.bf16.msra.mxu0 %v1210
        %1655 = vmatprep.subr.bf16.mxu0 0
        %1656 = vmatpush1.bf16.msra.mxu0 %v1209
        %1657 = vmatprep.subr.bf16.mxu0 0
        %1658 = vmatpush1.bf16.msra.mxu0 %v1208
        %1659 = vmatprep.subr.bf16.mxu0 0
        %1660 = vmatpush2.bf16.msra.mxu0 %v1223
        %1661 = vmatprep.subr.bf16.mxu0 0
        %1662 = vmatpush2.bf16.msra.mxu0 %v1222
        %1663 = vmatprep.subr.bf16.mxu0 0
        %1664 = vmatpush2.bf16.msra.mxu0 %v1221
        %1665 = vmatprep.subr.bf16.mxu0 0
        %1666 = vmatpush2.bf16.msra.mxu0 %v1220
        %1667 = vmatprep.subr.bf16.mxu0 0
        %1668 = vmatpush2.bf16.msra.mxu0 %v1219
        %1669 = vmatprep.subr.bf16.mxu0 0
        %1670 = vmatpush2.bf16.msra.mxu0 %v1218
        %1671 = vmatprep.subr.bf16.mxu0 0
        %1672 = vmatpush2.bf16.msra.mxu0 %v1217
        %1673 = vmatprep.subr.bf16.mxu0 0
        %1674 = vmatpush2.bf16.msra.mxu0 %v1216
        %1675 = vmatprep.mubr.bf16.mxu0 %v540
        %1676 = vmatmul.mubr.bf16.gmra.mxu0 %v456
        %v1677 = vpop.f32.mrf.mxu0
        %v1678 = vadd.f32 %v1565, %v1677
        %v1679 = vpop.f32.mrf.mxu0
        %v1680 = vpop.f32.mrf.mxu0
        %v1681 = vadd.f32 %v1568, %v1680
        %v1682 = vpop.f32.mrf.mxu0
        %1683 = vmatprep.mubr.bf16.mxu0 %v552
        %1684 = vmatmul.mubr.bf16.gmra.mxu0 %v457
        %v1685 = vpop.f32.mrf.mxu0
        %v1686 = vadd.f32 %v1573, %v1685
        %v1687 = vpop.f32.mrf.mxu0
        %v1688 = vpop.f32.mrf.mxu0
        %v1689 = vadd.f32 %v1576, %v1688
        %v1690 = vpop.f32.mrf.mxu0
        %1691 = vmatprep.mubr.bf16.mxu0 %v564
        %1692 = vmatmul.mubr.bf16.gmra.mxu0 %v458
        %v1693 = vpop.f32.mrf.mxu0
        %v1694 = vadd.f32 %v1581, %v1693
        %v1695 = vpop.f32.mrf.mxu0
        %v1696 = vpop.f32.mrf.mxu0
        %v1697 = vadd.f32 %v1584, %v1696
        %v1698 = vpop.f32.mrf.mxu0
        %1699 = vmatprep.mubr.bf16.mxu0 %v576
        %1700 = vmatmul.mubr.bf16.gmra.mxu0 %v459
        %v1701 = vpop.f32.mrf.mxu0
        %v1702 = vadd.f32 %v1589, %v1701
        %v1703 = vpop.f32.mrf.mxu0
        %v1704 = vpop.f32.mrf.mxu0
        %v1705 = vadd.f32 %v1592, %v1704
        %v1706 = vpop.f32.mrf.mxu0
        %1707 = vmatprep.mubr.bf16.mxu0 %v588
        %1708 = vmatmul.mubr.bf16.gmra.mxu0 %v460
        %v1709 = vpop.f32.mrf.mxu0
        %v1710 = vadd.f32 %v1597, %v1709
        %v1711 = vpop.f32.mrf.mxu0
        %v1712 = vpop.f32.mrf.mxu0
        %v1713 = vadd.f32 %v1600, %v1712
        %v1714 = vpop.f32.mrf.mxu0
        %1715 = vmatprep.mubr.bf16.mxu0 %v600
        %1716 = vmatmul.mubr.bf16.gmra.mxu0 %v461
        %v1717 = vpop.f32.mrf.mxu0
        %v1718 = vadd.f32 %v1605, %v1717
        %v1719 = vpop.f32.mrf.mxu0
        %v1720 = vpop.f32.mrf.mxu0
        %v1721 = vadd.f32 %v1608, %v1720
        %v1722 = vpop.f32.mrf.mxu0
        %1723 = vmatprep.mubr.bf16.mxu0 %v612
        %1724 = vmatmul.mubr.bf16.gmra.mxu0 %v462
        %v1725 = vpop.f32.mrf.mxu0
        %v1726 = vadd.f32 %v1613, %v1725
        %v1727 = vpop.f32.mrf.mxu0
        %v1728 = vpop.f32.mrf.mxu0
        %v1729 = vadd.f32 %v1616, %v1728
        %v1730 = vpop.f32.mrf.mxu0
        %1731 = vmatprep.mubr.bf16.mxu0 %v624
        %1732 = vmatmul.mubr.bf16.gmra.mxu0 %v463
        %v1733 = vpop.f32.mrf.mxu0
        %v1734 = vadd.f32 %v1621, %v1733
        %v1735 = vpop.f32.mrf.mxu0
        %v1736 = vpop.f32.mrf.mxu0
        %v1737 = vadd.f32 %v1624, %v1736
        %v1738 = vpop.f32.mrf.mxu0
        %1739 = vmatprep.mubr.bf16.mxu0 %v696
        %1740 = vmatmul.mubr.bf16.gmra.mxu0 %v680
        %v1741 = vpop.f32.mrf.mxu0
        %v1742 = vadd.f32 %v1629, %v1741
        %v1743 = vpop.f32.mrf.mxu0
        %v1744 = vpop.f32.mrf.mxu0
        %v1745 = vadd.f32 %v1632, %v1744
        %v1746 = vpop.f32.mrf.mxu0
        %1747 = vmatprep.mubr.bf16.mxu0 %v722
        %1748 = vmatmul.mubr.bf16.gmra.mxu0 %v706
        %v1749 = vpop.f32.mrf.mxu0
        %v1750 = vadd.f32 %v1637, %v1749
        %v1751 = vpop.f32.mrf.mxu0
        %v1752 = vpop.f32.mrf.mxu0
        %v1753 = vadd.f32 %v1640, %v1752
        %v1754 = vpop.f32.mrf.mxu0
        %1755 = vdwg.mxu0
        %1756 = vmatprep.subr.bf16.mxu0 0
        %1757 = vmatpush1.bf16.msra.mxu0 %v1231
        %1758 = vmatprep.subr.bf16.mxu0 0
        %1759 = vmatpush1.bf16.msra.mxu0 %v1230
        %1760 = vmatprep.subr.bf16.mxu0 0
        %1761 = vmatpush1.bf16.msra.mxu0 %v1229
        %1762 = vmatprep.subr.bf16.mxu0 0
        %1763 = vmatpush1.bf16.msra.mxu0 %v1228
        %1764 = vmatprep.subr.bf16.mxu0 0
        %1765 = vmatpush1.bf16.msra.mxu0 %v1227
        %1766 = vmatprep.subr.bf16.mxu0 0
        %1767 = vmatpush1.bf16.msra.mxu0 %v1226
        %1768 = vmatprep.subr.bf16.mxu0 0
        %1769 = vmatpush1.bf16.msra.mxu0 %v1225
        %1770 = vmatprep.subr.bf16.mxu0 0
        %1771 = vmatpush1.bf16.msra.mxu0 %v1224
        %1772 = vmatprep.subr.bf16.mxu0 0
        %1773 = vmatpush2.bf16.msra.mxu0 0
        %1774 = vmatprep.subr.bf16.mxu0 0
        %1775 = vmatpush2.bf16.msra.mxu0 0
        %1776 = vmatprep.subr.bf16.mxu0 0
        %1777 = vmatpush2.bf16.msra.mxu0 0
        %1778 = vmatprep.subr.bf16.mxu0 0
        %1779 = vmatpush2.bf16.msra.mxu0 0
        %1780 = vmatprep.subr.bf16.mxu0 0
        %1781 = vmatpush2.bf16.msra.mxu0 0
        %1782 = vmatprep.subr.bf16.mxu0 0
        %1783 = vmatpush2.bf16.msra.mxu0 0
        %1784 = vmatprep.subr.bf16.mxu0 0
        %1785 = vmatpush2.bf16.msra.mxu0 0
        %1786 = vmatprep.subr.bf16.mxu0 0
        %1787 = vmatpush2.bf16.msra.mxu0 0
        %1788 = vmatprep.mubr.bf16.mxu0 0
        %1789 = vmatmul.mubr.bf16.gmra.mxu0 %v644
        %v1790 = vpop.f32.mrf.mxu0
        %v1791 = vadd.f32 %v1678, %v1790
        %v1792 = vpop.f32.mrf.mxu0
        %v1793 = vpop.f32.mrf.mxu0
        %v1794 = vadd.f32 %v1681, %v1793
        %v1795 = vpop.f32.mrf.mxu0
        %1796 = vmatprep.mubr.bf16.mxu0 0
        %1797 = vmatmul.mubr.bf16.gmra.mxu0 %v647
        %v1798 = vpop.f32.mrf.mxu0
        %v1799 = vadd.f32 %v1686, %v1798
        %v1800 = vpop.f32.mrf.mxu0
        %v1801 = vpop.f32.mrf.mxu0
        %v1802 = vadd.f32 %v1689, %v1801
        %v1803 = vpop.f32.mrf.mxu0
        %1804 = vmatprep.mubr.bf16.mxu0 0
        %1805 = vmatmul.mubr.bf16.gmra.mxu0 %v650
        %v1806 = vpop.f32.mrf.mxu0
        %v1807 = vadd.f32 %v1694, %v1806
        %v1808 = vpop.f32.mrf.mxu0
        %v1809 = vpop.f32.mrf.mxu0
        %v1810 = vadd.f32 %v1697, %v1809
        %v1811 = vpop.f32.mrf.mxu0
        %1812 = vmatprep.mubr.bf16.mxu0 0
        %1813 = vmatmul.mubr.bf16.gmra.mxu0 %v653
        %v1814 = vpop.f32.mrf.mxu0
        %v1815 = vadd.f32 %v1702, %v1814
        %v1816 = vpop.f32.mrf.mxu0
        %v1817 = vpop.f32.mrf.mxu0
        %v1818 = vadd.f32 %v1705, %v1817
        %v1819 = vpop.f32.mrf.mxu0
        %1820 = vmatprep.mubr.bf16.mxu0 0
        %1821 = vmatmul.mubr.bf16.gmra.mxu0 %v656
        %v1822 = vpop.f32.mrf.mxu0
        %v1823 = vadd.f32 %v1710, %v1822
        %v1824 = vpop.f32.mrf.mxu0
        %v1825 = vpop.f32.mrf.mxu0
        %v1826 = vadd.f32 %v1713, %v1825
        %v1827 = vpop.f32.mrf.mxu0
        %1828 = vmatprep.mubr.bf16.mxu0 0
        %1829 = vmatmul.mubr.bf16.gmra.mxu0 %v659
        %v1830 = vpop.f32.mrf.mxu0
        %v1831 = vadd.f32 %v1718, %v1830
        %v1832 = vpop.f32.mrf.mxu0
        %v1833 = vpop.f32.mrf.mxu0
        %v1834 = vadd.f32 %v1721, %v1833
        %v1835 = vpop.f32.mrf.mxu0
        %1836 = vmatprep.mubr.bf16.mxu0 0
        %1837 = vmatmul.mubr.bf16.gmra.mxu0 %v662
        %v1838 = vpop.f32.mrf.mxu0
        %v1839 = vadd.f32 %v1726, %v1838
        %v1840 = vpop.f32.mrf.mxu0
        %v1841 = vpop.f32.mrf.mxu0
        %v1842 = vadd.f32 %v1729, %v1841
        %v1843 = vpop.f32.mrf.mxu0
        %1844 = vmatprep.mubr.bf16.mxu0 0
        %1845 = vmatmul.mubr.bf16.gmra.mxu0 %v665
        %v1846 = vpop.f32.mrf.mxu0
        %v1847 = vadd.f32 %v1734, %v1846
        %v1848 = vpop.f32.mrf.mxu0
        %v1849 = vpop.f32.mrf.mxu0
        %v1850 = vadd.f32 %v1737, %v1849
        %v1851 = vpop.f32.mrf.mxu0
        %1852 = vmatprep.mubr.bf16.mxu0 0
        %1853 = vmatmul.mubr.bf16.gmra.mxu0 %v700
        %v1854 = vpop.f32.mrf.mxu0
        %v1855 = vadd.f32 %v1742, %v1854
        %v1856 = vpop.f32.mrf.mxu0
        %v1857 = vpop.f32.mrf.mxu0
        %v1858 = vadd.f32 %v1745, %v1857
        %v1859 = vpop.f32.mrf.mxu0
        %1860 = vmatprep.mubr.bf16.mxu0 0
        %1861 = vmatmul.mubr.bf16.gmra.mxu0 %v726
        %v1862 = vpop.f32.mrf.mxu0
        %v1863 = vadd.f32 %v1750, %v1862
        %v1864 = vpop.f32.mrf.mxu0
        %v1865 = vpop.f32.mrf.mxu0
        %v1866 = vadd.f32 %v1753, %v1865
        %v1867 = vpop.f32.mrf.mxu0
        %1868 = vdwg.mxu0
        %v1869 = vld [vmem:[%s3] sm:$0x1]
        %v1871 = vlaneseq
        %v1872 = vshrl.u32 %v1871, 7
        %v1873 = vsub.s32 0, %v1872
        %v1874 = vrot.slane %v1869, %v1873
        %v1876 = vmul.f32 %v1791, %v1874
        %v1877 = vmul.f32 %v1794, %v1874
        %v1878 = vmul.f32 %v1799, %v1874
        %v1879 = vmul.f32 %v1802, %v1874
        %v1880 = vmul.f32 %v1807, %v1874
        %v1881 = vmul.f32 %v1810, %v1874
        %v1882 = vmul.f32 %v1815, %v1874
        %v1883 = vmul.f32 %v1818, %v1874
        %v1884 = vmul.f32 %v1823, %v1874
        %v1885 = vmul.f32 %v1826, %v1874
        %v1886 = vmul.f32 %v1831, %v1874
        %v1887 = vmul.f32 %v1834, %v1874
        %v1888 = vmul.f32 %v1839, %v1874
        %v1889 = vmul.f32 %v1842, %v1874
        %v1890 = vmul.f32 %v1847, %v1874
        %v1891 = vmul.f32 %v1850, %v1874
        %v1892 = vmul.f32 %v1855, %v1874
        %v1893 = vmul.f32 %v1858, %v1874
        %v1894 = vmul.f32 %v1863, %v1874
        %v1895 = vmul.f32 %v1866, %v1874
        %v1896 = vld [vmem:[%s4] sm:$0x1]
        %v1898 = vlaneseq
        %v1899 = vshrl.u32 %v1898, 7
        %v1900 = vsub.s32 0, %v1899
        %v1901 = vrot.slane %v1896, %v1900
        %v1903 = vadd.f32 %v1876, %v1901
        %v1904 = vadd.f32 %v1877, %v1901
        %v1905 = vadd.f32 %v1878, %v1901
        %v1906 = vadd.f32 %v1879, %v1901
        %v1907 = vadd.f32 %v1880, %v1901
        %v1908 = vadd.f32 %v1881, %v1901
        %v1909 = vadd.f32 %v1882, %v1901
        %v1910 = vadd.f32 %v1883, %v1901
        %v1911 = vadd.f32 %v1884, %v1901
        %v1912 = vadd.f32 %v1885, %v1901
        %v1913 = vadd.f32 %v1886, %v1901
        %v1914 = vadd.f32 %v1887, %v1901
        %v1915 = vadd.f32 %v1888, %v1901
        %v1916 = vadd.f32 %v1889, %v1901
        %v1917 = vadd.f32 %v1890, %v1901
        %v1918 = vadd.f32 %v1891, %v1901
        %v1919 = vadd.f32 %v1892, %v1901
        %v1920 = vadd.f32 %v1893, %v1901
        %v1921 = vadd.f32 %v1894, %v1901
        %v1922 = vadd.f32 %v1895, %v1901
        %v1923 = vmax.f32 %v1903, 0.0
        %v1924 = vmax.f32 %v1904, 0.0
        %v1925 = vmax.f32 %v1905, 0.0
        %v1926 = vmax.f32 %v1906, 0.0
        %v1927 = vmax.f32 %v1907, 0.0
        %v1928 = vmax.f32 %v1908, 0.0
        %v1929 = vmax.f32 %v1909, 0.0
        %v1930 = vmax.f32 %v1910, 0.0
        %v1931 = vmax.f32 %v1911, 0.0
        %v1932 = vmax.f32 %v1912, 0.0
        %v1933 = vmax.f32 %v1913, 0.0
        %v1934 = vmax.f32 %v1914, 0.0
        %v1935 = vmax.f32 %v1915, 0.0
        %v1936 = vmax.f32 %v1916, 0.0
        %v1937 = vmax.f32 %v1917, 0.0
        %v1938 = vmax.f32 %v1918, 0.0
        %v1939 = vmax.f32 %v1919, 0.0
        %v1940 = vmax.f32 %v1920, 0.0
        %v1941 = vmax.f32 %v1921, 0.0
        %v1942 = vmax.f32 %v1922, 0.0
        %s1943 = ssub.s32 %s374, 1
        %v1944 = vstv %s1943
        %v1945 = vadd.s32 %v1944, 1
        %v1946 = vadd.s32 %v1944, 2
        %v1947 = vadd.s32 %v1944, 3
        %v1948 = vadd.s32 %v1944, 4
        %v1949 = vadd.s32 %v1944, 5
        %v1950 = vadd.s32 %v1944, 6
        %v1951 = vadd.s32 %v1944, 7
        %v1952 = vadd.s32 %v1944, 8
        %v1953 = vadd.s32 %v1944, 9
        %vm1954 = vcmp.ge.s32.totalorder %v1944, 0
        %vm1955 = vcmp.ge.s32.totalorder %v1945, 0
        %vm1956 = vcmp.ge.s32.totalorder %v1946, 0
        %vm1957 = vcmp.ge.s32.totalorder %v1947, 0
        %vm1958 = vcmp.ge.s32.totalorder %v1948, 0
        %vm1959 = vcmp.ge.s32.totalorder %v1949, 0
        %vm1960 = vcmp.ge.s32.totalorder %v1950, 0
        %vm1961 = vcmp.ge.s32.totalorder %v1951, 0
        %vm1962 = vcmp.ge.s32.totalorder %v1952, 0
        %vm1963 = vcmp.ge.s32.totalorder %v1953, 0
        %vm1964 = vcmp.lt.s32.totalorder %v1944, 16
        %vm1965 = vcmp.lt.s32.totalorder %v1945, 16
        %vm1966 = vcmp.lt.s32.totalorder %v1946, 16
        %vm1967 = vcmp.lt.s32.totalorder %v1947, 16
        %vm1968 = vcmp.lt.s32.totalorder %v1948, 16
        %vm1969 = vcmp.lt.s32.totalorder %v1949, 16
        %vm1970 = vcmp.lt.s32.totalorder %v1950, 16
        %vm1971 = vcmp.lt.s32.totalorder %v1951, 16
        %vm1972 = vcmp.lt.s32.totalorder %v1952, 16
        %vm1973 = vcmp.lt.s32.totalorder %v1953, 16
        %vm1974 = vmand %vm1954, %vm1964
        %vm1975 = vmand %vm1955, %vm1965
        %vm1976 = vmand %vm1956, %vm1966
        %vm1977 = vmand %vm1957, %vm1967
        %vm1978 = vmand %vm1958, %vm1968
        %vm1979 = vmand %vm1959, %vm1969
        %vm1980 = vmand %vm1960, %vm1970
        %vm1981 = vmand %vm1961, %vm1971
        %vm1982 = vmand %vm1962, %vm1972
        %vm1983 = vmand %vm1963, %vm1973
        %v1984 = vsel %vm1974, 1, 0
        %v1985 = vsel %vm1975, 1, 0
        %v1986 = vsel %vm1976, 1, 0
        %v1987 = vsel %vm1977, 1, 0
        %v1988 = vsel %vm1978, 1, 0
        %v1989 = vsel %vm1979, 1, 0
        %v1990 = vsel %vm1980, 1, 0
        %v1991 = vsel %vm1981, 1, 0
        %v1992 = vsel %vm1982, 1, 0
        %v1993 = vsel %vm1983, 1, 0
        %vm1994 = vcmp.eq.s32.totalorder %v1984, 1
        %vm1995 = vcmp.eq.s32.totalorder %v1985, 1
        %vm1996 = vcmp.eq.s32.totalorder %v1986, 1
        %vm1997 = vcmp.eq.s32.totalorder %v1987, 1
        %vm1998 = vcmp.eq.s32.totalorder %v1988, 1
        %vm1999 = vcmp.eq.s32.totalorder %v1989, 1
        %vm2000 = vcmp.eq.s32.totalorder %v1990, 1
        %vm2001 = vcmp.eq.s32.totalorder %v1991, 1
        %vm2002 = vcmp.eq.s32.totalorder %v1992, 1
        %vm2003 = vcmp.eq.s32.totalorder %v1993, 1
        %v2004 = vsel %vm1994, %v1923, 0.0
        %v2005 = vsel %vm1994, %v1924, 0.0
        %v2006 = vsel %vm1995, %v1925, 0.0
        %v2007 = vsel %vm1995, %v1926, 0.0
        %v2008 = vsel %vm1996, %v1927, 0.0
        %v2009 = vsel %vm1996, %v1928, 0.0
        %v2010 = vsel %vm1997, %v1929, 0.0
        %v2011 = vsel %vm1997, %v1930, 0.0
        %v2012 = vsel %vm1998, %v1931, 0.0
        %v2013 = vsel %vm1998, %v1932, 0.0
        %v2014 = vsel %vm1999, %v1933, 0.0
        %v2015 = vsel %vm1999, %v1934, 0.0
        %v2016 = vsel %vm2000, %v1935, 0.0
        %v2017 = vsel %vm2000, %v1936, 0.0
        %v2018 = vsel %vm2001, %v1937, 0.0
        %v2019 = vsel %vm2001, %v1938, 0.0
        %v2020 = vsel %vm2002, %v1939, 0.0
        %v2021 = vsel %vm2002, %v1940, 0.0
        %v2022 = vsel %vm2003, %v1941, 0.0
        %v2023 = vsel %vm2003, %v1942, 0.0
        %v2024 = vpack.c.bf16 %v2005, %v2004
        %v2025 = vpack.c.bf16 %v2007, %v2006
        %v2026 = vpack.c.bf16 %v2009, %v2008
        %v2027 = vpack.c.bf16 %v2011, %v2010
        %v2028 = vpack.c.bf16 %v2013, %v2012
        %v2029 = vpack.c.bf16 %v2015, %v2014
        %v2030 = vpack.c.bf16 %v2017, %v2016
        %v2031 = vpack.c.bf16 %v2019, %v2018
        %v2032 = vpack.c.bf16 %v2021, %v2020
        %v2033 = vpack.c.bf16 %v2023, %v2022
        %v2035 = vshrl.u32 %v2024, 16
        %v2037 = vrot.slane %v2035, 7
        %v2038 = vshll.u32 %v2024, 16
        %v2040 = vor.u32 %v2037, %v2038
        %v2042 = vshrl.u32 %v2025, 16
        %v2044 = vrot.slane %v2042, 7
        %v2045 = vshll.u32 %v2025, 16
        %v2047 = vor.u32 %v2044, %v2045
        %v2049 = vshrl.u32 %v2026, 16
        %v2051 = vrot.slane %v2049, 7
        %v2052 = vshll.u32 %v2026, 16
        %v2054 = vor.u32 %v2051, %v2052
        %v2056 = vshrl.u32 %v2027, 16
        %v2058 = vrot.slane %v2056, 7
        %v2059 = vshll.u32 %v2027, 16
        %v2061 = vor.u32 %v2058, %v2059
        %v2063 = vshrl.u32 %v2028, 16
        %v2065 = vrot.slane %v2063, 7
        %v2066 = vshll.u32 %v2028, 16
        %v2068 = vor.u32 %v2065, %v2066
        %v2070 = vshrl.u32 %v2029, 16
        %v2072 = vrot.slane %v2070, 7
        %v2073 = vshll.u32 %v2029, 16
        %v2075 = vor.u32 %v2072, %v2073
        %v2077 = vshrl.u32 %v2030, 16
        %v2079 = vrot.slane %v2077, 7
        %v2080 = vshll.u32 %v2030, 16
        %v2082 = vor.u32 %v2079, %v2080
        %v2084 = vshrl.u32 %v2031, 16
        %v2086 = vrot.slane %v2084, 7
        %v2087 = vshll.u32 %v2031, 16
        %v2089 = vor.u32 %v2086, %v2087
        %v2091 = vshrl.u32 %v2032, 16
        %v2093 = vrot.slane %v2091, 7
        %v2094 = vshll.u32 %v2032, 16
        %v2096 = vor.u32 %v2093, %v2094
        %v2098 = vshrl.u32 %v2033, 16
        %v2100 = vrot.slane %v2098, 7
        %v2101 = vshll.u32 %v2033, 16
        %v2103 = vor.u32 %v2100, %v2101
        %vm2124 = vcmask 1040384
        %vm2125 = vsmask.f32 256
        %vm2126 = vmand %vm2124, %vm2125
        %v2127 = vsel %vm2126, 0, %v2040
        %v2128 = vsel %vm2126, 0, %v2047
        %v2129 = vsel %vm2126, 0, %v2054
        %v2130 = vsel %vm2126, 0, %v2061
        %v2131 = vsel %vm2126, 0, %v2068
        %v2132 = vsel %vm2126, 0, %v2075
        %v2133 = vsel %vm2126, 0, %v2082
        %v2134 = vsel %vm2126, 0, %v2089
        %v2135 = vsel %vm2126, 0, %v2096
        %v2136 = vsel %vm2126, 0, %v2103
        %v2137 = vsel %vm2126, %v2037, 0
        %v2138 = vsel %vm2126, %v2044, 0
        %v2139 = vsel %vm2126, %v2051, 0
        %v2140 = vsel %vm2126, %v2058, 0
        %v2141 = vsel %vm2126, %v2065, 0
        %v2142 = vsel %vm2126, %v2072, 0
        %v2143 = vsel %vm2126, %v2079, 0
        %v2144 = vsel %vm2126, %v2086, 0
        %v2145 = vsel %vm2126, %v2093, 0
        %v2146 = vsel %vm2126, %v2100, 0
        %v2148 = vshrl.u32 %v2127, 16
        %v2150 = vshll.u32 %v2127, 16
        %v2152 = vrot.slane %v2150, 1
        %v2153 = vor.u32 %v2148, %v2152
        %v2155 = vshll.u32 %v2137, 16
        %v2157 = vrot.slane %v2155, 1
        %v2158 = vsel %vm504, %v2153, %v2157
        %v2160 = vshrl.u32 %v2128, 16
        %v2162 = vshll.u32 %v2128, 16
        %v2164 = vrot.slane %v2162, 1
        %v2165 = vor.u32 %v2160, %v2164
        %v2167 = vshll.u32 %v2138, 16
        %v2169 = vrot.slane %v2167, 1
        %v2170 = vsel %vm504, %v2165, %v2169
        %v2172 = vshrl.u32 %v2129, 16
        %v2174 = vshll.u32 %v2129, 16
        %v2176 = vrot.slane %v2174, 1
        %v2177 = vor.u32 %v2172, %v2176
        %v2179 = vshll.u32 %v2139, 16
        %v2181 = vrot.slane %v2179, 1
        %v2182 = vsel %vm504, %v2177, %v2181
        %v2184 = vshrl.u32 %v2130, 16
        %v2186 = vshll.u32 %v2130, 16
        %v2188 = vrot.slane %v2186, 1
        %v2189 = vor.u32 %v2184, %v2188
        %v2191 = vshll.u32 %v2140, 16
        %v2193 = vrot.slane %v2191, 1
        %v2194 = vsel %vm504, %v2189, %v2193
        %v2196 = vshrl.u32 %v2131, 16
        %v2198 = vshll.u32 %v2131, 16
        %v2200 = vrot.slane %v2198, 1
        %v2201 = vor.u32 %v2196, %v2200
        %v2203 = vshll.u32 %v2141, 16
        %v2205 = vrot.slane %v2203, 1
        %v2206 = vsel %vm504, %v2201, %v2205
        %v2208 = vshrl.u32 %v2132, 16
        %v2210 = vshll.u32 %v2132, 16
        %v2212 = vrot.slane %v2210, 1
        %v2213 = vor.u32 %v2208, %v2212
        %v2215 = vshll.u32 %v2142, 16
        %v2217 = vrot.slane %v2215, 1
        %v2218 = vsel %vm504, %v2213, %v2217
        %v2220 = vshrl.u32 %v2133, 16
        %v2222 = vshll.u32 %v2133, 16
        %v2224 = vrot.slane %v2222, 1
        %v2225 = vor.u32 %v2220, %v2224
        %v2227 = vshll.u32 %v2143, 16
        %v2229 = vrot.slane %v2227, 1
        %v2230 = vsel %vm504, %v2225, %v2229
        %v2232 = vshrl.u32 %v2134, 16
        %v2234 = vshll.u32 %v2134, 16
        %v2236 = vrot.slane %v2234, 1
        %v2237 = vor.u32 %v2232, %v2236
        %v2239 = vshll.u32 %v2144, 16
        %v2241 = vrot.slane %v2239, 1
        %v2242 = vsel %vm504, %v2237, %v2241
        %v2267 = vrot.slane %v2127, 1
        %v2268 = vrot.slane %v2137, 1
        %v2269 = vsel %vm635, %v2267, %v2268
        %v2270 = vrot.slane %v2128, 1
        %v2271 = vrot.slane %v2138, 1
        %v2272 = vsel %vm635, %v2270, %v2271
        %v2273 = vrot.slane %v2129, 1
        %v2274 = vrot.slane %v2139, 1
        %v2275 = vsel %vm635, %v2273, %v2274
        %v2276 = vrot.slane %v2130, 1
        %v2277 = vrot.slane %v2140, 1
        %v2278 = vsel %vm635, %v2276, %v2277
        %v2279 = vrot.slane %v2131, 1
        %v2280 = vrot.slane %v2141, 1
        %v2281 = vsel %vm635, %v2279, %v2280
        %v2282 = vrot.slane %v2132, 1
        %v2283 = vrot.slane %v2142, 1
        %v2284 = vsel %vm635, %v2282, %v2283
        %v2285 = vrot.slane %v2133, 1
        %v2286 = vrot.slane %v2143, 1
        %v2287 = vsel %vm635, %v2285, %v2286
        %v2288 = vrot.slane %v2134, 1
        %v2289 = vrot.slane %v2144, 1
        %v2290 = vsel %vm635, %v2288, %v2289
        %v2300 = vshrl.u32 %v2135, 16
        %v2302 = vshll.u32 %v2135, 16
        %v2304 = vrot.slane %v2302, 1
        %v2305 = vor.u32 %v2300, %v2304
        %v2307 = vshll.u32 %v2145, 16
        %v2309 = vrot.slane %v2307, 1
        %v2310 = vsel %vm504, %v2305, %v2309
        %v2314 = vrot.slane %v2135, 1
        %v2315 = vrot.slane %v2145, 1
        %v2316 = vsel %vm635, %v2314, %v2315
        %v2319 = vshrl.u32 %v2136, 16
        %v2321 = vshll.u32 %v2136, 16
        %v2323 = vrot.slane %v2321, 1
        %v2324 = vor.u32 %v2319, %v2323
        %v2326 = vshll.u32 %v2146, 16
        %v2328 = vrot.slane %v2326, 1
        %v2329 = vsel %vm504, %v2324, %v2328
        %v2333 = vrot.slane %v2136, 1
        %v2334 = vrot.slane %v2146, 1
        %v2335 = vsel %vm635, %v2333, %v2334
        %v2337 = vld [vmem:[#allocation2] sm:$0xf]
        %v2338 = vld [vmem:[#allocation2 + $0x4] sm:$0xf]
        %v2339 = vld [vmem:[#allocation2 + $0x8] sm:$0xf]
        %v2340 = vld [vmem:[#allocation2 + $0xc] sm:$0xf]
        %v2341 = vld [vmem:[#allocation2 + $0x10] sm:$0xf]
        %v2342 = vld [vmem:[#allocation2 + $0x14] sm:$0xf]
        %v2343 = vld [vmem:[#allocation2 + $0x18] sm:$0xf]
        %v2344 = vld [vmem:[#allocation2 + $0x1c] sm:$0xf]
        %v2345 = vld [vmem:[#allocation2 + $0x20] sm:$0xf]
        %v2346 = vld [vmem:[#allocation2 + $0x24] sm:$0xf]
        %v2347 = vld [vmem:[#allocation2 + $0x28] sm:$0xf]
        %v2348 = vld [vmem:[#allocation2 + $0x2c] sm:$0xf]
        %v2349 = vld [vmem:[#allocation2 + $0x30] sm:$0xf]
        %v2350 = vld [vmem:[#allocation2 + $0x34] sm:$0xf]
        %v2351 = vld [vmem:[#allocation2 + $0x38] sm:$0xf]
        %v2352 = vld [vmem:[#allocation2 + $0x3c] sm:$0xf]
        %v2353 = vld [vmem:[#allocation2 + $0x40] sm:$0xf]
        %v2354 = vld [vmem:[#allocation2 + $0x44] sm:$0xf]
        %v2355 = vld [vmem:[#allocation2 + $0x48] sm:$0xf]
        %v2356 = vld [vmem:[#allocation2 + $0x4c] sm:$0xf]
        %v2357 = vld [vmem:[#allocation2 + $0x50] sm:$0xf]
        %v2358 = vld [vmem:[#allocation2 + $0x54] sm:$0xf]
        %v2359 = vld [vmem:[#allocation2 + $0x58] sm:$0xf]
        %v2360 = vld [vmem:[#allocation2 + $0x5c] sm:$0xf]
        %v2361 = vld [vmem:[#allocation2 + $0x60] sm:$0xf]
        %v2362 = vld [vmem:[#allocation2 + $0x64] sm:$0xf]
        %v2363 = vld [vmem:[#allocation2 + $0x68] sm:$0xf]
        %v2364 = vld [vmem:[#allocation2 + $0x6c] sm:$0xf]
        %v2365 = vld [vmem:[#allocation2 + $0x70] sm:$0xf]
        %v2366 = vld [vmem:[#allocation2 + $0x74] sm:$0xf]
        %v2367 = vld [vmem:[#allocation2 + $0x78] sm:$0xf]
        %v2368 = vld [vmem:[#allocation2 + $0x7c] sm:$0xf]
        %v2369 = vld [vmem:[#allocation2 + $0x80] sm:$0xf]
        %v2370 = vld [vmem:[#allocation2 + $0x84] sm:$0xf]
        %v2371 = vld [vmem:[#allocation2 + $0x88] sm:$0xf]
        %v2372 = vld [vmem:[#allocation2 + $0x8c] sm:$0xf]
        %v2373 = vld [vmem:[#allocation2 + $0x90] sm:$0xf]
        %v2374 = vld [vmem:[#allocation2 + $0x94] sm:$0xf]
        %v2375 = vld [vmem:[#allocation2 + $0x98] sm:$0xf]
        %v2376 = vld [vmem:[#allocation2 + $0x9c] sm:$0xf]
        %v2377 = vld [vmem:[#allocation2 + $0xa0] sm:$0xf]
        %v2378 = vld [vmem:[#allocation2 + $0xa4] sm:$0xf]
        %v2379 = vld [vmem:[#allocation2 + $0xa8] sm:$0xf]
        %v2380 = vld [vmem:[#allocation2 + $0xac] sm:$0xf]
        %v2381 = vld [vmem:[#allocation2 + $0xb0] sm:$0xf]
        %v2382 = vld [vmem:[#allocation2 + $0xb4] sm:$0xf]
        %v2383 = vld [vmem:[#allocation2 + $0xb8] sm:$0xf]
        %v2384 = vld [vmem:[#allocation2 + $0xbc] sm:$0xf]
        %v2385 = vld [vmem:[#allocation2 + $0xc0] sm:$0xf]
        %v2386 = vld [vmem:[#allocation2 + $0xc4] sm:$0xf]
        %v2387 = vld [vmem:[#allocation2 + $0xc8] sm:$0xf]
        %v2388 = vld [vmem:[#allocation2 + $0xcc] sm:$0xf]
        %v2389 = vld [vmem:[#allocation2 + $0xd0] sm:$0xf]
        %v2390 = vld [vmem:[#allocation2 + $0xd4] sm:$0xf]
        %v2391 = vld [vmem:[#allocation2 + $0xd8] sm:$0xf]
        %v2392 = vld [vmem:[#allocation2 + $0xdc] sm:$0xf]
        %v2393 = vld [vmem:[#allocation2 + $0xe0] sm:$0xf]
        %v2394 = vld [vmem:[#allocation2 + $0xe4] sm:$0xf]
        %v2395 = vld [vmem:[#allocation2 + $0xe8] sm:$0xf]
        %v2396 = vld [vmem:[#allocation2 + $0xec] sm:$0xf]
        %v2397 = vld [vmem:[#allocation2 + $0xf0] sm:$0xf]
        %v2398 = vld [vmem:[#allocation2 + $0xf4] sm:$0xf]
        %v2399 = vld [vmem:[#allocation2 + $0xf8] sm:$0xf]
        %v2400 = vld [vmem:[#allocation2 + $0xfc] sm:$0xf]
        %v2401 = vld [vmem:[#allocation2 + $0x100] sm:$0xf]
        %v2402 = vld [vmem:[#allocation2 + $0x104] sm:$0xf]
        %v2403 = vld [vmem:[#allocation2 + $0x108] sm:$0xf]
        %v2404 = vld [vmem:[#allocation2 + $0x10c] sm:$0xf]
        %v2405 = vld [vmem:[#allocation2 + $0x110] sm:$0xf]
        %v2406 = vld [vmem:[#allocation2 + $0x114] sm:$0xf]
        %v2407 = vld [vmem:[#allocation2 + $0x118] sm:$0xf]
        %v2408 = vld [vmem:[#allocation2 + $0x11c] sm:$0xf]
        %v2409 = vld [vmem:[#allocation2 + $0x120] sm:$0xf]
        %v2410 = vld [vmem:[#allocation2 + $0x124] sm:$0xf]
        %v2411 = vld [vmem:[#allocation2 + $0x128] sm:$0xf]
        %v2412 = vld [vmem:[#allocation2 + $0x12c] sm:$0xf]
        %v2413 = vld [vmem:[#allocation2 + $0x130] sm:$0xf]
        %v2414 = vld [vmem:[#allocation2 + $0x134] sm:$0xf]
        %v2415 = vld [vmem:[#allocation2 + $0x138] sm:$0xf]
        %v2416 = vld [vmem:[#allocation2 + $0x13c] sm:$0xf]
        %v2417 = vld [vmem:[#allocation2 + $0x140] sm:$0xf]
        %v2418 = vld [vmem:[#allocation2 + $0x144] sm:$0xf]
        %v2419 = vld [vmem:[#allocation2 + $0x148] sm:$0xf]
        %v2420 = vld [vmem:[#allocation2 + $0x14c] sm:$0xf]
        %v2421 = vld [vmem:[#allocation2 + $0x150] sm:$0xf]
        %v2422 = vld [vmem:[#allocation2 + $0x154] sm:$0xf]
        %v2423 = vld [vmem:[#allocation2 + $0x158] sm:$0xf]
        %v2424 = vld [vmem:[#allocation2 + $0x15c] sm:$0xf]
        %v2425 = vld [vmem:[#allocation2 + $0x160] sm:$0xf]
        %v2426 = vld [vmem:[#allocation2 + $0x164] sm:$0xf]
        %v2427 = vld [vmem:[#allocation2 + $0x168] sm:$0xf]
        %v2428 = vld [vmem:[#allocation2 + $0x16c] sm:$0xf]
        %v2429 = vld [vmem:[#allocation2 + $0x170] sm:$0xf]
        %v2430 = vld [vmem:[#allocation2 + $0x174] sm:$0xf]
        %v2431 = vld [vmem:[#allocation2 + $0x178] sm:$0xf]
        %v2432 = vld [vmem:[#allocation2 + $0x17c] sm:$0xf]
        %v2433 = vld [vmem:[#allocation2 + $0x180] sm:$0xf]
        %v2434 = vld [vmem:[#allocation2 + $0x184] sm:$0xf]
        %v2435 = vld [vmem:[#allocation2 + $0x188] sm:$0xf]
        %v2436 = vld [vmem:[#allocation2 + $0x18c] sm:$0xf]
        %v2437 = vld [vmem:[#allocation2 + $0x190] sm:$0xf]
        %v2438 = vld [vmem:[#allocation2 + $0x194] sm:$0xf]
        %v2439 = vld [vmem:[#allocation2 + $0x198] sm:$0xf]
        %v2440 = vld [vmem:[#allocation2 + $0x19c] sm:$0xf]
        %v2441 = vld [vmem:[#allocation2 + $0x1a0] sm:$0xf]
        %v2442 = vld [vmem:[#allocation2 + $0x1a4] sm:$0xf]
        %v2443 = vld [vmem:[#allocation2 + $0x1a8] sm:$0xf]
        %v2444 = vld [vmem:[#allocation2 + $0x1ac] sm:$0xf]
        %v2445 = vld [vmem:[#allocation2 + $0x1b0] sm:$0xf]
        %v2446 = vld [vmem:[#allocation2 + $0x1b4] sm:$0xf]
        %v2447 = vld [vmem:[#allocation2 + $0x1b8] sm:$0xf]
        %v2448 = vld [vmem:[#allocation2 + $0x1bc] sm:$0xf]
        %v2449 = vld [vmem:[#allocation2 + $0x1c0] sm:$0xf]
        %v2450 = vld [vmem:[#allocation2 + $0x1c4] sm:$0xf]
        %v2451 = vld [vmem:[#allocation2 + $0x1c8] sm:$0xf]
        %v2452 = vld [vmem:[#allocation2 + $0x1cc] sm:$0xf]
        %v2453 = vld [vmem:[#allocation2 + $0x1d0] sm:$0xf]
        %v2454 = vld [vmem:[#allocation2 + $0x1d4] sm:$0xf]
        %v2455 = vld [vmem:[#allocation2 + $0x1d8] sm:$0xf]
        %v2456 = vld [vmem:[#allocation2 + $0x1dc] sm:$0xf]
        %v2457 = vld [vmem:[#allocation2 + $0x1e0] sm:$0xf]
        %v2458 = vld [vmem:[#allocation2 + $0x1e4] sm:$0xf]
        %v2459 = vld [vmem:[#allocation2 + $0x1e8] sm:$0xf]
        %v2460 = vld [vmem:[#allocation2 + $0x1ec] sm:$0xf]
        %v2461 = vld [vmem:[#allocation2 + $0x1f0] sm:$0xf]
        %v2462 = vld [vmem:[#allocation2 + $0x1f4] sm:$0xf]
        %v2463 = vld [vmem:[#allocation2 + $0x1f8] sm:$0xf]
        %v2464 = vld [vmem:[#allocation2 + $0x1fc] sm:$0xf]
        %v2465 = vld [vmem:[#allocation2 + $0x200] sm:$0xf]
        %v2466 = vld [vmem:[#allocation2 + $0x204] sm:$0xf]
        %v2467 = vld [vmem:[#allocation2 + $0x208] sm:$0xf]
        %v2468 = vld [vmem:[#allocation2 + $0x20c] sm:$0xf]
        %v2469 = vld [vmem:[#allocation2 + $0x210] sm:$0xf]
        %v2470 = vld [vmem:[#allocation2 + $0x214] sm:$0xf]
        %v2471 = vld [vmem:[#allocation2 + $0x218] sm:$0xf]
        %v2472 = vld [vmem:[#allocation2 + $0x21c] sm:$0xf]
        %v2473 = vld [vmem:[#allocation2 + $0x220] sm:$0xf]
        %v2474 = vld [vmem:[#allocation2 + $0x224] sm:$0xf]
        %v2475 = vld [vmem:[#allocation2 + $0x228] sm:$0xf]
        %v2476 = vld [vmem:[#allocation2 + $0x22c] sm:$0xf]
        %v2477 = vld [vmem:[#allocation2 + $0x230] sm:$0xf]
        %v2478 = vld [vmem:[#allocation2 + $0x234] sm:$0xf]
        %v2479 = vld [vmem:[#allocation2 + $0x238] sm:$0xf]
        %v2480 = vld [vmem:[#allocation2 + $0x23c] sm:$0xf]
        %v2625 = vunpack.c.l.b16 %v2337
        %v2626 = vunpack.c.l.b16 %v2338
        %v2627 = vunpack.c.l.b16 %v2339
        %v2628 = vunpack.c.l.b16 %v2340
        %v2629 = vunpack.c.l.b16 %v2341
        %v2630 = vunpack.c.l.b16 %v2342
        %v2631 = vunpack.c.l.b16 %v2343
        %v2632 = vunpack.c.l.b16 %v2344
        %v2633 = vunpack.c.l.b16 %v2345
        %v2634 = vunpack.c.l.b16 %v2346
        %v2635 = vunpack.c.l.b16 %v2347
        %v2636 = vunpack.c.l.b16 %v2348
        %v2637 = vunpack.c.l.b16 %v2349
        %v2638 = vunpack.c.l.b16 %v2350
        %v2639 = vunpack.c.l.b16 %v2351
        %v2640 = vunpack.c.l.b16 %v2352
        %v2641 = vunpack.c.l.b16 %v2353
        %v2642 = vunpack.c.l.b16 %v2354
        %v2643 = vunpack.c.l.b16 %v2355
        %v2644 = vunpack.c.l.b16 %v2356
        %v2645 = vunpack.c.l.b16 %v2357
        %v2646 = vunpack.c.l.b16 %v2358
        %v2647 = vunpack.c.l.b16 %v2359
        %v2648 = vunpack.c.l.b16 %v2360
        %v2649 = vunpack.c.l.b16 %v2361
        %v2650 = vunpack.c.l.b16 %v2362
        %v2651 = vunpack.c.l.b16 %v2363
        %v2652 = vunpack.c.l.b16 %v2364
        %v2653 = vunpack.c.l.b16 %v2365
        %v2654 = vunpack.c.l.b16 %v2366
        %v2655 = vunpack.c.l.b16 %v2367
        %v2656 = vunpack.c.l.b16 %v2368
        %v2657 = vunpack.c.l.b16 %v2369
        %v2658 = vunpack.c.l.b16 %v2370
        %v2659 = vunpack.c.l.b16 %v2371
        %v2660 = vunpack.c.l.b16 %v2372
        %v2661 = vunpack.c.l.b16 %v2373
        %v2662 = vunpack.c.l.b16 %v2374
        %v2663 = vunpack.c.l.b16 %v2375
        %v2664 = vunpack.c.l.b16 %v2376
        %v2665 = vunpack.c.l.b16 %v2377
        %v2666 = vunpack.c.l.b16 %v2378
        %v2667 = vunpack.c.l.b16 %v2379
        %v2668 = vunpack.c.l.b16 %v2380
        %v2669 = vunpack.c.l.b16 %v2381
        %v2670 = vunpack.c.l.b16 %v2382
        %v2671 = vunpack.c.l.b16 %v2383
        %v2672 = vunpack.c.l.b16 %v2384
        %v2673 = vunpack.c.l.b16 %v2385
        %v2674 = vunpack.c.l.b16 %v2386
        %v2675 = vunpack.c.l.b16 %v2387
        %v2676 = vunpack.c.l.b16 %v2388
        %v2677 = vunpack.c.l.b16 %v2389
        %v2678 = vunpack.c.l.b16 %v2390
        %v2679 = vunpack.c.l.b16 %v2391
        %v2680 = vunpack.c.l.b16 %v2392
        %v2681 = vunpack.c.l.b16 %v2393
        %v2682 = vunpack.c.l.b16 %v2394
        %v2683 = vunpack.c.l.b16 %v2395
        %v2684 = vunpack.c.l.b16 %v2396
        %v2685 = vunpack.c.l.b16 %v2397
        %v2686 = vunpack.c.l.b16 %v2398
        %v2687 = vunpack.c.l.b16 %v2399
        %v2688 = vunpack.c.l.b16 %v2400
        %v2689 = vunpack.c.l.b16 %v2401
        %v2690 = vunpack.c.l.b16 %v2402
        %v2691 = vunpack.c.l.b16 %v2403
        %v2692 = vunpack.c.l.b16 %v2404
        %v2693 = vunpack.c.l.b16 %v2405
        %v2694 = vunpack.c.l.b16 %v2406
        %v2695 = vunpack.c.l.b16 %v2407
        %v2696 = vunpack.c.l.b16 %v2408
        %v2697 = vunpack.c.l.b16 %v2409
        %v2698 = vunpack.c.l.b16 %v2410
        %v2699 = vunpack.c.l.b16 %v2411
        %v2700 = vunpack.c.l.b16 %v2412
        %v2701 = vunpack.c.l.b16 %v2413
        %v2702 = vunpack.c.l.b16 %v2414
        %v2703 = vunpack.c.l.b16 %v2415
        %v2704 = vunpack.c.l.b16 %v2416
        %v2705 = vunpack.c.l.b16 %v2417
        %v2706 = vunpack.c.l.b16 %v2418
        %v2707 = vunpack.c.l.b16 %v2419
        %v2708 = vunpack.c.l.b16 %v2420
        %v2709 = vunpack.c.l.b16 %v2421
        %v2710 = vunpack.c.l.b16 %v2422
        %v2711 = vunpack.c.l.b16 %v2423
        %v2712 = vunpack.c.l.b16 %v2424
        %v2713 = vunpack.c.l.b16 %v2425
        %v2714 = vunpack.c.l.b16 %v2426
        %v2715 = vunpack.c.l.b16 %v2427
        %v2716 = vunpack.c.l.b16 %v2428
        %v2717 = vunpack.c.l.b16 %v2429
        %v2718 = vunpack.c.l.b16 %v2430
        %v2719 = vunpack.c.l.b16 %v2431
        %v2720 = vunpack.c.l.b16 %v2432
        %v2721 = vunpack.c.l.b16 %v2433
        %v2722 = vunpack.c.l.b16 %v2434
        %v2723 = vunpack.c.l.b16 %v2435
        %v2724 = vunpack.c.l.b16 %v2436
        %v2725 = vunpack.c.l.b16 %v2437
        %v2726 = vunpack.c.l.b16 %v2438
        %v2727 = vunpack.c.l.b16 %v2439
        %v2728 = vunpack.c.l.b16 %v2440
        %v2729 = vunpack.c.l.b16 %v2441
        %v2730 = vunpack.c.l.b16 %v2442
        %v2731 = vunpack.c.l.b16 %v2443
        %v2732 = vunpack.c.l.b16 %v2444
        %v2733 = vunpack.c.l.b16 %v2445
        %v2734 = vunpack.c.l.b16 %v2446
        %v2735 = vunpack.c.l.b16 %v2447
        %v2736 = vunpack.c.l.b16 %v2448
        %v2737 = vunpack.c.l.b16 %v2449
        %v2738 = vunpack.c.l.b16 %v2450
        %v2739 = vunpack.c.l.b16 %v2451
        %v2740 = vunpack.c.l.b16 %v2452
        %v2741 = vunpack.c.l.b16 %v2453
        %v2742 = vunpack.c.l.b16 %v2454
        %v2743 = vunpack.c.l.b16 %v2455
        %v2744 = vunpack.c.l.b16 %v2456
        %v2745 = vunpack.c.l.b16 %v2457
        %v2746 = vunpack.c.l.b16 %v2458
        %v2747 = vunpack.c.l.b16 %v2459
        %v2748 = vunpack.c.l.b16 %v2460
        %v2749 = vunpack.c.l.b16 %v2461
        %v2750 = vunpack.c.l.b16 %v2462
        %v2751 = vunpack.c.l.b16 %v2463
        %v2752 = vunpack.c.l.b16 %v2464
        %v2753 = vunpack.c.l.b16 %v2465
        %v2754 = vunpack.c.l.b16 %v2466
        %v2755 = vunpack.c.l.b16 %v2467
        %v2756 = vunpack.c.l.b16 %v2468
        %v2757 = vunpack.c.l.b16 %v2469
        %v2758 = vunpack.c.l.b16 %v2470
        %v2759 = vunpack.c.l.b16 %v2471
        %v2760 = vunpack.c.l.b16 %v2472
        %v2761 = vunpack.c.l.b16 %v2473
        %v2762 = vunpack.c.l.b16 %v2474
        %v2763 = vunpack.c.l.b16 %v2475
        %v2764 = vunpack.c.l.b16 %v2476
        %v2765 = vunpack.c.l.b16 %v2477
        %v2766 = vunpack.c.l.b16 %v2478
        %v2767 = vunpack.c.l.b16 %v2479
        %v2768 = vunpack.c.l.b16 %v2480
        %v2769 = vpack.c.b16 %v2626, %v2625
        %v2770 = vpack.c.b16 %v2628, %v2627
        %v2771 = vpack.c.b16 %v2630, %v2629
        %v2772 = vpack.c.b16 %v2632, %v2631
        %v2773 = vpack.c.b16 %v2634, %v2633
        %v2774 = vpack.c.b16 %v2636, %v2635
        %v2775 = vpack.c.b16 %v2638, %v2637
        %v2776 = vpack.c.b16 %v2640, %v2639
        %v2777 = vpack.c.b16 %v2642, %v2641
        %v2778 = vpack.c.b16 %v2644, %v2643
        %v2779 = vpack.c.b16 %v2646, %v2645
        %v2780 = vpack.c.b16 %v2648, %v2647
        %v2781 = vpack.c.b16 %v2650, %v2649
        %v2782 = vpack.c.b16 %v2652, %v2651
        %v2783 = vpack.c.b16 %v2654, %v2653
        %v2784 = vpack.c.b16 %v2656, %v2655
        %v2785 = vpack.c.b16 %v2658, %v2657
        %v2786 = vpack.c.b16 %v2660, %v2659
        %v2787 = vpack.c.b16 %v2662, %v2661
        %v2788 = vpack.c.b16 %v2664, %v2663
        %v2789 = vpack.c.b16 %v2666, %v2665
        %v2790 = vpack.c.b16 %v2668, %v2667
        %v2791 = vpack.c.b16 %v2670, %v2669
        %v2792 = vpack.c.b16 %v2672, %v2671
        %v2793 = vpack.c.b16 %v2674, %v2673
        %v2794 = vpack.c.b16 %v2676, %v2675
        %v2795 = vpack.c.b16 %v2678, %v2677
        %v2796 = vpack.c.b16 %v2680, %v2679
        %v2797 = vpack.c.b16 %v2682, %v2681
        %v2798 = vpack.c.b16 %v2684, %v2683
        %v2799 = vpack.c.b16 %v2686, %v2685
        %v2800 = vpack.c.b16 %v2688, %v2687
        %v2801 = vpack.c.b16 %v2690, %v2689
        %v2802 = vpack.c.b16 %v2692, %v2691
        %v2803 = vpack.c.b16 %v2694, %v2693
        %v2804 = vpack.c.b16 %v2696, %v2695
        %v2805 = vpack.c.b16 %v2698, %v2697
        %v2806 = vpack.c.b16 %v2700, %v2699
        %v2807 = vpack.c.b16 %v2702, %v2701
        %v2808 = vpack.c.b16 %v2704, %v2703
        %v2809 = vpack.c.b16 %v2706, %v2705
        %v2810 = vpack.c.b16 %v2708, %v2707
        %v2811 = vpack.c.b16 %v2710, %v2709
        %v2812 = vpack.c.b16 %v2712, %v2711
        %v2813 = vpack.c.b16 %v2714, %v2713
        %v2814 = vpack.c.b16 %v2716, %v2715
        %v2815 = vpack.c.b16 %v2718, %v2717
        %v2816 = vpack.c.b16 %v2720, %v2719
        %v2817 = vpack.c.b16 %v2722, %v2721
        %v2818 = vpack.c.b16 %v2724, %v2723
        %v2819 = vpack.c.b16 %v2726, %v2725
        %v2820 = vpack.c.b16 %v2728, %v2727
        %v2821 = vpack.c.b16 %v2730, %v2729
        %v2822 = vpack.c.b16 %v2732, %v2731
        %v2823 = vpack.c.b16 %v2734, %v2733
        %v2824 = vpack.c.b16 %v2736, %v2735
        %v2825 = vpack.c.b16 %v2738, %v2737
        %v2826 = vpack.c.b16 %v2740, %v2739
        %v2827 = vpack.c.b16 %v2742, %v2741
        %v2828 = vpack.c.b16 %v2744, %v2743
        %v2829 = vpack.c.b16 %v2746, %v2745
        %v2830 = vpack.c.b16 %v2748, %v2747
        %v2831 = vpack.c.b16 %v2750, %v2749
        %v2832 = vpack.c.b16 %v2752, %v2751
        %v2833 = vpack.c.b16 %v2754, %v2753
        %v2834 = vpack.c.b16 %v2756, %v2755
        %v2835 = vpack.c.b16 %v2758, %v2757
        %v2836 = vpack.c.b16 %v2760, %v2759
        %v2837 = vpack.c.b16 %v2762, %v2761
        %v2838 = vpack.c.b16 %v2764, %v2763
        %v2839 = vpack.c.b16 %v2766, %v2765
        %v2840 = vpack.c.b16 %v2768, %v2767
        %2913 = vmatprep.subr.bf16.mxu0 0
        %2914 = vmatpush1.bf16.msra.mxu0 %v2776
        %2915 = vmatprep.subr.bf16.mxu0 0
        %2916 = vmatpush1.bf16.msra.mxu0 %v2775
        %2917 = vmatprep.subr.bf16.mxu0 0
        %2918 = vmatpush1.bf16.msra.mxu0 %v2774
        %2919 = vmatprep.subr.bf16.mxu0 0
        %2920 = vmatpush1.bf16.msra.mxu0 %v2773
        %2921 = vmatprep.subr.bf16.mxu0 0
        %2922 = vmatpush1.bf16.msra.mxu0 %v2772
        %2923 = vmatprep.subr.bf16.mxu0 0
        %2924 = vmatpush1.bf16.msra.mxu0 %v2771
        %2925 = vmatprep.subr.bf16.mxu0 0
        %2926 = vmatpush1.bf16.msra.mxu0 %v2770
        %2927 = vmatprep.subr.bf16.mxu0 0
        %2928 = vmatpush1.bf16.msra.mxu0 %v2769
        %2929 = vmatprep.subr.bf16.mxu0 0
        %2930 = vmatpush2.bf16.msra.mxu0 %v2784
        %2931 = vmatprep.subr.bf16.mxu0 0
        %2932 = vmatpush2.bf16.msra.mxu0 %v2783
        %2933 = vmatprep.subr.bf16.mxu0 0
        %2934 = vmatpush2.bf16.msra.mxu0 %v2782
        %2935 = vmatprep.subr.bf16.mxu0 0
        %2936 = vmatpush2.bf16.msra.mxu0 %v2781
        %2937 = vmatprep.subr.bf16.mxu0 0
        %2938 = vmatpush2.bf16.msra.mxu0 %v2780
        %2939 = vmatprep.subr.bf16.mxu0 0
        %2940 = vmatpush2.bf16.msra.mxu0 %v2779
        %2941 = vmatprep.subr.bf16.mxu0 0
        %2942 = vmatpush2.bf16.msra.mxu0 %v2778
        %2943 = vmatprep.subr.bf16.mxu0 0
        %2944 = vmatpush2.bf16.msra.mxu0 %v2777
        %2945 = vmatprep.mubr.bf16.mxu0 %v2158
        %2946 = vmatmul.mubr.bf16.gmra.mxu0 %v2127
        %v2947 = vpop.f32.mrf.mxu0
        %v2948 = vadd.f32 0.0, %v2947
        %v2949 = vpop.f32.mrf.mxu0
        %v2950 = vpop.f32.mrf.mxu0
        %v2951 = vadd.f32 0.0, %v2950
        %v2952 = vpop.f32.mrf.mxu0
        %2953 = vmatprep.mubr.bf16.mxu0 %v2170
        %2954 = vmatmul.mubr.bf16.gmra.mxu0 %v2128
        %v2955 = vpop.f32.mrf.mxu0
        %v2956 = vadd.f32 0.0, %v2955
        %v2957 = vpop.f32.mrf.mxu0
        %v2958 = vpop.f32.mrf.mxu0
        %v2959 = vadd.f32 0.0, %v2958
        %v2960 = vpop.f32.mrf.mxu0
        %2961 = vmatprep.mubr.bf16.mxu0 %v2182
        %2962 = vmatmul.mubr.bf16.gmra.mxu0 %v2129
        %v2963 = vpop.f32.mrf.mxu0
        %v2964 = vadd.f32 0.0, %v2963
        %v2965 = vpop.f32.mrf.mxu0
        %v2966 = vpop.f32.mrf.mxu0
        %v2967 = vadd.f32 0.0, %v2966
        %v2968 = vpop.f32.mrf.mxu0
        %2969 = vmatprep.mubr.bf16.mxu0 %v2194
        %2970 = vmatmul.mubr.bf16.gmra.mxu0 %v2130
        %v2971 = vpop.f32.mrf.mxu0
        %v2972 = vadd.f32 0.0, %v2971
        %v2973 = vpop.f32.mrf.mxu0
        %v2974 = vpop.f32.mrf.mxu0
        %v2975 = vadd.f32 0.0, %v2974
        %v2976 = vpop.f32.mrf.mxu0
        %2977 = vmatprep.mubr.bf16.mxu0 %v2206
        %2978 = vmatmul.mubr.bf16.gmra.mxu0 %v2131
        %v2979 = vpop.f32.mrf.mxu0
        %v2980 = vadd.f32 0.0, %v2979
        %v2981 = vpop.f32.mrf.mxu0
        %v2982 = vpop.f32.mrf.mxu0
        %v2983 = vadd.f32 0.0, %v2982
        %v2984 = vpop.f32.mrf.mxu0
        %2985 = vmatprep.mubr.bf16.mxu0 %v2218
        %2986 = vmatmul.mubr.bf16.gmra.mxu0 %v2132
        %v2987 = vpop.f32.mrf.mxu0
        %v2988 = vadd.f32 0.0, %v2987
        %v2989 = vpop.f32.mrf.mxu0
        %v2990 = vpop.f32.mrf.mxu0
        %v2991 = vadd.f32 0.0, %v2990
        %v2992 = vpop.f32.mrf.mxu0
        %2993 = vmatprep.mubr.bf16.mxu0 %v2230
        %2994 = vmatmul.mubr.bf16.gmra.mxu0 %v2133
        %v2995 = vpop.f32.mrf.mxu0
        %v2996 = vadd.f32 0.0, %v2995
        %v2997 = vpop.f32.mrf.mxu0
        %v2998 = vpop.f32.mrf.mxu0
        %v2999 = vadd.f32 0.0, %v2998
        %v3000 = vpop.f32.mrf.mxu0
        %3001 = vmatprep.mubr.bf16.mxu0 %v2242
        %3002 = vmatmul.mubr.bf16.gmra.mxu0 %v2134
        %v3003 = vpop.f32.mrf.mxu0
        %v3004 = vadd.f32 0.0, %v3003
        %v3005 = vpop.f32.mrf.mxu0
        %v3006 = vpop.f32.mrf.mxu0
        %v3007 = vadd.f32 0.0, %v3006
        %v3008 = vpop.f32.mrf.mxu0
        %3009 = vdwg.mxu0
        %3010 = vmatprep.subr.bf16.mxu0 0
        %3011 = vmatpush1.bf16.msra.mxu0 %v2792
        %3012 = vmatprep.subr.bf16.mxu0 0
        %3013 = vmatpush1.bf16.msra.mxu0 %v2791
        %3014 = vmatprep.subr.bf16.mxu0 0
        %3015 = vmatpush1.bf16.msra.mxu0 %v2790
        %3016 = vmatprep.subr.bf16.mxu0 0
        %3017 = vmatpush1.bf16.msra.mxu0 %v2789
        %3018 = vmatprep.subr.bf16.mxu0 0
        %3019 = vmatpush1.bf16.msra.mxu0 %v2788
        %3020 = vmatprep.subr.bf16.mxu0 0
        %3021 = vmatpush1.bf16.msra.mxu0 %v2787
        %3022 = vmatprep.subr.bf16.mxu0 0
        %3023 = vmatpush1.bf16.msra.mxu0 %v2786
        %3024 = vmatprep.subr.bf16.mxu0 0
        %3025 = vmatpush1.bf16.msra.mxu0 %v2785
        %3026 = vmatprep.subr.bf16.mxu0 0
        %3027 = vmatpush2.bf16.msra.mxu0 %v2800
        %3028 = vmatprep.subr.bf16.mxu0 0
        %3029 = vmatpush2.bf16.msra.mxu0 %v2799
        %3030 = vmatprep.subr.bf16.mxu0 0
        %3031 = vmatpush2.bf16.msra.mxu0 %v2798
        %3032 = vmatprep.subr.bf16.mxu0 0
        %3033 = vmatpush2.bf16.msra.mxu0 %v2797
        %3034 = vmatprep.subr.bf16.mxu0 0
        %3035 = vmatpush2.bf16.msra.mxu0 %v2796
        %3036 = vmatprep.subr.bf16.mxu0 0
        %3037 = vmatpush2.bf16.msra.mxu0 %v2795
        %3038 = vmatprep.subr.bf16.mxu0 0
        %3039 = vmatpush2.bf16.msra.mxu0 %v2794
        %3040 = vmatprep.subr.bf16.mxu0 0
        %3041 = vmatpush2.bf16.msra.mxu0 %v2793
        %3042 = vmatprep.mubr.bf16.mxu0 %v2128
        %3043 = vmatmul.mubr.bf16.gmra.mxu0 %v2269
        %v3044 = vpop.f32.mrf.mxu0
        %v3045 = vadd.f32 %v2948, %v3044
        %v3046 = vpop.f32.mrf.mxu0
        %v3047 = vpop.f32.mrf.mxu0
        %v3048 = vadd.f32 %v2951, %v3047
        %v3049 = vpop.f32.mrf.mxu0
        %3050 = vmatprep.mubr.bf16.mxu0 %v2129
        %3051 = vmatmul.mubr.bf16.gmra.mxu0 %v2272
        %v3052 = vpop.f32.mrf.mxu0
        %v3053 = vadd.f32 %v2956, %v3052
        %v3054 = vpop.f32.mrf.mxu0
        %v3055 = vpop.f32.mrf.mxu0
        %v3056 = vadd.f32 %v2959, %v3055
        %v3057 = vpop.f32.mrf.mxu0
        %3058 = vmatprep.mubr.bf16.mxu0 %v2130
        %3059 = vmatmul.mubr.bf16.gmra.mxu0 %v2275
        %v3060 = vpop.f32.mrf.mxu0
        %v3061 = vadd.f32 %v2964, %v3060
        %v3062 = vpop.f32.mrf.mxu0
        %v3063 = vpop.f32.mrf.mxu0
        %v3064 = vadd.f32 %v2967, %v3063
        %v3065 = vpop.f32.mrf.mxu0
        %3066 = vmatprep.mubr.bf16.mxu0 %v2131
        %3067 = vmatmul.mubr.bf16.gmra.mxu0 %v2278
        %v3068 = vpop.f32.mrf.mxu0
        %v3069 = vadd.f32 %v2972, %v3068
        %v3070 = vpop.f32.mrf.mxu0
        %v3071 = vpop.f32.mrf.mxu0
        %v3072 = vadd.f32 %v2975, %v3071
        %v3073 = vpop.f32.mrf.mxu0
        %3074 = vmatprep.mubr.bf16.mxu0 %v2132
        %3075 = vmatmul.mubr.bf16.gmra.mxu0 %v2281
        %v3076 = vpop.f32.mrf.mxu0
        %v3077 = vadd.f32 %v2980, %v3076
        %v3078 = vpop.f32.mrf.mxu0
        %v3079 = vpop.f32.mrf.mxu0
        %v3080 = vadd.f32 %v2983, %v3079
        %v3081 = vpop.f32.mrf.mxu0
        %3082 = vmatprep.mubr.bf16.mxu0 %v2133
        %3083 = vmatmul.mubr.bf16.gmra.mxu0 %v2284
        %v3084 = vpop.f32.mrf.mxu0
        %v3085 = vadd.f32 %v2988, %v3084
        %v3086 = vpop.f32.mrf.mxu0
        %v3087 = vpop.f32.mrf.mxu0
        %v3088 = vadd.f32 %v2991, %v3087
        %v3089 = vpop.f32.mrf.mxu0
        %3090 = vmatprep.mubr.bf16.mxu0 %v2134
        %3091 = vmatmul.mubr.bf16.gmra.mxu0 %v2287
        %v3092 = vpop.f32.mrf.mxu0
        %v3093 = vadd.f32 %v2996, %v3092
        %v3094 = vpop.f32.mrf.mxu0
        %v3095 = vpop.f32.mrf.mxu0
        %v3096 = vadd.f32 %v2999, %v3095
        %v3097 = vpop.f32.mrf.mxu0
        %3098 = vmatprep.mubr.bf16.mxu0 %v2135
        %3099 = vmatmul.mubr.bf16.gmra.mxu0 %v2290
        %v3100 = vpop.f32.mrf.mxu0
        %v3101 = vadd.f32 %v3004, %v3100
        %v3102 = vpop.f32.mrf.mxu0
        %v3103 = vpop.f32.mrf.mxu0
        %v3104 = vadd.f32 %v3007, %v3103
        %v3105 = vpop.f32.mrf.mxu0
        %3106 = vdwg.mxu0
        %3107 = vmatprep.subr.bf16.mxu0 0
        %3108 = vmatpush1.bf16.msra.mxu0 %v2808
        %3109 = vmatprep.subr.bf16.mxu0 0
        %3110 = vmatpush1.bf16.msra.mxu0 %v2807
        %3111 = vmatprep.subr.bf16.mxu0 0
        %3112 = vmatpush1.bf16.msra.mxu0 %v2806
        %3113 = vmatprep.subr.bf16.mxu0 0
        %3114 = vmatpush1.bf16.msra.mxu0 %v2805
        %3115 = vmatprep.subr.bf16.mxu0 0
        %3116 = vmatpush1.bf16.msra.mxu0 %v2804
        %3117 = vmatprep.subr.bf16.mxu0 0
        %3118 = vmatpush1.bf16.msra.mxu0 %v2803
        %3119 = vmatprep.subr.bf16.mxu0 0
        %3120 = vmatpush1.bf16.msra.mxu0 %v2802
        %3121 = vmatprep.subr.bf16.mxu0 0
        %3122 = vmatpush1.bf16.msra.mxu0 %v2801
        %3123 = vmatprep.subr.bf16.mxu0 0
        %3124 = vmatpush2.bf16.msra.mxu0 %v2816
        %3125 = vmatprep.subr.bf16.mxu0 0
        %3126 = vmatpush2.bf16.msra.mxu0 %v2815
        %3127 = vmatprep.subr.bf16.mxu0 0
        %3128 = vmatpush2.bf16.msra.mxu0 %v2814
        %3129 = vmatprep.subr.bf16.mxu0 0
        %3130 = vmatpush2.bf16.msra.mxu0 %v2813
        %3131 = vmatprep.subr.bf16.mxu0 0
        %3132 = vmatpush2.bf16.msra.mxu0 %v2812
        %3133 = vmatprep.subr.bf16.mxu0 0
        %3134 = vmatpush2.bf16.msra.mxu0 %v2811
        %3135 = vmatprep.subr.bf16.mxu0 0
        %3136 = vmatpush2.bf16.msra.mxu0 %v2810
        %3137 = vmatprep.subr.bf16.mxu0 0
        %3138 = vmatpush2.bf16.msra.mxu0 %v2809
        %3139 = vmatprep.mubr.bf16.mxu0 %v2272
        %3140 = vmatmul.mubr.bf16.gmra.mxu0 %v2170
        %v3141 = vpop.f32.mrf.mxu0
        %v3142 = vadd.f32 %v3045, %v3141
        %v3143 = vpop.f32.mrf.mxu0
        %v3144 = vpop.f32.mrf.mxu0
        %v3145 = vadd.f32 %v3048, %v3144
        %v3146 = vpop.f32.mrf.mxu0
        %3147 = vmatprep.mubr.bf16.mxu0 %v2275
        %3148 = vmatmul.mubr.bf16.gmra.mxu0 %v2182
        %v3149 = vpop.f32.mrf.mxu0
        %v3150 = vadd.f32 %v3053, %v3149
        %v3151 = vpop.f32.mrf.mxu0
        %v3152 = vpop.f32.mrf.mxu0
        %v3153 = vadd.f32 %v3056, %v3152
        %v3154 = vpop.f32.mrf.mxu0
        %3155 = vmatprep.mubr.bf16.mxu0 %v2278
        %3156 = vmatmul.mubr.bf16.gmra.mxu0 %v2194
        %v3157 = vpop.f32.mrf.mxu0
        %v3158 = vadd.f32 %v3061, %v3157
        %v3159 = vpop.f32.mrf.mxu0
        %v3160 = vpop.f32.mrf.mxu0
        %v3161 = vadd.f32 %v3064, %v3160
        %v3162 = vpop.f32.mrf.mxu0
        %3163 = vmatprep.mubr.bf16.mxu0 %v2281
        %3164 = vmatmul.mubr.bf16.gmra.mxu0 %v2206
        %v3165 = vpop.f32.mrf.mxu0
        %v3166 = vadd.f32 %v3069, %v3165
        %v3167 = vpop.f32.mrf.mxu0
        %v3168 = vpop.f32.mrf.mxu0
        %v3169 = vadd.f32 %v3072, %v3168
        %v3170 = vpop.f32.mrf.mxu0
        %3171 = vmatprep.mubr.bf16.mxu0 %v2284
        %3172 = vmatmul.mubr.bf16.gmra.mxu0 %v2218
        %v3173 = vpop.f32.mrf.mxu0
        %v3174 = vadd.f32 %v3077, %v3173
        %v3175 = vpop.f32.mrf.mxu0
        %v3176 = vpop.f32.mrf.mxu0
        %v3177 = vadd.f32 %v3080, %v3176
        %v3178 = vpop.f32.mrf.mxu0
        %3179 = vmatprep.mubr.bf16.mxu0 %v2287
        %3180 = vmatmul.mubr.bf16.gmra.mxu0 %v2230
        %v3181 = vpop.f32.mrf.mxu0
        %v3182 = vadd.f32 %v3085, %v3181
        %v3183 = vpop.f32.mrf.mxu0
        %v3184 = vpop.f32.mrf.mxu0
        %v3185 = vadd.f32 %v3088, %v3184
        %v3186 = vpop.f32.mrf.mxu0
        %3187 = vmatprep.mubr.bf16.mxu0 %v2290
        %3188 = vmatmul.mubr.bf16.gmra.mxu0 %v2242
        %v3189 = vpop.f32.mrf.mxu0
        %v3190 = vadd.f32 %v3093, %v3189
        %v3191 = vpop.f32.mrf.mxu0
        %v3192 = vpop.f32.mrf.mxu0
        %v3193 = vadd.f32 %v3096, %v3192
        %v3194 = vpop.f32.mrf.mxu0
        %3195 = vmatprep.mubr.bf16.mxu0 %v2316
        %3196 = vmatmul.mubr.bf16.gmra.mxu0 %v2310
        %v3197 = vpop.f32.mrf.mxu0
        %v3198 = vadd.f32 %v3101, %v3197
        %v3199 = vpop.f32.mrf.mxu0
        %v3200 = vpop.f32.mrf.mxu0
        %v3201 = vadd.f32 %v3104, %v3200
        %v3202 = vpop.f32.mrf.mxu0
        %3203 = vdwg.mxu0
        %3204 = vmatprep.subr.bf16.mxu0 0
        %3205 = vmatpush1.bf16.msra.mxu0 %v2824
        %3206 = vmatprep.subr.bf16.mxu0 0
        %3207 = vmatpush1.bf16.msra.mxu0 %v2823
        %3208 = vmatprep.subr.bf16.mxu0 0
        %3209 = vmatpush1.bf16.msra.mxu0 %v2822
        %3210 = vmatprep.subr.bf16.mxu0 0
        %3211 = vmatpush1.bf16.msra.mxu0 %v2821
        %3212 = vmatprep.subr.bf16.mxu0 0
        %3213 = vmatpush1.bf16.msra.mxu0 %v2820
        %3214 = vmatprep.subr.bf16.mxu0 0
        %3215 = vmatpush1.bf16.msra.mxu0 %v2819
        %3216 = vmatprep.subr.bf16.mxu0 0
        %3217 = vmatpush1.bf16.msra.mxu0 %v2818
        %3218 = vmatprep.subr.bf16.mxu0 0
        %3219 = vmatpush1.bf16.msra.mxu0 %v2817
        %3220 = vmatprep.subr.bf16.mxu0 0
        %3221 = vmatpush2.bf16.msra.mxu0 %v2832
        %3222 = vmatprep.subr.bf16.mxu0 0
        %3223 = vmatpush2.bf16.msra.mxu0 %v2831
        %3224 = vmatprep.subr.bf16.mxu0 0
        %3225 = vmatpush2.bf16.msra.mxu0 %v2830
        %3226 = vmatprep.subr.bf16.mxu0 0
        %3227 = vmatpush2.bf16.msra.mxu0 %v2829
        %3228 = vmatprep.subr.bf16.mxu0 0
        %3229 = vmatpush2.bf16.msra.mxu0 %v2828
        %3230 = vmatprep.subr.bf16.mxu0 0
        %3231 = vmatpush2.bf16.msra.mxu0 %v2827
        %3232 = vmatprep.subr.bf16.mxu0 0
        %3233 = vmatpush2.bf16.msra.mxu0 %v2826
        %3234 = vmatprep.subr.bf16.mxu0 0
        %3235 = vmatpush2.bf16.msra.mxu0 %v2825
        %3236 = vmatprep.mubr.bf16.mxu0 %v2182
        %3237 = vmatmul.mubr.bf16.gmra.mxu0 %v2129
        %v3238 = vpop.f32.mrf.mxu0
        %v3239 = vadd.f32 %v3142, %v3238
        %v3240 = vpop.f32.mrf.mxu0
        %v3241 = vpop.f32.mrf.mxu0
        %v3242 = vadd.f32 %v3145, %v3241
        %v3243 = vpop.f32.mrf.mxu0
        %3244 = vmatprep.mubr.bf16.mxu0 %v2194
        %3245 = vmatmul.mubr.bf16.gmra.mxu0 %v2130
        %v3246 = vpop.f32.mrf.mxu0
        %v3247 = vadd.f32 %v3150, %v3246
        %v3248 = vpop.f32.mrf.mxu0
        %v3249 = vpop.f32.mrf.mxu0
        %v3250 = vadd.f32 %v3153, %v3249
        %v3251 = vpop.f32.mrf.mxu0
        %3252 = vmatprep.mubr.bf16.mxu0 %v2206
        %3253 = vmatmul.mubr.bf16.gmra.mxu0 %v2131
        %v3254 = vpop.f32.mrf.mxu0
        %v3255 = vadd.f32 %v3158, %v3254
        %v3256 = vpop.f32.mrf.mxu0
        %v3257 = vpop.f32.mrf.mxu0
        %v3258 = vadd.f32 %v3161, %v3257
        %v3259 = vpop.f32.mrf.mxu0
        %3260 = vmatprep.mubr.bf16.mxu0 %v2218
        %3261 = vmatmul.mubr.bf16.gmra.mxu0 %v2132
        %v3262 = vpop.f32.mrf.mxu0
        %v3263 = vadd.f32 %v3166, %v3262
        %v3264 = vpop.f32.mrf.mxu0
        %v3265 = vpop.f32.mrf.mxu0
        %v3266 = vadd.f32 %v3169, %v3265
        %v3267 = vpop.f32.mrf.mxu0
        %3268 = vmatprep.mubr.bf16.mxu0 %v2230
        %3269 = vmatmul.mubr.bf16.gmra.mxu0 %v2133
        %v3270 = vpop.f32.mrf.mxu0
        %v3271 = vadd.f32 %v3174, %v3270
        %v3272 = vpop.f32.mrf.mxu0
        %v3273 = vpop.f32.mrf.mxu0
        %v3274 = vadd.f32 %v3177, %v3273
        %v3275 = vpop.f32.mrf.mxu0
        %3276 = vmatprep.mubr.bf16.mxu0 %v2242
        %3277 = vmatmul.mubr.bf16.gmra.mxu0 %v2134
        %v3278 = vpop.f32.mrf.mxu0
        %v3279 = vadd.f32 %v3182, %v3278
        %v3280 = vpop.f32.mrf.mxu0
        %v3281 = vpop.f32.mrf.mxu0
        %v3282 = vadd.f32 %v3185, %v3281
        %v3283 = vpop.f32.mrf.mxu0
        %3284 = vmatprep.mubr.bf16.mxu0 %v2310
        %3285 = vmatmul.mubr.bf16.gmra.mxu0 %v2135
        %v3286 = vpop.f32.mrf.mxu0
        %v3287 = vadd.f32 %v3190, %v3286
        %v3288 = vpop.f32.mrf.mxu0
        %v3289 = vpop.f32.mrf.mxu0
        %v3290 = vadd.f32 %v3193, %v3289
        %v3291 = vpop.f32.mrf.mxu0
        %3292 = vmatprep.mubr.bf16.mxu0 %v2329
        %3293 = vmatmul.mubr.bf16.gmra.mxu0 %v2136
        %v3294 = vpop.f32.mrf.mxu0
        %v3295 = vadd.f32 %v3198, %v3294
        %v3296 = vpop.f32.mrf.mxu0
        %v3297 = vpop.f32.mrf.mxu0
        %v3298 = vadd.f32 %v3201, %v3297
        %v3299 = vpop.f32.mrf.mxu0
        %3300 = vdwg.mxu0
        %3301 = vmatprep.subr.bf16.mxu0 0
        %3302 = vmatpush1.bf16.msra.mxu0 %v2840
        %3303 = vmatprep.subr.bf16.mxu0 0
        %3304 = vmatpush1.bf16.msra.mxu0 %v2839
        %3305 = vmatprep.subr.bf16.mxu0 0
        %3306 = vmatpush1.bf16.msra.mxu0 %v2838
        %3307 = vmatprep.subr.bf16.mxu0 0
        %3308 = vmatpush1.bf16.msra.mxu0 %v2837
        %3309 = vmatprep.subr.bf16.mxu0 0
        %3310 = vmatpush1.bf16.msra.mxu0 %v2836
        %3311 = vmatprep.subr.bf16.mxu0 0
        %3312 = vmatpush1.bf16.msra.mxu0 %v2835
        %3313 = vmatprep.subr.bf16.mxu0 0
        %3314 = vmatpush1.bf16.msra.mxu0 %v2834
        %3315 = vmatprep.subr.bf16.mxu0 0
        %3316 = vmatpush1.bf16.msra.mxu0 %v2833
        %3317 = vmatprep.subr.bf16.mxu0 0
        %3318 = vmatpush2.bf16.msra.mxu0 0
        %3319 = vmatprep.subr.bf16.mxu0 0
        %3320 = vmatpush2.bf16.msra.mxu0 0
        %3321 = vmatprep.subr.bf16.mxu0 0
        %3322 = vmatpush2.bf16.msra.mxu0 0
        %3323 = vmatprep.subr.bf16.mxu0 0
        %3324 = vmatpush2.bf16.msra.mxu0 0
        %3325 = vmatprep.subr.bf16.mxu0 0
        %3326 = vmatpush2.bf16.msra.mxu0 0
        %3327 = vmatprep.subr.bf16.mxu0 0
        %3328 = vmatpush2.bf16.msra.mxu0 0
        %3329 = vmatprep.subr.bf16.mxu0 0
        %3330 = vmatpush2.bf16.msra.mxu0 0
        %3331 = vmatprep.subr.bf16.mxu0 0
        %3332 = vmatpush2.bf16.msra.mxu0 0
        %3333 = vmatprep.mubr.bf16.mxu0 0
        %3334 = vmatmul.mubr.bf16.gmra.mxu0 %v2275
        %v3335 = vpop.f32.mrf.mxu0
        %v3336 = vadd.f32 %v3239, %v3335
        %v3337 = vpop.f32.mrf.mxu0
        %v3338 = vpop.f32.mrf.mxu0
        %v3339 = vadd.f32 %v3242, %v3338
        %v3340 = vpop.f32.mrf.mxu0
        %3341 = vmatprep.mubr.bf16.mxu0 0
        %3342 = vmatmul.mubr.bf16.gmra.mxu0 %v2278
        %v3343 = vpop.f32.mrf.mxu0
        %v3344 = vadd.f32 %v3247, %v3343
        %v3345 = vpop.f32.mrf.mxu0
        %v3346 = vpop.f32.mrf.mxu0
        %v3347 = vadd.f32 %v3250, %v3346
        %v3348 = vpop.f32.mrf.mxu0
        %3349 = vmatprep.mubr.bf16.mxu0 0
        %3350 = vmatmul.mubr.bf16.gmra.mxu0 %v2281
        %v3351 = vpop.f32.mrf.mxu0
        %v3352 = vadd.f32 %v3255, %v3351
        %v3353 = vpop.f32.mrf.mxu0
        %v3354 = vpop.f32.mrf.mxu0
        %v3355 = vadd.f32 %v3258, %v3354
        %v3356 = vpop.f32.mrf.mxu0
        %3357 = vmatprep.mubr.bf16.mxu0 0
        %3358 = vmatmul.mubr.bf16.gmra.mxu0 %v2284
        %v3359 = vpop.f32.mrf.mxu0
        %v3360 = vadd.f32 %v3263, %v3359
        %v3361 = vpop.f32.mrf.mxu0
        %v3362 = vpop.f32.mrf.mxu0
        %v3363 = vadd.f32 %v3266, %v3362
        %v3364 = vpop.f32.mrf.mxu0
        %3365 = vmatprep.mubr.bf16.mxu0 0
        %3366 = vmatmul.mubr.bf16.gmra.mxu0 %v2287
        %v3367 = vpop.f32.mrf.mxu0
        %v3368 = vadd.f32 %v3271, %v3367
        %v3369 = vpop.f32.mrf.mxu0
        %v3370 = vpop.f32.mrf.mxu0
        %v3371 = vadd.f32 %v3274, %v3370
        %v3372 = vpop.f32.mrf.mxu0
        %3373 = vmatprep.mubr.bf16.mxu0 0
        %3374 = vmatmul.mubr.bf16.gmra.mxu0 %v2290
        %v3375 = vpop.f32.mrf.mxu0
        %v3376 = vadd.f32 %v3279, %v3375
        %v3377 = vpop.f32.mrf.mxu0
        %v3378 = vpop.f32.mrf.mxu0
        %v3379 = vadd.f32 %v3282, %v3378
        %v3380 = vpop.f32.mrf.mxu0
        %3381 = vmatprep.mubr.bf16.mxu0 0
        %3382 = vmatmul.mubr.bf16.gmra.mxu0 %v2316
        %v3383 = vpop.f32.mrf.mxu0
        %v3384 = vadd.f32 %v3287, %v3383
        %v3385 = vpop.f32.mrf.mxu0
        %v3386 = vpop.f32.mrf.mxu0
        %v3387 = vadd.f32 %v3290, %v3386
        %v3388 = vpop.f32.mrf.mxu0
        %3389 = vmatprep.mubr.bf16.mxu0 0
        %3390 = vmatmul.mubr.bf16.gmra.mxu0 %v2335
        %v3391 = vpop.f32.mrf.mxu0
        %v3392 = vadd.f32 %v3295, %v3391
        %v3393 = vpop.f32.mrf.mxu0
        %v3394 = vpop.f32.mrf.mxu0
        %v3395 = vadd.f32 %v3298, %v3394
        %v3396 = vpop.f32.mrf.mxu0
        %3397 = vdwg.mxu0
        %v3398 = vld [vmem:[%s6] sm:$0x1]
        %v3400 = vlaneseq
        %v3401 = vshrl.u32 %v3400, 7
        %v3402 = vsub.s32 0, %v3401
        %v3403 = vrot.slane %v3398, %v3402
        %v3405 = vmul.f32 %v3336, %v3403
        %v3406 = vmul.f32 %v3339, %v3403
        %v3407 = vmul.f32 %v3344, %v3403
        %v3408 = vmul.f32 %v3347, %v3403
        %v3409 = vmul.f32 %v3352, %v3403
        %v3410 = vmul.f32 %v3355, %v3403
        %v3411 = vmul.f32 %v3360, %v3403
        %v3412 = vmul.f32 %v3363, %v3403
        %v3413 = vmul.f32 %v3368, %v3403
        %v3414 = vmul.f32 %v3371, %v3403
        %v3415 = vmul.f32 %v3376, %v3403
        %v3416 = vmul.f32 %v3379, %v3403
        %v3417 = vmul.f32 %v3384, %v3403
        %v3418 = vmul.f32 %v3387, %v3403
        %v3419 = vmul.f32 %v3392, %v3403
        %v3420 = vmul.f32 %v3395, %v3403
        %v3421 = vld [vmem:[%s7] sm:$0x1]
        %v3423 = vlaneseq
        %v3424 = vshrl.u32 %v3423, 7
        %v3425 = vsub.s32 0, %v3424
        %v3426 = vrot.slane %v3421, %v3425
        %v3428 = vadd.f32 %v3405, %v3426
        %v3429 = vadd.f32 %v3406, %v3426
        %v3430 = vadd.f32 %v3407, %v3426
        %v3431 = vadd.f32 %v3408, %v3426
        %v3432 = vadd.f32 %v3409, %v3426
        %v3433 = vadd.f32 %v3410, %v3426
        %v3434 = vadd.f32 %v3411, %v3426
        %v3435 = vadd.f32 %v3412, %v3426
        %v3436 = vadd.f32 %v3413, %v3426
        %v3437 = vadd.f32 %v3414, %v3426
        %v3438 = vadd.f32 %v3415, %v3426
        %v3439 = vadd.f32 %v3416, %v3426
        %v3440 = vadd.f32 %v3417, %v3426
        %v3441 = vadd.f32 %v3418, %v3426
        %v3442 = vadd.f32 %v3419, %v3426
        %v3443 = vadd.f32 %v3420, %v3426
        %v3444 = vld [vmem:[%s370] sm:$0xf]
        %v3445 = vld [vmem:[%s370 + $0x4] sm:$0xf]
        %v3446 = vld [vmem:[%s370 + $0x8] sm:$0xf]
        %v3447 = vld [vmem:[%s370 + $0xc] sm:$0xf]
        %v3448 = vld [vmem:[%s370 + $0x10] sm:$0xf]
        %v3449 = vld [vmem:[%s370 + $0x14] sm:$0xf]
        %v3450 = vld [vmem:[%s370 + $0x18] sm:$0xf]
        %v3451 = vld [vmem:[%s370 + $0x1c] sm:$0xf]
        %v3452 = vld [vmem:[%s370 + $0x20] sm:$0xf]
        %v3453 = vld [vmem:[%s370 + $0x24] sm:$0xf]
        %v3454 = vld [vmem:[%s370 + $0x28] sm:$0xf]
        %v3455 = vld [vmem:[%s370 + $0x2c] sm:$0xf]
        %v3456 = vld [vmem:[%s370 + $0x30] sm:$0xf]
        %v3457 = vld [vmem:[%s370 + $0x34] sm:$0xf]
        %v3458 = vld [vmem:[%s370 + $0x38] sm:$0xf]
        %v3459 = vld [vmem:[%s370 + $0x3c] sm:$0xf]
        %v3460 = vunpack.c.l.bf16 %v3444
        %v3461 = vunpack.c.l.bf16 %v3445
        %v3462 = vunpack.c.l.bf16 %v3446
        %v3463 = vunpack.c.l.bf16 %v3447
        %v3464 = vunpack.c.l.bf16 %v3448
        %v3465 = vunpack.c.l.bf16 %v3449
        %v3466 = vunpack.c.l.bf16 %v3450
        %v3467 = vunpack.c.l.bf16 %v3451
        %v3468 = vunpack.c.l.bf16 %v3452
        %v3469 = vunpack.c.l.bf16 %v3453
        %v3470 = vunpack.c.l.bf16 %v3454
        %v3471 = vunpack.c.l.bf16 %v3455
        %v3472 = vunpack.c.l.bf16 %v3456
        %v3473 = vunpack.c.l.bf16 %v3457
        %v3474 = vunpack.c.l.bf16 %v3458
        %v3475 = vunpack.c.l.bf16 %v3459
        %v3476 = vadd.f32 %v3428, %v3460
        %v3477 = vadd.f32 %v3429, %v3461
        %v3478 = vadd.f32 %v3430, %v3462
        %v3479 = vadd.f32 %v3431, %v3463
        %v3480 = vadd.f32 %v3432, %v3464
        %v3481 = vadd.f32 %v3433, %v3465
        %v3482 = vadd.f32 %v3434, %v3466
        %v3483 = vadd.f32 %v3435, %v3467
        %v3484 = vadd.f32 %v3436, %v3468
        %v3485 = vadd.f32 %v3437, %v3469
        %v3486 = vadd.f32 %v3438, %v3470
        %v3487 = vadd.f32 %v3439, %v3471
        %v3488 = vadd.f32 %v3440, %v3472
        %v3489 = vadd.f32 %v3441, %v3473
        %v3490 = vadd.f32 %v3442, %v3474
        %v3491 = vadd.f32 %v3443, %v3475
        %v3492 = vmax.f32 %v3476, 0.0
        %v3493 = vmax.f32 %v3477, 0.0
        %v3494 = vmax.f32 %v3478, 0.0
        %v3495 = vmax.f32 %v3479, 0.0
        %v3496 = vmax.f32 %v3480, 0.0
        %v3497 = vmax.f32 %v3481, 0.0
        %v3498 = vmax.f32 %v3482, 0.0
        %v3499 = vmax.f32 %v3483, 0.0
        %v3500 = vmax.f32 %v3484, 0.0
        %v3501 = vmax.f32 %v3485, 0.0
        %v3502 = vmax.f32 %v3486, 0.0
        %v3503 = vmax.f32 %v3487, 0.0
        %v3504 = vmax.f32 %v3488, 0.0
        %v3505 = vmax.f32 %v3489, 0.0
        %v3506 = vmax.f32 %v3490, 0.0
        %v3507 = vmax.f32 %v3491, 0.0
        %3508 = vst [vmem:[%s355] sm:$0xff] %v3492
        %3509 = vst [vmem:[%s355 + $0x8] sm:$0xff] %v3493
        %3510 = vst [vmem:[%s355 + $0x10] sm:$0xff] %v3494
        %3511 = vst [vmem:[%s355 + $0x18] sm:$0xff] %v3495
        %3512 = vst [vmem:[%s355 + $0x20] sm:$0xff] %v3496
        %3513 = vst [vmem:[%s355 + $0x28] sm:$0xff] %v3497
        %3514 = vst [vmem:[%s355 + $0x30] sm:$0xff] %v3498
        %3515 = vst [vmem:[%s355 + $0x38] sm:$0xff] %v3499
        %3516 = vst [vmem:[%s355 + $0x40] sm:$0xff] %v3500
        %3517 = vst [vmem:[%s355 + $0x48] sm:$0xff] %v3501
        %3518 = vst [vmem:[%s355 + $0x50] sm:$0xff] %v3502
        %3519 = vst [vmem:[%s355 + $0x58] sm:$0xff] %v3503
        %3520 = vst [vmem:[%s355 + $0x60] sm:$0xff] %v3504
        %3521 = vst [vmem:[%s355 + $0x68] sm:$0xff] %v3505
        %3522 = vst [vmem:[%s355 + $0x70] sm:$0xff] %v3506
        %3523 = vst [vmem:[%s355 + $0x78] sm:$0xff] %v3507
        %s3524 = sand.u32 %s225, 1
        %s3525 = scalar_lea.sflag [#allocation4], %s3524
        %s3526 = sand.u32 %s225, 1
        %s3527 = smul.addr %s3526, 128
        %s3528 = scalar_lea.vmem [#allocation5], %s3527
        // Predicated region
        $region57: #{tpu_custom_call.1} parent=51 // pred_check
          %p3529 = pneg %p235
        $region58: #{tpu_custom_call.1} parent=51 // pred_check_branch
          %3531 = sbr.rel (%p3529) target = $region60
        $region59: #{tpu_custom_call.1} parent=51 // pred_region
          %s3532 = smul.u32 8, %s28
          %s3534 = ssub.s32 2048, 2048
          %3535 = vsyncadd %s3525, %s3534
          %s3536 = smul.addr %s3532, 2
          %s3537 = smul.addr %s27, 32
          %s3538 = sadd.s32 %s3536, %s3537
          %s3539 = smul.addr %s3538, 128
          %s3540 = scalar_lea.hbm %s8, %s3539
          %s3541 = sshll.u32 %s3528, 4
          %s3542 = int_to_ptr.vmem [resolvable:$true] %s3541
          %3547 = dma.vmem_to_hbm [thread:$0]  %s3542, 2048, %s3540, %s3525, 128, 128, 8
        $region60: #{tpu_custom_call.1} parent=51 // pred_fallthru
          _
      $region52: #{tpu_custom_call.1} parent=5 // pred_fallthru
        _
      %p3548 = scmp.le.s32.totalorder 2, %s18
      // Predicated region
      $region61: #{tpu_custom_call.1} parent=5 // pred_check
        %p3549 = pneg %p3548
      $region62: #{tpu_custom_call.1} parent=5 // pred_check_branch
        %3551 = sbr.rel (%p3549) target = $region64
      $region63: #{tpu_custom_call.1} parent=5 // pred_region
        %s3552 = ssub.s32 %s18, 2
        // Predicated region
        $region65: #{tpu_custom_call.1} parent=63 // pred_check
          %p3553 = pneg %p241
        $region66: #{tpu_custom_call.1} parent=63 // pred_check_branch
          %3555 = sbr.rel (%p3553) target = $region68
        $region67: #{tpu_custom_call.1} parent=63 // pred_region
          %s3556 = sand.u32 %s226, 1
          %s3557 = scalar_lea.sflag [#allocation4], %s3556
          %s3558 = sand.u32 %s226, 1
          %s3559 = smul.addr %s3558, 128
          %s3560 = scalar_lea.vmem [#allocation5], %s3559
          %3561 = dma.done %s3557, 2048
        $region68: #{tpu_custom_call.1} parent=63 // pred_fallthru
          _
      $region64: #{tpu_custom_call.1} parent=5 // pred_fallthru
        _
    $region6: #{tpu_custom_call.1} parent=1 // loop_footer
      %s22 = sadd.s32 1, %s18
    $region7: #{tpu_custom_call.1} parent=1 // loop_footer_branch
      %17 = sbr.rel target = $region3
    $region8: #{tpu_custom_call.1} parent=1 // loop_exit
      _
    %3562 = vsyncpa [#allocation3], 1
    %s3563 = scalar_lea.sflag [#allocation3], 1
    %3564 = vsyncpa %s3563, 1
    %3565 = vsyncpa [#allocation4], 1
    %s3566 = scalar_lea.sflag [#allocation4], 1
    %3567 = vsyncpa %s3566, 1

</llo_original>
